<compile_context>
chip_gen: v6e
topology: v6e:2x2x1
jax: 0.10.0
libtpu: 0.0.40
codegen_flags: <defaults>
</compile_context>

<pallas_src>
import jax
import jax.numpy as jnp
from jax.experimental import pallas as pl
from jax.experimental.pallas import tpu as pltpu

# Fixed synthetic instantiation of the POMEN config.
D = H = W = 8            # cube_size
C3D = 12                 # out_channels_3d = [12]
SE_C = 3                 # int(12 * 0.25)
FC = 32                  # fc_channels
HIDDEN = 128
NUM_CLASSES = 10
_VOX = D * H * W         # 512 voxels
_WP = W + 2              # 10 padded-w positions kept on the lane dim
_LANES_H = _WP * C3D     # 120 lanes of the conv1 activation (w, c) interleave
_LANES_DW = W * C3D      # 96 lanes of the depthwise activation
_NB_MAX = 8              # max samples folded into one grid step


# ----------------------------- fused kernel --------------------------------

def _pomen_kernel(x0_ref, x1_ref, x2_ref,
                  w1_ref, bn1_ref, dwt_ref, bn2_ref, fold_ref,
                  se1w_ref, se2w_ref, w3_ref, linw_ref, sqw_ref, fcw_ref,
                  vec_ref, o_ref, hp0_ref, hp1_ref, hp2_ref):
    f32 = jnp.float32
    nb = x0_ref.shape[0]
    xviews = (x0_ref, x1_ref, x2_ref)          # kw-pre-shifted, lane-aligned
    hpviews = (hp0_ref, hp1_ref, hp2_ref)

    # --- conv1_3d (Cin=1) + BN1 + swish: 27-tap VPU stencil. -----------------
    # Computed over the h/w-halo domain so the depthwise padding can be built
    # with a lane/sublane mask + slab stores only.  Every tap is an aligned
    # load: kw selects one of the pre-shifted views, kd/kh are outer/sublane
    # address offsets.
    w1 = w1_ref[...]                                        # (27, 120)
    acc1 = None
    for kd in range(3):
        for kh in range(3):
            for kw in range(3):
                t = kd * 9 + kh * 3 + kw
                tap = xviews[kw][:, kd:kd + D, kh:kh + H + 2, :]  # (nb,8,10,120)
                prod = tap * w1[t]
                acc1 = prod if acc1 is None else acc1 + prod
    bn1 = bn1_ref[...]                                      # (2, 120)
    h = acc1 * bn1[0] + bn1[1]
    h = h * jax.nn.sigmoid(h)                               # swish

    # Zero the h / w halo: it becomes the zero padding of the depthwise conv.
    hh = jax.lax.broadcasted_iota(jnp.int32, (1, 1, H + 2, _LANES_H), 2)
    ll = jax.lax.broadcasted_iota(jnp.int32, (1, 1, H + 2, _LANES_H), 3)
    keep = (hh >= 1) & (hh <= H) & (ll >= C3D) & (ll < _LANES_H - C3D)
    h = jnp.where(keep, h, 0.0)                             # (nb, 8, 10, 120)

    inv_vox = 1.0 / float(_VOX)
    fold = fold_ref[...]                                    # (120, 12) lane->channel fold

    # Channel means of the conv1 activation (skip path), via one MXU fold dot.
    h_sum = jnp.sum(jnp.sum(h, axis=1), axis=1)             # (nb, 120)
    pooled_h = jnp.dot(h_sum, fold, preferred_element_type=f32) * inv_vox

    # d-padded, kw-pre-shifted copies of the activation in VMEM scratch.
    # Only the two d-halo slabs are zeroed (everything else is overwritten
    # every step, so the persistent scratch stays correct on every core).
    zslab = jnp.zeros((nb, 1, H + 2, _LANES_DW), f32)
    for k in range(3):
        ref = hpviews[k]
        ref[:, 0:1] = zslab
        ref[:, D + 1:D + 2] = zslab
        ref[:, 1:D + 1] = h[..., k * C3D:k * C3D + _LANES_DW]

    # --- Block3D depthwise 3x3x3 + BN2 + swish: 27 aligned-tap stencil. ------
    dwt = dwt_ref[...]                                      # (27, 96)
    acc2 = None
    for kd in range(3):
        for kh in range(3):
            for kw in range(3):
                t = kd * 9 + kh * 3 + kw
                tap = hpviews[kw][:, kd:kd + D, kh:kh + H, :]   # (nb,8,8,96)
                prod = tap * dwt[t]
                acc2 = prod if acc2 is None else acc2 + prod
    bn2 = bn2_ref[...]                                      # (2, 96)
    dwv = acc2 * bn2[0] + bn2[1]
    dwv = dwv * jax.nn.sigmoid(dwv)

    dw_sum = jnp.sum(jnp.sum(dwv, axis=1), axis=1)          # (nb, 96)
    pooled_dw = jnp.dot(dw_sum, fold[0:_LANES_DW, :],
                        preferred_element_type=f32) * inv_vox     # (nb, 12)

    # --- SE3D + pointwise conv3 + BN3 + skip + LinearTransform3D + head. -----
    # All linear / per-channel -> exactly commute with the global average
    # pool; evaluated on (nb, C) vectors, batched over the NB samples.
    vec = vec_ref[...]                                      # (8, 128) packed slab
    se1_b = vec[0, 0:SE_C]
    se2_b = vec[1, 0:C3D]
    bn3_s = vec[2, 0:C3D]
    bn3_b = vec[3, 0:C3D]
    lin_b = vec[4, 0:FC]
    sq_b = vec[5, 0:HIDDEN]
    fc_b = vec[6, 0:NUM_CLASSES]

    s1 = jnp.dot(pooled_dw, se1w_ref[...], preferred_element_type=f32) + se1_b
    s1 = s1 * jax.nn.sigmoid(s1)                            # swish
    gate = jax.nn.sigmoid(
        jnp.dot(s1, se2w_ref[...], preferred_element_type=f32) + se2_b)
    p3 = jnp.dot(pooled_dw * gate, w3_ref[...], preferred_element_type=f32)
    pooled_blk = p3 * bn3_s + bn3_b + pooled_h
    z = jnp.dot(pooled_blk, linw_ref[...], preferred_element_type=f32) + lin_b
    q = jnp.maximum(
        jnp.dot(z, sqw_ref[...], preferred_element_type=f32) + sq_b, 0.0)
    logits = jnp.dot(q, fcw_ref[...], preferred_element_type=f32) + fc_b
    o_ref[0] = logits                                       # (nb, NUM_CLASSES)


# ------------------------------- wrapper ------------------------------------

def _bn_fold(gamma, beta, mean, var, eps=1e-5):
    scale = gamma / jnp.sqrt(var + eps)
    return scale, beta - mean * scale


def init_params(key):
    ks = jax.random.split(key, 25)
    n = lambda k, s, sc=0.1: jax.random.normal(k, s, jnp.float32) * sc
    p = {}
    p["conv1_w"] = n(ks[0], (27, C3D))                       # Conv3d(1, 12, 3)
    p["bn1_scale"], p["bn1_shift"] = _bn_fold(
        1.0 + n(ks[1], (C3D,)), n(ks[2], (C3D,)), n(ks[3], (C3D,)),
        1.0 + jnp.abs(n(ks[4], (C3D,))))
    p["dw_w"] = n(ks[5], (27, C3D))                          # depthwise Conv3d
    p["bn2_scale"], p["bn2_shift"] = _bn_fold(
        1.0 + n(ks[6], (C3D,)), n(ks[7], (C3D,)), n(ks[8], (C3D,)),
        1.0 + jnp.abs(n(ks[9], (C3D,))))
    p["se1_w"], p["se1_b"] = n(ks[10], (C3D, SE_C)), n(ks[11], (SE_C,))
    p["se2_w"], p["se2_b"] = n(ks[12], (SE_C, C3D)), n(ks[13], (C3D,))
    p["conv3_w"] = n(ks[14], (C3D, C3D))                     # pointwise Conv3d
    p["bn3_scale"], p["bn3_shift"] = _bn_fold(
        1.0 + n(ks[15], (C3D,)), n(ks[16], (C3D,)), n(ks[17], (C3D,)),
        1.0 + jnp.abs(n(ks[18], (C3D,))))
    p["lin3d_w"], p["lin3d_b"] = n(ks[19], (C3D, FC)), n(ks[20], (FC,))
    p["sq_w"], p["sq_b"] = n(ks[21], (FC, HIDDEN)), n(ks[22], (HIDDEN,))
    p["fc_w"], p["fc_b"] = (n(ks[23], (HIDDEN, NUM_CLASSES)),
                            n(ks[24], (NUM_CLASSES,)))
    return p


def pomen_forward(x_ncdhw, p, nb_max=_NB_MAX):
    N, cin, d_, h_, w_ = x_ncdhw.shape
    assert (cin, d_, h_, w_) == (1, D, H, W)
    f32 = jnp.float32

    # NB samples per grid step with an even number of steps (>= 2) so both
    # TensorCores of a v7x chip get equal work; v5e/v6e just see a loop.
    steps = 2 * max(1, -(-N // (2 * nb_max)))
    nb = -(-N // steps)
    n_pad = nb * steps

    x = x_ncdhw.astype(f32)[:, 0]                            # (N, 8, 8, 8)
    if n_pad != N:
        x = jnp.concatenate(
            [x, jnp.zeros((n_pad - N, D, H, W), f32)], axis=0)

    # Channels-last, zero-padded (d by 1, h/w by 2), channel-replicated input
    # with a (w, c) lane interleave, shipped as THREE kw-shifted 120-lane
    # views so every conv1 tap inside the kernel is a lane-aligned load.
    xpad = jnp.pad(x, ((0, 0), (1, 1), (2, 2), (2, 2)))      # (n, 10, 12, 12)
    xrep = jnp.broadcast_to(xpad[..., None], xpad.shape + (C3D,))
    xrep = xrep.reshape(n_pad, D + 2, H + 4, (W + 4) * C3D)  # (n, 10, 12, 144)
    xviews = [xrep[..., k * C3D:k * C3D + _LANES_H] for k in range(3)]

    rep = lambda a, g: jnp.tile(
        a.astype(f32).reshape(1, C3D), (1, g)).reshape(-1)
    # Lane -> channel fold matrix: lane l of the (w, c) interleave is channel
    # l % 12 (one MXU dot replaces the per-group lane slices of the pool).
    fold = (jnp.arange(_LANES_H)[:, None] % C3D ==
            jnp.arange(C3D)[None, :]).astype(f32)            # (120, 12)

    # All head biases / per-channel affines packed into a single (8,128) slab.
    vec = jnp.zeros((8, 128), f32)
    vec = vec.at[0, :SE_C].set(p["se1_b"].astype(f32))
    vec = vec.at[1, :C3D].set(p["se2_b"].astype(f32))
    vec = vec.at[2, :C3D].set(p["bn3_scale"].astype(f32))
    vec = vec.at[3, :C3D].set(p["bn3_shift"].astype(f32))
    vec = vec.at[4, :FC].set(p["lin3d_b"].astype(f32))
    vec = vec.at[5, :HIDDEN].set(p["sq_b"].astype(f32))
    vec = vec.at[6, :NUM_CLASSES].set(p["fc_b"].astype(f32))

    args = xviews + [
        jnp.tile(p["conv1_w"].astype(f32), (1, _WP)),        # (27, 120)
        jnp.stack([rep(p["bn1_scale"], _WP), rep(p["bn1_shift"], _WP)]),
        jnp.tile(p["dw_w"].astype(f32), (1, W)),             # (27, 96)
        jnp.stack([rep(p["bn2_scale"], W), rep(p["bn2_shift"], W)]),
        fold,
        p["se1_w"].astype(f32), p["se2_w"].astype(f32),
        p["conv3_w"].astype(f32),
        p["lin3d_w"].astype(f32), p["sq_w"].astype(f32), p["fc_w"].astype(f32),
        vec,
    ]

    x_spec = pl.BlockSpec((nb, D + 2, H + 4, _LANES_H),
                          lambda i: (i, 0, 0, 0))
    full2d = lambda a: pl.BlockSpec(a.shape, lambda i: (0, 0))
    in_specs = [x_spec] * 3 + [full2d(a) for a in args[3:]]

    out = pl.pallas_call(
        _pomen_kernel,
        out_shape=jax.ShapeDtypeStruct((steps, nb, NUM_CLASSES), f32),
        grid=(steps,),
        in_specs=in_specs,
        out_specs=pl.BlockSpec((1, nb, NUM_CLASSES), lambda i: (i, 0, 0)),
        scratch_shapes=[pltpu.VMEM((nb, D + 2, H + 2, _LANES_DW), f32)
                        for _ in range(3)],
        compiler_params=pltpu.CompilerParams(
            dimension_semantics=("parallel",),
            vmem_limit_bytes=32 * 1024 * 1024),
    )(*args)
    return out.reshape(n_pad, NUM_CLASSES)[:N]


# --------------------------- pure-JAX reference ------------------------------

def pomen_reference(x_ncdhw, p):
    hi = jax.lax.Precision.HIGHEST
    x = x_ncdhw.astype(jnp.float32)[:, 0]
    xp = jnp.pad(x, ((0, 0), (1, 1), (1, 1), (1, 1)))
    taps = jnp.stack([xp[:, a:a + D, b:b + H, c:c + W]
                      for a in range(3) for b in range(3) for c in range(3)],
                     axis=-1)
    h = jnp.einsum("ndhwt,tc->ndhwc", taps, p["conv1_w"], precision=hi)
    h = h * p["bn1_scale"] + p["bn1_shift"]
    h = h * jax.nn.sigmoid(h)
    hp = jnp.pad(h, ((0, 0), (1, 1), (1, 1), (1, 1), (0, 0)))
    dtaps = jnp.stack([hp[:, a:a + D, b:b + H, c:c + W, :]
                       for a in range(3) for b in range(3) for c in range(3)],
                      axis=-1)
    dw = jnp.einsum("ndhwct,tc->ndhwc", dtaps, p["dw_w"], precision=hi)
    dw = dw * p["bn2_scale"] + p["bn2_shift"]
    dw = dw * jax.nn.sigmoid(dw)
    pooled = dw.mean(axis=(1, 2, 3))
    s1 = jnp.dot(pooled, p["se1_w"], precision=hi) + p["se1_b"]
    s1 = s1 * jax.nn.sigmoid(s1)
    gate = jax.nn.sigmoid(jnp.dot(s1, p["se2_w"], precision=hi) + p["se2_b"])
    dwse = dw * gate[:, None, None, None, :]
    y = jnp.einsum("ndhwc,ck->ndhwk", dwse, p["conv3_w"], precision=hi)
    blk = y * p["bn3_scale"] + p["bn3_shift"] + h
    zmap = jnp.einsum("ndhwc,cf->ndhwf", blk, p["lin3d_w"],
                      precision=hi) + p["lin3d_b"]
    z = zmap.mean(axis=(1, 2, 3))
    q = jnp.maximum(jnp.dot(z, p["sq_w"], precision=hi) + p["sq_b"], 0.0)
    return jnp.dot(q, p["fc_w"], precision=hi) + p["fc_b"]


if __name__ == "__main__":
    N = 2
    key = jax.random.PRNGKey(0)
    kx, kp = jax.random.split(key)
    x = jax.random.normal(kx, (N, 1, D, H, W), jnp.float32)  # NCDHW like PyTorch
    params = init_params(kp)

    fwd = jax.jit(pomen_forward)
    out = jax.block_until_ready(fwd(x, params))
    assert out.shape == (N, NUM_CLASSES)

    ref = jax.block_until_ready(jax.jit(pomen_reference)(x, params))
    assert bool(jnp.allclose(out, ref, rtol=1e-2, atol=1e-2)), (
        "Pallas kernel disagrees with the JAX reference")
    print("KERNEL_OK")
</pallas_src>

<mosaic_0001>
module attributes {stable_mosaic.version = 11 : i64} {
  func.func @_pomen_kernel(%arg0: i32, %arg1: memref<1x10x12x120xf32, #tpu.memory_space<vmem>>, %arg2: memref<1x10x12x120xf32, #tpu.memory_space<vmem>>, %arg3: memref<1x10x12x120xf32, #tpu.memory_space<vmem>>, %arg4: memref<27x120xf32, #tpu.memory_space<vmem>>, %arg5: memref<2x120xf32, #tpu.memory_space<vmem>>, %arg6: memref<27x96xf32, #tpu.memory_space<vmem>>, %arg7: memref<2x96xf32, #tpu.memory_space<vmem>>, %arg8: memref<120x12xf32, #tpu.memory_space<vmem>>, %arg9: memref<12x3xf32, #tpu.memory_space<vmem>>, %arg10: memref<3x12xf32, #tpu.memory_space<vmem>>, %arg11: memref<12x12xf32, #tpu.memory_space<vmem>>, %arg12: memref<12x32xf32, #tpu.memory_space<vmem>>, %arg13: memref<32x128xf32, #tpu.memory_space<vmem>>, %arg14: memref<128x10xf32, #tpu.memory_space<vmem>>, %arg15: memref<8x128xf32, #tpu.memory_space<vmem>>, %arg16: memref<1x1x10xf32, #tpu.memory_space<vmem>>, %arg17: memref<1x10x10x96xf32, #tpu.memory_space<vmem>>, %arg18: memref<1x10x10x96xf32, #tpu.memory_space<vmem>>, %arg19: memref<1x10x10x96xf32, #tpu.memory_space<vmem>>) attributes {dimension_semantics = [#tpu.dimension_semantics<parallel>], iteration_bounds = array<i64: 2>, scalar_prefetch = 0 : i64, scratch_operands = 3 : i64, tpu.core_type = #tpu.core_type<tc>, window_params = [{transform_indices = @transform_0, window_bounds = array<i64: 1, 10, 12, 120>}, {transform_indices = @transform_1, window_bounds = array<i64: 1, 10, 12, 120>}, {transform_indices = @transform_2, window_bounds = array<i64: 1, 10, 12, 120>}, {pipeline_mode = #tpu.pipeline_mode<synchronous>, transform_indices = @transform_3, window_bounds = array<i64: 27, 120>}, {pipeline_mode = #tpu.pipeline_mode<synchronous>, transform_indices = @transform_4, window_bounds = array<i64: 2, 120>}, {pipeline_mode = #tpu.pipeline_mode<synchronous>, transform_indices = @transform_5, window_bounds = array<i64: 27, 96>}, {pipeline_mode = #tpu.pipeline_mode<synchronous>, transform_indices = @transform_6, window_bounds = array<i64: 2, 96>}, {pipeline_mode = #tpu.pipeline_mode<synchronous>, transform_indices = @transform_7, window_bounds = array<i64: 120, 12>}, {pipeline_mode = #tpu.pipeline_mode<synchronous>, transform_indices = @transform_8, window_bounds = array<i64: 12, 3>}, {pipeline_mode = #tpu.pipeline_mode<synchronous>, transform_indices = @transform_9, window_bounds = array<i64: 3, 12>}, {pipeline_mode = #tpu.pipeline_mode<synchronous>, transform_indices = @transform_10, window_bounds = array<i64: 12, 12>}, {pipeline_mode = #tpu.pipeline_mode<synchronous>, transform_indices = @transform_11, window_bounds = array<i64: 12, 32>}, {pipeline_mode = #tpu.pipeline_mode<synchronous>, transform_indices = @transform_12, window_bounds = array<i64: 32, 128>}, {pipeline_mode = #tpu.pipeline_mode<synchronous>, transform_indices = @transform_13, window_bounds = array<i64: 128, 10>}, {pipeline_mode = #tpu.pipeline_mode<synchronous>, transform_indices = @transform_14, window_bounds = array<i64: 8, 128>}, {transform_indices = @transform_15, window_bounds = array<i64: 1, 1, 10>}]} {
    %c0 = arith.constant 0 : index
    %c0_0 = arith.constant 0 : index
    %0 = vector.load %arg4[%c0, %c0_0] : memref<27x120xf32, #tpu.memory_space<vmem>>, vector<27x120xf32>
    %c0_1 = arith.constant 0 : index
    %c0_2 = arith.constant 0 : index
    %c0_3 = arith.constant 0 : index
    %c0_4 = arith.constant 0 : index
    %1 = vector.load %arg1[%c0_1, %c0_2, %c0_3, %c0_4] : memref<1x10x12x120xf32, #tpu.memory_space<vmem>>, vector<1x8x10x120xf32>
    %2 = vector.extract_strided_slice %0 {offsets = [0, 0], sizes = [1, 120], strides = [1, 1]} : vector<27x120xf32> to vector<1x120xf32>
    %3 = vector.shape_cast %2 : vector<1x120xf32> to vector<120xf32>
    %4 = vector.shape_cast %3 : vector<120xf32> to vector<1x1x1x120xf32>
    %5 = vector.broadcast %4 : vector<1x1x1x120xf32> to vector<1x8x10x120xf32>
    %6 = arith.mulf %1, %5 : vector<1x8x10x120xf32>
    %c0_5 = arith.constant 0 : index
    %c0_6 = arith.constant 0 : index
    %c0_7 = arith.constant 0 : index
    %c0_8 = arith.constant 0 : index
    %7 = vector.load %arg2[%c0_5, %c0_6, %c0_7, %c0_8] : memref<1x10x12x120xf32, #tpu.memory_space<vmem>>, vector<1x8x10x120xf32>
    %8 = vector.extract_strided_slice %0 {offsets = [1, 0], sizes = [1, 120], strides = [1, 1]} : vector<27x120xf32> to vector<1x120xf32>
    %9 = vector.shape_cast %8 : vector<1x120xf32> to vector<120xf32>
    %10 = vector.shape_cast %9 : vector<120xf32> to vector<1x1x1x120xf32>
    %11 = vector.broadcast %10 : vector<1x1x1x120xf32> to vector<1x8x10x120xf32>
    %12 = arith.mulf %7, %11 : vector<1x8x10x120xf32>
    %13 = arith.addf %6, %12 : vector<1x8x10x120xf32>
    %c0_9 = arith.constant 0 : index
    %c0_10 = arith.constant 0 : index
    %c0_11 = arith.constant 0 : index
    %c0_12 = arith.constant 0 : index
    %14 = vector.load %arg3[%c0_9, %c0_10, %c0_11, %c0_12] : memref<1x10x12x120xf32, #tpu.memory_space<vmem>>, vector<1x8x10x120xf32>
    %15 = vector.extract_strided_slice %0 {offsets = [2, 0], sizes = [1, 120], strides = [1, 1]} : vector<27x120xf32> to vector<1x120xf32>
    %16 = vector.shape_cast %15 : vector<1x120xf32> to vector<120xf32>
    %17 = vector.shape_cast %16 : vector<120xf32> to vector<1x1x1x120xf32>
    %18 = vector.broadcast %17 : vector<1x1x1x120xf32> to vector<1x8x10x120xf32>
    %19 = arith.mulf %14, %18 : vector<1x8x10x120xf32>
    %20 = arith.addf %13, %19 : vector<1x8x10x120xf32>
    %c0_13 = arith.constant 0 : index
    %c0_14 = arith.constant 0 : index
    %c1 = arith.constant 1 : index
    %c0_15 = arith.constant 0 : index
    %21 = vector.load %arg1[%c0_13, %c0_14, %c1, %c0_15] : memref<1x10x12x120xf32, #tpu.memory_space<vmem>>, vector<1x8x10x120xf32>
    %22 = vector.extract_strided_slice %0 {offsets = [3, 0], sizes = [1, 120], strides = [1, 1]} : vector<27x120xf32> to vector<1x120xf32>
    %23 = vector.shape_cast %22 : vector<1x120xf32> to vector<120xf32>
    %24 = vector.shape_cast %23 : vector<120xf32> to vector<1x1x1x120xf32>
    %25 = vector.broadcast %24 : vector<1x1x1x120xf32> to vector<1x8x10x120xf32>
    %26 = arith.mulf %21, %25 : vector<1x8x10x120xf32>
    %27 = arith.addf %20, %26 : vector<1x8x10x120xf32>
    %c0_16 = arith.constant 0 : index
    %c0_17 = arith.constant 0 : index
    %c1_18 = arith.constant 1 : index
    %c0_19 = arith.constant 0 : index
    %28 = vector.load %arg2[%c0_16, %c0_17, %c1_18, %c0_19] : memref<1x10x12x120xf32, #tpu.memory_space<vmem>>, vector<1x8x10x120xf32>
    %29 = vector.extract_strided_slice %0 {offsets = [4, 0], sizes = [1, 120], strides = [1, 1]} : vector<27x120xf32> to vector<1x120xf32>
    %30 = vector.shape_cast %29 : vector<1x120xf32> to vector<120xf32>
    %31 = vector.shape_cast %30 : vector<120xf32> to vector<1x1x1x120xf32>
    %32 = vector.broadcast %31 : vector<1x1x1x120xf32> to vector<1x8x10x120xf32>
    %33 = arith.mulf %28, %32 : vector<1x8x10x120xf32>
    %34 = arith.addf %27, %33 : vector<1x8x10x120xf32>
    %c0_20 = arith.constant 0 : index
    %c0_21 = arith.constant 0 : index
    %c1_22 = arith.constant 1 : index
    %c0_23 = arith.constant 0 : index
    %35 = vector.load %arg3[%c0_20, %c0_21, %c1_22, %c0_23] : memref<1x10x12x120xf32, #tpu.memory_space<vmem>>, vector<1x8x10x120xf32>
    %36 = vector.extract_strided_slice %0 {offsets = [5, 0], sizes = [1, 120], strides = [1, 1]} : vector<27x120xf32> to vector<1x120xf32>
    %37 = vector.shape_cast %36 : vector<1x120xf32> to vector<120xf32>
    %38 = vector.shape_cast %37 : vector<120xf32> to vector<1x1x1x120xf32>
    %39 = vector.broadcast %38 : vector<1x1x1x120xf32> to vector<1x8x10x120xf32>
    %40 = arith.mulf %35, %39 : vector<1x8x10x120xf32>
    %41 = arith.addf %34, %40 : vector<1x8x10x120xf32>
    %c0_24 = arith.constant 0 : index
    %c0_25 = arith.constant 0 : index
    %c2 = arith.constant 2 : index
    %c0_26 = arith.constant 0 : index
    %42 = vector.load %arg1[%c0_24, %c0_25, %c2, %c0_26] : memref<1x10x12x120xf32, #tpu.memory_space<vmem>>, vector<1x8x10x120xf32>
    %43 = vector.extract_strided_slice %0 {offsets = [6, 0], sizes = [1, 120], strides = [1, 1]} : vector<27x120xf32> to vector<1x120xf32>
    %44 = vector.shape_cast %43 : vector<1x120xf32> to vector<120xf32>
    %45 = vector.shape_cast %44 : vector<120xf32> to vector<1x1x1x120xf32>
    %46 = vector.broadcast %45 : vector<1x1x1x120xf32> to vector<1x8x10x120xf32>
    %47 = arith.mulf %42, %46 : vector<1x8x10x120xf32>
    %48 = arith.addf %41, %47 : vector<1x8x10x120xf32>
    %c0_27 = arith.constant 0 : index
    %c0_28 = arith.constant 0 : index
    %c2_29 = arith.constant 2 : index
    %c0_30 = arith.constant 0 : index
    %49 = vector.load %arg2[%c0_27, %c0_28, %c2_29, %c0_30] : memref<1x10x12x120xf32, #tpu.memory_space<vmem>>, vector<1x8x10x120xf32>
    %50 = vector.extract_strided_slice %0 {offsets = [7, 0], sizes = [1, 120], strides = [1, 1]} : vector<27x120xf32> to vector<1x120xf32>
    %51 = vector.shape_cast %50 : vector<1x120xf32> to vector<120xf32>
    %52 = vector.shape_cast %51 : vector<120xf32> to vector<1x1x1x120xf32>
    %53 = vector.broadcast %52 : vector<1x1x1x120xf32> to vector<1x8x10x120xf32>
    %54 = arith.mulf %49, %53 : vector<1x8x10x120xf32>
    %55 = arith.addf %48, %54 : vector<1x8x10x120xf32>
    %c0_31 = arith.constant 0 : index
    %c0_32 = arith.constant 0 : index
    %c2_33 = arith.constant 2 : index
    %c0_34 = arith.constant 0 : index
    %56 = vector.load %arg3[%c0_31, %c0_32, %c2_33, %c0_34] : memref<1x10x12x120xf32, #tpu.memory_space<vmem>>, vector<1x8x10x120xf32>
    %57 = vector.extract_strided_slice %0 {offsets = [8, 0], sizes = [1, 120], strides = [1, 1]} : vector<27x120xf32> to vector<1x120xf32>
    %58 = vector.shape_cast %57 : vector<1x120xf32> to vector<120xf32>
    %59 = vector.shape_cast %58 : vector<120xf32> to vector<1x1x1x120xf32>
    %60 = vector.broadcast %59 : vector<1x1x1x120xf32> to vector<1x8x10x120xf32>
    %61 = arith.mulf %56, %60 : vector<1x8x10x120xf32>
    %62 = arith.addf %55, %61 : vector<1x8x10x120xf32>
    %c0_35 = arith.constant 0 : index
    %c1_36 = arith.constant 1 : index
    %c0_37 = arith.constant 0 : index
    %c0_38 = arith.constant 0 : index
    %63 = vector.load %arg1[%c0_35, %c1_36, %c0_37, %c0_38] : memref<1x10x12x120xf32, #tpu.memory_space<vmem>>, vector<1x8x10x120xf32>
    %64 = vector.extract_strided_slice %0 {offsets = [9, 0], sizes = [1, 120], strides = [1, 1]} : vector<27x120xf32> to vector<1x120xf32>
    %65 = vector.shape_cast %64 : vector<1x120xf32> to vector<120xf32>
    %66 = vector.shape_cast %65 : vector<120xf32> to vector<1x1x1x120xf32>
    %67 = vector.broadcast %66 : vector<1x1x1x120xf32> to vector<1x8x10x120xf32>
    %68 = arith.mulf %63, %67 : vector<1x8x10x120xf32>
    %69 = arith.addf %62, %68 : vector<1x8x10x120xf32>
    %c0_39 = arith.constant 0 : index
    %c1_40 = arith.constant 1 : index
    %c0_41 = arith.constant 0 : index
    %c0_42 = arith.constant 0 : index
    %70 = vector.load %arg2[%c0_39, %c1_40, %c0_41, %c0_42] : memref<1x10x12x120xf32, #tpu.memory_space<vmem>>, vector<1x8x10x120xf32>
    %71 = vector.extract_strided_slice %0 {offsets = [10, 0], sizes = [1, 120], strides = [1, 1]} : vector<27x120xf32> to vector<1x120xf32>
    %72 = vector.shape_cast %71 : vector<1x120xf32> to vector<120xf32>
    %73 = vector.shape_cast %72 : vector<120xf32> to vector<1x1x1x120xf32>
    %74 = vector.broadcast %73 : vector<1x1x1x120xf32> to vector<1x8x10x120xf32>
    %75 = arith.mulf %70, %74 : vector<1x8x10x120xf32>
    %76 = arith.addf %69, %75 : vector<1x8x10x120xf32>
    %c0_43 = arith.constant 0 : index
    %c1_44 = arith.constant 1 : index
    %c0_45 = arith.constant 0 : index
    %c0_46 = arith.constant 0 : index
    %77 = vector.load %arg3[%c0_43, %c1_44, %c0_45, %c0_46] : memref<1x10x12x120xf32, #tpu.memory_space<vmem>>, vector<1x8x10x120xf32>
    %78 = vector.extract_strided_slice %0 {offsets = [11, 0], sizes = [1, 120], strides = [1, 1]} : vector<27x120xf32> to vector<1x120xf32>
    %79 = vector.shape_cast %78 : vector<1x120xf32> to vector<120xf32>
    %80 = vector.shape_cast %79 : vector<120xf32> to vector<1x1x1x120xf32>
    %81 = vector.broadcast %80 : vector<1x1x1x120xf32> to vector<1x8x10x120xf32>
    %82 = arith.mulf %77, %81 : vector<1x8x10x120xf32>
    %83 = arith.addf %76, %82 : vector<1x8x10x120xf32>
    %c0_47 = arith.constant 0 : index
    %c1_48 = arith.constant 1 : index
    %c1_49 = arith.constant 1 : index
    %c0_50 = arith.constant 0 : index
    %84 = vector.load %arg1[%c0_47, %c1_48, %c1_49, %c0_50] : memref<1x10x12x120xf32, #tpu.memory_space<vmem>>, vector<1x8x10x120xf32>
    %85 = vector.extract_strided_slice %0 {offsets = [12, 0], sizes = [1, 120], strides = [1, 1]} : vector<27x120xf32> to vector<1x120xf32>
    %86 = vector.shape_cast %85 : vector<1x120xf32> to vector<120xf32>
    %87 = vector.shape_cast %86 : vector<120xf32> to vector<1x1x1x120xf32>
    %88 = vector.broadcast %87 : vector<1x1x1x120xf32> to vector<1x8x10x120xf32>
    %89 = arith.mulf %84, %88 : vector<1x8x10x120xf32>
    %90 = arith.addf %83, %89 : vector<1x8x10x120xf32>
    %c0_51 = arith.constant 0 : index
    %c1_52 = arith.constant 1 : index
    %c1_53 = arith.constant 1 : index
    %c0_54 = arith.constant 0 : index
    %91 = vector.load %arg2[%c0_51, %c1_52, %c1_53, %c0_54] : memref<1x10x12x120xf32, #tpu.memory_space<vmem>>, vector<1x8x10x120xf32>
    %92 = vector.extract_strided_slice %0 {offsets = [13, 0], sizes = [1, 120], strides = [1, 1]} : vector<27x120xf32> to vector<1x120xf32>
    %93 = vector.shape_cast %92 : vector<1x120xf32> to vector<120xf32>
    %94 = vector.shape_cast %93 : vector<120xf32> to vector<1x1x1x120xf32>
    %95 = vector.broadcast %94 : vector<1x1x1x120xf32> to vector<1x8x10x120xf32>
    %96 = arith.mulf %91, %95 : vector<1x8x10x120xf32>
    %97 = arith.addf %90, %96 : vector<1x8x10x120xf32>
    %c0_55 = arith.constant 0 : index
    %c1_56 = arith.constant 1 : index
    %c1_57 = arith.constant 1 : index
    %c0_58 = arith.constant 0 : index
    %98 = vector.load %arg3[%c0_55, %c1_56, %c1_57, %c0_58] : memref<1x10x12x120xf32, #tpu.memory_space<vmem>>, vector<1x8x10x120xf32>
    %99 = vector.extract_strided_slice %0 {offsets = [14, 0], sizes = [1, 120], strides = [1, 1]} : vector<27x120xf32> to vector<1x120xf32>
    %100 = vector.shape_cast %99 : vector<1x120xf32> to vector<120xf32>
    %101 = vector.shape_cast %100 : vector<120xf32> to vector<1x1x1x120xf32>
    %102 = vector.broadcast %101 : vector<1x1x1x120xf32> to vector<1x8x10x120xf32>
    %103 = arith.mulf %98, %102 : vector<1x8x10x120xf32>
    %104 = arith.addf %97, %103 : vector<1x8x10x120xf32>
    %c0_59 = arith.constant 0 : index
    %c1_60 = arith.constant 1 : index
    %c2_61 = arith.constant 2 : index
    %c0_62 = arith.constant 0 : index
    %105 = vector.load %arg1[%c0_59, %c1_60, %c2_61, %c0_62] : memref<1x10x12x120xf32, #tpu.memory_space<vmem>>, vector<1x8x10x120xf32>
    %106 = vector.extract_strided_slice %0 {offsets = [15, 0], sizes = [1, 120], strides = [1, 1]} : vector<27x120xf32> to vector<1x120xf32>
    %107 = vector.shape_cast %106 : vector<1x120xf32> to vector<120xf32>
    %108 = vector.shape_cast %107 : vector<120xf32> to vector<1x1x1x120xf32>
    %109 = vector.broadcast %108 : vector<1x1x1x120xf32> to vector<1x8x10x120xf32>
    %110 = arith.mulf %105, %109 : vector<1x8x10x120xf32>
    %111 = arith.addf %104, %110 : vector<1x8x10x120xf32>
    %c0_63 = arith.constant 0 : index
    %c1_64 = arith.constant 1 : index
    %c2_65 = arith.constant 2 : index
    %c0_66 = arith.constant 0 : index
    %112 = vector.load %arg2[%c0_63, %c1_64, %c2_65, %c0_66] : memref<1x10x12x120xf32, #tpu.memory_space<vmem>>, vector<1x8x10x120xf32>
    %113 = vector.extract_strided_slice %0 {offsets = [16, 0], sizes = [1, 120], strides = [1, 1]} : vector<27x120xf32> to vector<1x120xf32>
    %114 = vector.shape_cast %113 : vector<1x120xf32> to vector<120xf32>
    %115 = vector.shape_cast %114 : vector<120xf32> to vector<1x1x1x120xf32>
    %116 = vector.broadcast %115 : vector<1x1x1x120xf32> to vector<1x8x10x120xf32>
    %117 = arith.mulf %112, %116 : vector<1x8x10x120xf32>
    %118 = arith.addf %111, %117 : vector<1x8x10x120xf32>
    %c0_67 = arith.constant 0 : index
    %c1_68 = arith.constant 1 : index
    %c2_69 = arith.constant 2 : index
    %c0_70 = arith.constant 0 : index
    %119 = vector.load %arg3[%c0_67, %c1_68, %c2_69, %c0_70] : memref<1x10x12x120xf32, #tpu.memory_space<vmem>>, vector<1x8x10x120xf32>
    %120 = vector.extract_strided_slice %0 {offsets = [17, 0], sizes = [1, 120], strides = [1, 1]} : vector<27x120xf32> to vector<1x120xf32>
    %121 = vector.shape_cast %120 : vector<1x120xf32> to vector<120xf32>
    %122 = vector.shape_cast %121 : vector<120xf32> to vector<1x1x1x120xf32>
    %123 = vector.broadcast %122 : vector<1x1x1x120xf32> to vector<1x8x10x120xf32>
    %124 = arith.mulf %119, %123 : vector<1x8x10x120xf32>
    %125 = arith.addf %118, %124 : vector<1x8x10x120xf32>
    %c0_71 = arith.constant 0 : index
    %c2_72 = arith.constant 2 : index
    %c0_73 = arith.constant 0 : index
    %c0_74 = arith.constant 0 : index
    %126 = vector.load %arg1[%c0_71, %c2_72, %c0_73, %c0_74] : memref<1x10x12x120xf32, #tpu.memory_space<vmem>>, vector<1x8x10x120xf32>
    %127 = vector.extract_strided_slice %0 {offsets = [18, 0], sizes = [1, 120], strides = [1, 1]} : vector<27x120xf32> to vector<1x120xf32>
    %128 = vector.shape_cast %127 : vector<1x120xf32> to vector<120xf32>
    %129 = vector.shape_cast %128 : vector<120xf32> to vector<1x1x1x120xf32>
    %130 = vector.broadcast %129 : vector<1x1x1x120xf32> to vector<1x8x10x120xf32>
    %131 = arith.mulf %126, %130 : vector<1x8x10x120xf32>
    %132 = arith.addf %125, %131 : vector<1x8x10x120xf32>
    %c0_75 = arith.constant 0 : index
    %c2_76 = arith.constant 2 : index
    %c0_77 = arith.constant 0 : index
    %c0_78 = arith.constant 0 : index
    %133 = vector.load %arg2[%c0_75, %c2_76, %c0_77, %c0_78] : memref<1x10x12x120xf32, #tpu.memory_space<vmem>>, vector<1x8x10x120xf32>
    %134 = vector.extract_strided_slice %0 {offsets = [19, 0], sizes = [1, 120], strides = [1, 1]} : vector<27x120xf32> to vector<1x120xf32>
    %135 = vector.shape_cast %134 : vector<1x120xf32> to vector<120xf32>
    %136 = vector.shape_cast %135 : vector<120xf32> to vector<1x1x1x120xf32>
    %137 = vector.broadcast %136 : vector<1x1x1x120xf32> to vector<1x8x10x120xf32>
    %138 = arith.mulf %133, %137 : vector<1x8x10x120xf32>
    %139 = arith.addf %132, %138 : vector<1x8x10x120xf32>
    %c0_79 = arith.constant 0 : index
    %c2_80 = arith.constant 2 : index
    %c0_81 = arith.constant 0 : index
    %c0_82 = arith.constant 0 : index
    %140 = vector.load %arg3[%c0_79, %c2_80, %c0_81, %c0_82] : memref<1x10x12x120xf32, #tpu.memory_space<vmem>>, vector<1x8x10x120xf32>
    %141 = vector.extract_strided_slice %0 {offsets = [20, 0], sizes = [1, 120], strides = [1, 1]} : vector<27x120xf32> to vector<1x120xf32>
    %142 = vector.shape_cast %141 : vector<1x120xf32> to vector<120xf32>
    %143 = vector.shape_cast %142 : vector<120xf32> to vector<1x1x1x120xf32>
    %144 = vector.broadcast %143 : vector<1x1x1x120xf32> to vector<1x8x10x120xf32>
    %145 = arith.mulf %140, %144 : vector<1x8x10x120xf32>
    %146 = arith.addf %139, %145 : vector<1x8x10x120xf32>
    %c0_83 = arith.constant 0 : index
    %c2_84 = arith.constant 2 : index
    %c1_85 = arith.constant 1 : index
    %c0_86 = arith.constant 0 : index
    %147 = vector.load %arg1[%c0_83, %c2_84, %c1_85, %c0_86] : memref<1x10x12x120xf32, #tpu.memory_space<vmem>>, vector<1x8x10x120xf32>
    %148 = vector.extract_strided_slice %0 {offsets = [21, 0], sizes = [1, 120], strides = [1, 1]} : vector<27x120xf32> to vector<1x120xf32>
    %149 = vector.shape_cast %148 : vector<1x120xf32> to vector<120xf32>
    %150 = vector.shape_cast %149 : vector<120xf32> to vector<1x1x1x120xf32>
    %151 = vector.broadcast %150 : vector<1x1x1x120xf32> to vector<1x8x10x120xf32>
    %152 = arith.mulf %147, %151 : vector<1x8x10x120xf32>
    %153 = arith.addf %146, %152 : vector<1x8x10x120xf32>
    %c0_87 = arith.constant 0 : index
    %c2_88 = arith.constant 2 : index
    %c1_89 = arith.constant 1 : index
    %c0_90 = arith.constant 0 : index
    %154 = vector.load %arg2[%c0_87, %c2_88, %c1_89, %c0_90] : memref<1x10x12x120xf32, #tpu.memory_space<vmem>>, vector<1x8x10x120xf32>
    %155 = vector.extract_strided_slice %0 {offsets = [22, 0], sizes = [1, 120], strides = [1, 1]} : vector<27x120xf32> to vector<1x120xf32>
    %156 = vector.shape_cast %155 : vector<1x120xf32> to vector<120xf32>
    %157 = vector.shape_cast %156 : vector<120xf32> to vector<1x1x1x120xf32>
    %158 = vector.broadcast %157 : vector<1x1x1x120xf32> to vector<1x8x10x120xf32>
    %159 = arith.mulf %154, %158 : vector<1x8x10x120xf32>
    %160 = arith.addf %153, %159 : vector<1x8x10x120xf32>
    %c0_91 = arith.constant 0 : index
    %c2_92 = arith.constant 2 : index
    %c1_93 = arith.constant 1 : index
    %c0_94 = arith.constant 0 : index
    %161 = vector.load %arg3[%c0_91, %c2_92, %c1_93, %c0_94] : memref<1x10x12x120xf32, #tpu.memory_space<vmem>>, vector<1x8x10x120xf32>
    %162 = vector.extract_strided_slice %0 {offsets = [23, 0], sizes = [1, 120], strides = [1, 1]} : vector<27x120xf32> to vector<1x120xf32>
    %163 = vector.shape_cast %162 : vector<1x120xf32> to vector<120xf32>
    %164 = vector.shape_cast %163 : vector<120xf32> to vector<1x1x1x120xf32>
    %165 = vector.broadcast %164 : vector<1x1x1x120xf32> to vector<1x8x10x120xf32>
    %166 = arith.mulf %161, %165 : vector<1x8x10x120xf32>
    %167 = arith.addf %160, %166 : vector<1x8x10x120xf32>
    %c0_95 = arith.constant 0 : index
    %c2_96 = arith.constant 2 : index
    %c2_97 = arith.constant 2 : index
    %c0_98 = arith.constant 0 : index
    %168 = vector.load %arg1[%c0_95, %c2_96, %c2_97, %c0_98] : memref<1x10x12x120xf32, #tpu.memory_space<vmem>>, vector<1x8x10x120xf32>
    %169 = vector.extract_strided_slice %0 {offsets = [24, 0], sizes = [1, 120], strides = [1, 1]} : vector<27x120xf32> to vector<1x120xf32>
    %170 = vector.shape_cast %169 : vector<1x120xf32> to vector<120xf32>
    %171 = vector.shape_cast %170 : vector<120xf32> to vector<1x1x1x120xf32>
    %172 = vector.broadcast %171 : vector<1x1x1x120xf32> to vector<1x8x10x120xf32>
    %173 = arith.mulf %168, %172 : vector<1x8x10x120xf32>
    %174 = arith.addf %167, %173 : vector<1x8x10x120xf32>
    %c0_99 = arith.constant 0 : index
    %c2_100 = arith.constant 2 : index
    %c2_101 = arith.constant 2 : index
    %c0_102 = arith.constant 0 : index
    %175 = vector.load %arg2[%c0_99, %c2_100, %c2_101, %c0_102] : memref<1x10x12x120xf32, #tpu.memory_space<vmem>>, vector<1x8x10x120xf32>
    %176 = vector.extract_strided_slice %0 {offsets = [25, 0], sizes = [1, 120], strides = [1, 1]} : vector<27x120xf32> to vector<1x120xf32>
    %177 = vector.shape_cast %176 : vector<1x120xf32> to vector<120xf32>
    %178 = vector.shape_cast %177 : vector<120xf32> to vector<1x1x1x120xf32>
    %179 = vector.broadcast %178 : vector<1x1x1x120xf32> to vector<1x8x10x120xf32>
    %180 = arith.mulf %175, %179 : vector<1x8x10x120xf32>
    %181 = arith.addf %174, %180 : vector<1x8x10x120xf32>
    %c0_103 = arith.constant 0 : index
    %c2_104 = arith.constant 2 : index
    %c2_105 = arith.constant 2 : index
    %c0_106 = arith.constant 0 : index
    %182 = vector.load %arg3[%c0_103, %c2_104, %c2_105, %c0_106] : memref<1x10x12x120xf32, #tpu.memory_space<vmem>>, vector<1x8x10x120xf32>
    %183 = vector.extract_strided_slice %0 {offsets = [26, 0], sizes = [1, 120], strides = [1, 1]} : vector<27x120xf32> to vector<1x120xf32>
    %184 = vector.shape_cast %183 : vector<1x120xf32> to vector<120xf32>
    %185 = vector.shape_cast %184 : vector<120xf32> to vector<1x1x1x120xf32>
    %186 = vector.broadcast %185 : vector<1x1x1x120xf32> to vector<1x8x10x120xf32>
    %187 = arith.mulf %182, %186 : vector<1x8x10x120xf32>
    %188 = arith.addf %181, %187 : vector<1x8x10x120xf32>
    %c0_107 = arith.constant 0 : index
    %c0_108 = arith.constant 0 : index
    %189 = vector.load %arg5[%c0_107, %c0_108] : memref<2x120xf32, #tpu.memory_space<vmem>>, vector<2x120xf32>
    %190 = vector.extract_strided_slice %189 {offsets = [0, 0], sizes = [1, 120], strides = [1, 1]} : vector<2x120xf32> to vector<1x120xf32>
    %191 = vector.shape_cast %190 : vector<1x120xf32> to vector<120xf32>
    %192 = vector.shape_cast %191 : vector<120xf32> to vector<1x1x1x120xf32>
    %193 = vector.broadcast %192 : vector<1x1x1x120xf32> to vector<1x8x10x120xf32>
    %194 = arith.mulf %188, %193 : vector<1x8x10x120xf32>
    %195 = vector.extract_strided_slice %189 {offsets = [1, 0], sizes = [1, 120], strides = [1, 1]} : vector<2x120xf32> to vector<1x120xf32>
    %196 = vector.shape_cast %195 : vector<1x120xf32> to vector<120xf32>
    %197 = vector.shape_cast %196 : vector<120xf32> to vector<1x1x1x120xf32>
    %198 = vector.broadcast %197 : vector<1x1x1x120xf32> to vector<1x8x10x120xf32>
    %199 = arith.addf %194, %198 : vector<1x8x10x120xf32>
    %200 = arith.negf %199 : vector<1x8x10x120xf32>
    %201 = math.exp %200 : vector<1x8x10x120xf32>
    %cst = arith.constant 1.000000e+00 : f32
    %202 = vector.broadcast %cst : f32 to vector<1x8x10x120xf32>
    %203 = arith.addf %202, %201 : vector<1x8x10x120xf32>
    %204 = arith.divf %202, %203 : vector<1x8x10x120xf32>
    %205 = arith.mulf %199, %204 : vector<1x8x10x120xf32>
    %206 = tpu.iota {dimensions = array<i32: 2>} : vector<1x1x10x120xi32>
    %207 = tpu.iota {dimensions = array<i32: 3>} : vector<1x1x10x120xi32>
    %c1_i32 = arith.constant 1 : i32
    %208 = vector.broadcast %c1_i32 : i32 to vector<1x1x10x120xi32>
    %209 = arith.cmpi sge, %206, %208 : vector<1x1x10x120xi32>
    %c8_i32 = arith.constant 8 : i32
    %210 = vector.broadcast %c8_i32 : i32 to vector<1x1x10x120xi32>
    %211 = arith.cmpi sle, %206, %210 : vector<1x1x10x120xi32>
    %212 = arith.andi %209, %211 : vector<1x1x10x120xi1>
    %c12_i32 = arith.constant 12 : i32
    %213 = vector.broadcast %c12_i32 : i32 to vector<1x1x10x120xi32>
    %214 = arith.cmpi sge, %207, %213 : vector<1x1x10x120xi32>
    %215 = arith.andi %212, %214 : vector<1x1x10x120xi1>
    %c108_i32 = arith.constant 108 : i32
    %216 = vector.broadcast %c108_i32 : i32 to vector<1x1x10x120xi32>
    %217 = arith.cmpi slt, %207, %216 : vector<1x1x10x120xi32>
    %218 = arith.andi %215, %217 : vector<1x1x10x120xi1>
    %cst_109 = arith.constant 0.000000e+00 : f32
    %219 = vector.shape_cast %218 : vector<1x1x10x120xi1> to vector<1x1x10x120xi1>
    %220 = vector.broadcast %219 : vector<1x1x10x120xi1> to vector<1x8x10x120xi1>
    %221 = vector.broadcast %cst_109 : f32 to vector<1x8x10x120xf32>
    %222 = arith.select %220, %205, %221 : vector<1x8x10x120xi1>, vector<1x8x10x120xf32>
    %c0_110 = arith.constant 0 : index
    %c0_111 = arith.constant 0 : index
    %223 = vector.load %arg8[%c0_110, %c0_111] : memref<120x12xf32, #tpu.memory_space<vmem>>, vector<120x12xf32>
    %cst_112 = arith.constant dense<0.000000e+00> : vector<1x10x120xf32>
    %224 = vector.multi_reduction <add>, %222, %cst_112 [1] : vector<1x8x10x120xf32> to vector<1x10x120xf32>
    %cst_113 = arith.constant dense<0.000000e+00> : vector<1x120xf32>
    %225 = vector.multi_reduction <add>, %224, %cst_113 [1] : vector<1x10x120xf32> to vector<1x120xf32>
    %cst_114 = arith.constant dense<0.000000e+00> : vector<1x12xf32>
    %226 = tpu.matmul %225, %223, %cst_114 {dimension_numbers = #tpu.dot_dimension_numbers<[1], [0], [0], [1], [0, 0, 1, 1], [], []>} : vector<1x120xf32>, vector<120x12xf32>, vector<1x12xf32> -> vector<1x12xf32>
    %cst_115 = arith.constant 0.001953125 : f32
    %227 = vector.broadcast %cst_115 : f32 to vector<1x12xf32>
    %228 = arith.mulf %226, %227 : vector<1x12xf32>
    %cst_116 = arith.constant 0.000000e+00 : f32
    %229 = vector.broadcast %cst_116 : f32 to vector<1x1x10x96xf32>
    %c0_117 = arith.constant 0 : index
    %c0_118 = arith.constant 0 : index
    %c0_119 = arith.constant 0 : index
    %c0_120 = arith.constant 0 : index
    %230 = vector.load %arg17[%c0_117, %c0_118, %c0_119, %c0_120] : memref<1x10x10x96xf32, #tpu.memory_space<vmem>>, vector<1x1x10x96xf32>
    tpu.vector_store %arg17[%c0_117, %c0_118, %c0_119, %c0_120], %229 {strides = array<i32>} : memref<1x10x10x96xf32, #tpu.memory_space<vmem>>, vector<1x1x10x96xf32>,
    %c0_121 = arith.constant 0 : index
    %c9 = arith.constant 9 : index
    %c0_122 = arith.constant 0 : index
    %c0_123 = arith.constant 0 : index
    %231 = vector.load %arg17[%c0_121, %c9, %c0_122, %c0_123] : memref<1x10x10x96xf32, #tpu.memory_space<vmem>>, vector<1x1x10x96xf32>
    tpu.vector_store %arg17[%c0_121, %c9, %c0_122, %c0_123], %229 {strides = array<i32>} : memref<1x10x10x96xf32, #tpu.memory_space<vmem>>, vector<1x1x10x96xf32>,
    %232 = vector.extract_strided_slice %222 {offsets = [0, 0, 0, 0], sizes = [1, 8, 10, 96], strides = [1, 1, 1, 1]} : vector<1x8x10x120xf32> to vector<1x8x10x96xf32>
    %c0_124 = arith.constant 0 : index
    %c1_125 = arith.constant 1 : index
    %c0_126 = arith.constant 0 : index
    %c0_127 = arith.constant 0 : index
    %233 = vector.load %arg17[%c0_124, %c1_125, %c0_126, %c0_127] : memref<1x10x10x96xf32, #tpu.memory_space<vmem>>, vector<1x8x10x96xf32>
    tpu.vector_store %arg17[%c0_124, %c1_125, %c0_126, %c0_127], %232 {strides = array<i32>} : memref<1x10x10x96xf32, #tpu.memory_space<vmem>>, vector<1x8x10x96xf32>,
    %c0_128 = arith.constant 0 : index
    %c0_129 = arith.constant 0 : index
    %c0_130 = arith.constant 0 : index
    %c0_131 = arith.constant 0 : index
    %234 = vector.load %arg18[%c0_128, %c0_129, %c0_130, %c0_131] : memref<1x10x10x96xf32, #tpu.memory_space<vmem>>, vector<1x1x10x96xf32>
    tpu.vector_store %arg18[%c0_128, %c0_129, %c0_130, %c0_131], %229 {strides = array<i32>} : memref<1x10x10x96xf32, #tpu.memory_space<vmem>>, vector<1x1x10x96xf32>,
    %c0_132 = arith.constant 0 : index
    %c9_133 = arith.constant 9 : index
    %c0_134 = arith.constant 0 : index
    %c0_135 = arith.constant 0 : index
    %235 = vector.load %arg18[%c0_132, %c9_133, %c0_134, %c0_135] : memref<1x10x10x96xf32, #tpu.memory_space<vmem>>, vector<1x1x10x96xf32>
    tpu.vector_store %arg18[%c0_132, %c9_133, %c0_134, %c0_135], %229 {strides = array<i32>} : memref<1x10x10x96xf32, #tpu.memory_space<vmem>>, vector<1x1x10x96xf32>,
    %236 = vector.extract_strided_slice %222 {offsets = [0, 0, 0, 12], sizes = [1, 8, 10, 96], strides = [1, 1, 1, 1]} : vector<1x8x10x120xf32> to vector<1x8x10x96xf32>
    %c0_136 = arith.constant 0 : index
    %c1_137 = arith.constant 1 : index
    %c0_138 = arith.constant 0 : index
    %c0_139 = arith.constant 0 : index
    %237 = vector.load %arg18[%c0_136, %c1_137, %c0_138, %c0_139] : memref<1x10x10x96xf32, #tpu.memory_space<vmem>>, vector<1x8x10x96xf32>
    tpu.vector_store %arg18[%c0_136, %c1_137, %c0_138, %c0_139], %236 {strides = array<i32>} : memref<1x10x10x96xf32, #tpu.memory_space<vmem>>, vector<1x8x10x96xf32>,
    %c0_140 = arith.constant 0 : index
    %c0_141 = arith.constant 0 : index
    %c0_142 = arith.constant 0 : index
    %c0_143 = arith.constant 0 : index
    %238 = vector.load %arg19[%c0_140, %c0_141, %c0_142, %c0_143] : memref<1x10x10x96xf32, #tpu.memory_space<vmem>>, vector<1x1x10x96xf32>
    tpu.vector_store %arg19[%c0_140, %c0_141, %c0_142, %c0_143], %229 {strides = array<i32>} : memref<1x10x10x96xf32, #tpu.memory_space<vmem>>, vector<1x1x10x96xf32>,
    %c0_144 = arith.constant 0 : index
    %c9_145 = arith.constant 9 : index
    %c0_146 = arith.constant 0 : index
    %c0_147 = arith.constant 0 : index
    %239 = vector.load %arg19[%c0_144, %c9_145, %c0_146, %c0_147] : memref<1x10x10x96xf32, #tpu.memory_space<vmem>>, vector<1x1x10x96xf32>
    tpu.vector_store %arg19[%c0_144, %c9_145, %c0_146, %c0_147], %229 {strides = array<i32>} : memref<1x10x10x96xf32, #tpu.memory_space<vmem>>, vector<1x1x10x96xf32>,
    %240 = vector.extract_strided_slice %222 {offsets = [0, 0, 0, 24], sizes = [1, 8, 10, 96], strides = [1, 1, 1, 1]} : vector<1x8x10x120xf32> to vector<1x8x10x96xf32>
    %c0_148 = arith.constant 0 : index
    %c1_149 = arith.constant 1 : index
    %c0_150 = arith.constant 0 : index
    %c0_151 = arith.constant 0 : index
    %241 = vector.load %arg19[%c0_148, %c1_149, %c0_150, %c0_151] : memref<1x10x10x96xf32, #tpu.memory_space<vmem>>, vector<1x8x10x96xf32>
    tpu.vector_store %arg19[%c0_148, %c1_149, %c0_150, %c0_151], %240 {strides = array<i32>} : memref<1x10x10x96xf32, #tpu.memory_space<vmem>>, vector<1x8x10x96xf32>,
    %c0_152 = arith.constant 0 : index
    %c0_153 = arith.constant 0 : index
    %242 = vector.load %arg6[%c0_152, %c0_153] : memref<27x96xf32, #tpu.memory_space<vmem>>, vector<27x96xf32>
    %c0_154 = arith.constant 0 : index
    %c0_155 = arith.constant 0 : index
    %c0_156 = arith.constant 0 : index
    %c0_157 = arith.constant 0 : index
    %243 = vector.load %arg17[%c0_154, %c0_155, %c0_156, %c0_157] : memref<1x10x10x96xf32, #tpu.memory_space<vmem>>, vector<1x8x8x96xf32>
    %244 = vector.extract_strided_slice %242 {offsets = [0, 0], sizes = [1, 96], strides = [1, 1]} : vector<27x96xf32> to vector<1x96xf32>
    %245 = vector.shape_cast %244 : vector<1x96xf32> to vector<96xf32>
    %246 = vector.shape_cast %245 : vector<96xf32> to vector<1x1x1x96xf32>
    %247 = vector.broadcast %246 : vector<1x1x1x96xf32> to vector<1x8x8x96xf32>
    %248 = arith.mulf %243, %247 : vector<1x8x8x96xf32>
    %c0_158 = arith.constant 0 : index
    %c0_159 = arith.constant 0 : index
    %c0_160 = arith.constant 0 : index
    %c0_161 = arith.constant 0 : index
    %249 = vector.load %arg18[%c0_158, %c0_159, %c0_160, %c0_161] : memref<1x10x10x96xf32, #tpu.memory_space<vmem>>, vector<1x8x8x96xf32>
    %250 = vector.extract_strided_slice %242 {offsets = [1, 0], sizes = [1, 96], strides = [1, 1]} : vector<27x96xf32> to vector<1x96xf32>
    %251 = vector.shape_cast %250 : vector<1x96xf32> to vector<96xf32>
    %252 = vector.shape_cast %251 : vector<96xf32> to vector<1x1x1x96xf32>
    %253 = vector.broadcast %252 : vector<1x1x1x96xf32> to vector<1x8x8x96xf32>
    %254 = arith.mulf %249, %253 : vector<1x8x8x96xf32>
    %255 = arith.addf %248, %254 : vector<1x8x8x96xf32>
    %c0_162 = arith.constant 0 : index
    %c0_163 = arith.constant 0 : index
    %c0_164 = arith.constant 0 : index
    %c0_165 = arith.constant 0 : index
    %256 = vector.load %arg19[%c0_162, %c0_163, %c0_164, %c0_165] : memref<1x10x10x96xf32, #tpu.memory_space<vmem>>, vector<1x8x8x96xf32>
    %257 = vector.extract_strided_slice %242 {offsets = [2, 0], sizes = [1, 96], strides = [1, 1]} : vector<27x96xf32> to vector<1x96xf32>
    %258 = vector.shape_cast %257 : vector<1x96xf32> to vector<96xf32>
    %259 = vector.shape_cast %258 : vector<96xf32> to vector<1x1x1x96xf32>
    %260 = vector.broadcast %259 : vector<1x1x1x96xf32> to vector<1x8x8x96xf32>
    %261 = arith.mulf %256, %260 : vector<1x8x8x96xf32>
    %262 = arith.addf %255, %261 : vector<1x8x8x96xf32>
    %c0_166 = arith.constant 0 : index
    %c0_167 = arith.constant 0 : index
    %c1_168 = arith.constant 1 : index
    %c0_169 = arith.constant 0 : index
    %263 = vector.load %arg17[%c0_166, %c0_167, %c1_168, %c0_169] : memref<1x10x10x96xf32, #tpu.memory_space<vmem>>, vector<1x8x8x96xf32>
    %264 = vector.extract_strided_slice %242 {offsets = [3, 0], sizes = [1, 96], strides = [1, 1]} : vector<27x96xf32> to vector<1x96xf32>
    %265 = vector.shape_cast %264 : vector<1x96xf32> to vector<96xf32>
    %266 = vector.shape_cast %265 : vector<96xf32> to vector<1x1x1x96xf32>
    %267 = vector.broadcast %266 : vector<1x1x1x96xf32> to vector<1x8x8x96xf32>
    %268 = arith.mulf %263, %267 : vector<1x8x8x96xf32>
    %269 = arith.addf %262, %268 : vector<1x8x8x96xf32>
    %c0_170 = arith.constant 0 : index
    %c0_171 = arith.constant 0 : index
    %c1_172 = arith.constant 1 : index
    %c0_173 = arith.constant 0 : index
    %270 = vector.load %arg18[%c0_170, %c0_171, %c1_172, %c0_173] : memref<1x10x10x96xf32, #tpu.memory_space<vmem>>, vector<1x8x8x96xf32>
    %271 = vector.extract_strided_slice %242 {offsets = [4, 0], sizes = [1, 96], strides = [1, 1]} : vector<27x96xf32> to vector<1x96xf32>
    %272 = vector.shape_cast %271 : vector<1x96xf32> to vector<96xf32>
    %273 = vector.shape_cast %272 : vector<96xf32> to vector<1x1x1x96xf32>
    %274 = vector.broadcast %273 : vector<1x1x1x96xf32> to vector<1x8x8x96xf32>
    %275 = arith.mulf %270, %274 : vector<1x8x8x96xf32>
    %276 = arith.addf %269, %275 : vector<1x8x8x96xf32>
    %c0_174 = arith.constant 0 : index
    %c0_175 = arith.constant 0 : index
    %c1_176 = arith.constant 1 : index
    %c0_177 = arith.constant 0 : index
    %277 = vector.load %arg19[%c0_174, %c0_175, %c1_176, %c0_177] : memref<1x10x10x96xf32, #tpu.memory_space<vmem>>, vector<1x8x8x96xf32>
    %278 = vector.extract_strided_slice %242 {offsets = [5, 0], sizes = [1, 96], strides = [1, 1]} : vector<27x96xf32> to vector<1x96xf32>
    %279 = vector.shape_cast %278 : vector<1x96xf32> to vector<96xf32>
    %280 = vector.shape_cast %279 : vector<96xf32> to vector<1x1x1x96xf32>
    %281 = vector.broadcast %280 : vector<1x1x1x96xf32> to vector<1x8x8x96xf32>
    %282 = arith.mulf %277, %281 : vector<1x8x8x96xf32>
    %283 = arith.addf %276, %282 : vector<1x8x8x96xf32>
    %c0_178 = arith.constant 0 : index
    %c0_179 = arith.constant 0 : index
    %c2_180 = arith.constant 2 : index
    %c0_181 = arith.constant 0 : index
    %284 = vector.load %arg17[%c0_178, %c0_179, %c2_180, %c0_181] : memref<1x10x10x96xf32, #tpu.memory_space<vmem>>, vector<1x8x8x96xf32>
    %285 = vector.extract_strided_slice %242 {offsets = [6, 0], sizes = [1, 96], strides = [1, 1]} : vector<27x96xf32> to vector<1x96xf32>
    %286 = vector.shape_cast %285 : vector<1x96xf32> to vector<96xf32>
    %287 = vector.shape_cast %286 : vector<96xf32> to vector<1x1x1x96xf32>
    %288 = vector.broadcast %287 : vector<1x1x1x96xf32> to vector<1x8x8x96xf32>
    %289 = arith.mulf %284, %288 : vector<1x8x8x96xf32>
    %290 = arith.addf %283, %289 : vector<1x8x8x96xf32>
    %c0_182 = arith.constant 0 : index
    %c0_183 = arith.constant 0 : index
    %c2_184 = arith.constant 2 : index
    %c0_185 = arith.constant 0 : index
    %291 = vector.load %arg18[%c0_182, %c0_183, %c2_184, %c0_185] : memref<1x10x10x96xf32, #tpu.memory_space<vmem>>, vector<1x8x8x96xf32>
    %292 = vector.extract_strided_slice %242 {offsets = [7, 0], sizes = [1, 96], strides = [1, 1]} : vector<27x96xf32> to vector<1x96xf32>
    %293 = vector.shape_cast %292 : vector<1x96xf32> to vector<96xf32>
    %294 = vector.shape_cast %293 : vector<96xf32> to vector<1x1x1x96xf32>
    %295 = vector.broadcast %294 : vector<1x1x1x96xf32> to vector<1x8x8x96xf32>
    %296 = arith.mulf %291, %295 : vector<1x8x8x96xf32>
    %297 = arith.addf %290, %296 : vector<1x8x8x96xf32>
    %c0_186 = arith.constant 0 : index
    %c0_187 = arith.constant 0 : index
    %c2_188 = arith.constant 2 : index
    %c0_189 = arith.constant 0 : index
    %298 = vector.load %arg19[%c0_186, %c0_187, %c2_188, %c0_189] : memref<1x10x10x96xf32, #tpu.memory_space<vmem>>, vector<1x8x8x96xf32>
    %299 = vector.extract_strided_slice %242 {offsets = [8, 0], sizes = [1, 96], strides = [1, 1]} : vector<27x96xf32> to vector<1x96xf32>
    %300 = vector.shape_cast %299 : vector<1x96xf32> to vector<96xf32>
    %301 = vector.shape_cast %300 : vector<96xf32> to vector<1x1x1x96xf32>
    %302 = vector.broadcast %301 : vector<1x1x1x96xf32> to vector<1x8x8x96xf32>
    %303 = arith.mulf %298, %302 : vector<1x8x8x96xf32>
    %304 = arith.addf %297, %303 : vector<1x8x8x96xf32>
    %c0_190 = arith.constant 0 : index
    %c1_191 = arith.constant 1 : index
    %c0_192 = arith.constant 0 : index
    %c0_193 = arith.constant 0 : index
    %305 = vector.load %arg17[%c0_190, %c1_191, %c0_192, %c0_193] : memref<1x10x10x96xf32, #tpu.memory_space<vmem>>, vector<1x8x8x96xf32>
    %306 = vector.extract_strided_slice %242 {offsets = [9, 0], sizes = [1, 96], strides = [1, 1]} : vector<27x96xf32> to vector<1x96xf32>
    %307 = vector.shape_cast %306 : vector<1x96xf32> to vector<96xf32>
    %308 = vector.shape_cast %307 : vector<96xf32> to vector<1x1x1x96xf32>
    %309 = vector.broadcast %308 : vector<1x1x1x96xf32> to vector<1x8x8x96xf32>
    %310 = arith.mulf %305, %309 : vector<1x8x8x96xf32>
    %311 = arith.addf %304, %310 : vector<1x8x8x96xf32>
    %c0_194 = arith.constant 0 : index
    %c1_195 = arith.constant 1 : index
    %c0_196 = arith.constant 0 : index
    %c0_197 = arith.constant 0 : index
    %312 = vector.load %arg18[%c0_194, %c1_195, %c0_196, %c0_197] : memref<1x10x10x96xf32, #tpu.memory_space<vmem>>, vector<1x8x8x96xf32>
    %313 = vector.extract_strided_slice %242 {offsets = [10, 0], sizes = [1, 96], strides = [1, 1]} : vector<27x96xf32> to vector<1x96xf32>
    %314 = vector.shape_cast %313 : vector<1x96xf32> to vector<96xf32>
    %315 = vector.shape_cast %314 : vector<96xf32> to vector<1x1x1x96xf32>
    %316 = vector.broadcast %315 : vector<1x1x1x96xf32> to vector<1x8x8x96xf32>
    %317 = arith.mulf %312, %316 : vector<1x8x8x96xf32>
    %318 = arith.addf %311, %317 : vector<1x8x8x96xf32>
    %c0_198 = arith.constant 0 : index
    %c1_199 = arith.constant 1 : index
    %c0_200 = arith.constant 0 : index
    %c0_201 = arith.constant 0 : index
    %319 = vector.load %arg19[%c0_198, %c1_199, %c0_200, %c0_201] : memref<1x10x10x96xf32, #tpu.memory_space<vmem>>, vector<1x8x8x96xf32>
    %320 = vector.extract_strided_slice %242 {offsets = [11, 0], sizes = [1, 96], strides = [1, 1]} : vector<27x96xf32> to vector<1x96xf32>
    %321 = vector.shape_cast %320 : vector<1x96xf32> to vector<96xf32>
    %322 = vector.shape_cast %321 : vector<96xf32> to vector<1x1x1x96xf32>
    %323 = vector.broadcast %322 : vector<1x1x1x96xf32> to vector<1x8x8x96xf32>
    %324 = arith.mulf %319, %323 : vector<1x8x8x96xf32>
    %325 = arith.addf %318, %324 : vector<1x8x8x96xf32>
    %c0_202 = arith.constant 0 : index
    %c1_203 = arith.constant 1 : index
    %c1_204 = arith.constant 1 : index
    %c0_205 = arith.constant 0 : index
    %326 = vector.load %arg17[%c0_202, %c1_203, %c1_204, %c0_205] : memref<1x10x10x96xf32, #tpu.memory_space<vmem>>, vector<1x8x8x96xf32>
    %327 = vector.extract_strided_slice %242 {offsets = [12, 0], sizes = [1, 96], strides = [1, 1]} : vector<27x96xf32> to vector<1x96xf32>
    %328 = vector.shape_cast %327 : vector<1x96xf32> to vector<96xf32>
    %329 = vector.shape_cast %328 : vector<96xf32> to vector<1x1x1x96xf32>
    %330 = vector.broadcast %329 : vector<1x1x1x96xf32> to vector<1x8x8x96xf32>
    %331 = arith.mulf %326, %330 : vector<1x8x8x96xf32>
    %332 = arith.addf %325, %331 : vector<1x8x8x96xf32>
    %c0_206 = arith.constant 0 : index
    %c1_207 = arith.constant 1 : index
    %c1_208 = arith.constant 1 : index
    %c0_209 = arith.constant 0 : index
    %333 = vector.load %arg18[%c0_206, %c1_207, %c1_208, %c0_209] : memref<1x10x10x96xf32, #tpu.memory_space<vmem>>, vector<1x8x8x96xf32>
    %334 = vector.extract_strided_slice %242 {offsets = [13, 0], sizes = [1, 96], strides = [1, 1]} : vector<27x96xf32> to vector<1x96xf32>
    %335 = vector.shape_cast %334 : vector<1x96xf32> to vector<96xf32>
    %336 = vector.shape_cast %335 : vector<96xf32> to vector<1x1x1x96xf32>
    %337 = vector.broadcast %336 : vector<1x1x1x96xf32> to vector<1x8x8x96xf32>
    %338 = arith.mulf %333, %337 : vector<1x8x8x96xf32>
    %339 = arith.addf %332, %338 : vector<1x8x8x96xf32>
    %c0_210 = arith.constant 0 : index
    %c1_211 = arith.constant 1 : index
    %c1_212 = arith.constant 1 : index
    %c0_213 = arith.constant 0 : index
    %340 = vector.load %arg19[%c0_210, %c1_211, %c1_212, %c0_213] : memref<1x10x10x96xf32, #tpu.memory_space<vmem>>, vector<1x8x8x96xf32>
    %341 = vector.extract_strided_slice %242 {offsets = [14, 0], sizes = [1, 96], strides = [1, 1]} : vector<27x96xf32> to vector<1x96xf32>
    %342 = vector.shape_cast %341 : vector<1x96xf32> to vector<96xf32>
    %343 = vector.shape_cast %342 : vector<96xf32> to vector<1x1x1x96xf32>
    %344 = vector.broadcast %343 : vector<1x1x1x96xf32> to vector<1x8x8x96xf32>
    %345 = arith.mulf %340, %344 : vector<1x8x8x96xf32>
    %346 = arith.addf %339, %345 : vector<1x8x8x96xf32>
    %c0_214 = arith.constant 0 : index
    %c1_215 = arith.constant 1 : index
    %c2_216 = arith.constant 2 : index
    %c0_217 = arith.constant 0 : index
    %347 = vector.load %arg17[%c0_214, %c1_215, %c2_216, %c0_217] : memref<1x10x10x96xf32, #tpu.memory_space<vmem>>, vector<1x8x8x96xf32>
    %348 = vector.extract_strided_slice %242 {offsets = [15, 0], sizes = [1, 96], strides = [1, 1]} : vector<27x96xf32> to vector<1x96xf32>
    %349 = vector.shape_cast %348 : vector<1x96xf32> to vector<96xf32>
    %350 = vector.shape_cast %349 : vector<96xf32> to vector<1x1x1x96xf32>
    %351 = vector.broadcast %350 : vector<1x1x1x96xf32> to vector<1x8x8x96xf32>
    %352 = arith.mulf %347, %351 : vector<1x8x8x96xf32>
    %353 = arith.addf %346, %352 : vector<1x8x8x96xf32>
    %c0_218 = arith.constant 0 : index
    %c1_219 = arith.constant 1 : index
    %c2_220 = arith.constant 2 : index
    %c0_221 = arith.constant 0 : index
    %354 = vector.load %arg18[%c0_218, %c1_219, %c2_220, %c0_221] : memref<1x10x10x96xf32, #tpu.memory_space<vmem>>, vector<1x8x8x96xf32>
    %355 = vector.extract_strided_slice %242 {offsets = [16, 0], sizes = [1, 96], strides = [1, 1]} : vector<27x96xf32> to vector<1x96xf32>
    %356 = vector.shape_cast %355 : vector<1x96xf32> to vector<96xf32>
    %357 = vector.shape_cast %356 : vector<96xf32> to vector<1x1x1x96xf32>
    %358 = vector.broadcast %357 : vector<1x1x1x96xf32> to vector<1x8x8x96xf32>
    %359 = arith.mulf %354, %358 : vector<1x8x8x96xf32>
    %360 = arith.addf %353, %359 : vector<1x8x8x96xf32>
    %c0_222 = arith.constant 0 : index
    %c1_223 = arith.constant 1 : index
    %c2_224 = arith.constant 2 : index
    %c0_225 = arith.constant 0 : index
    %361 = vector.load %arg19[%c0_222, %c1_223, %c2_224, %c0_225] : memref<1x10x10x96xf32, #tpu.memory_space<vmem>>, vector<1x8x8x96xf32>
    %362 = vector.extract_strided_slice %242 {offsets = [17, 0], sizes = [1, 96], strides = [1, 1]} : vector<27x96xf32> to vector<1x96xf32>
    %363 = vector.shape_cast %362 : vector<1x96xf32> to vector<96xf32>
    %364 = vector.shape_cast %363 : vector<96xf32> to vector<1x1x1x96xf32>
    %365 = vector.broadcast %364 : vector<1x1x1x96xf32> to vector<1x8x8x96xf32>
    %366 = arith.mulf %361, %365 : vector<1x8x8x96xf32>
    %367 = arith.addf %360, %366 : vector<1x8x8x96xf32>
    %c0_226 = arith.constant 0 : index
    %c2_227 = arith.constant 2 : index
    %c0_228 = arith.constant 0 : index
    %c0_229 = arith.constant 0 : index
    %368 = vector.load %arg17[%c0_226, %c2_227, %c0_228, %c0_229] : memref<1x10x10x96xf32, #tpu.memory_space<vmem>>, vector<1x8x8x96xf32>
    %369 = vector.extract_strided_slice %242 {offsets = [18, 0], sizes = [1, 96], strides = [1, 1]} : vector<27x96xf32> to vector<1x96xf32>
    %370 = vector.shape_cast %369 : vector<1x96xf32> to vector<96xf32>
    %371 = vector.shape_cast %370 : vector<96xf32> to vector<1x1x1x96xf32>
    %372 = vector.broadcast %371 : vector<1x1x1x96xf32> to vector<1x8x8x96xf32>
    %373 = arith.mulf %368, %372 : vector<1x8x8x96xf32>
    %374 = arith.addf %367, %373 : vector<1x8x8x96xf32>
    %c0_230 = arith.constant 0 : index
    %c2_231 = arith.constant 2 : index
    %c0_232 = arith.constant 0 : index
    %c0_233 = arith.constant 0 : index
    %375 = vector.load %arg18[%c0_230, %c2_231, %c0_232, %c0_233] : memref<1x10x10x96xf32, #tpu.memory_space<vmem>>, vector<1x8x8x96xf32>
    %376 = vector.extract_strided_slice %242 {offsets = [19, 0], sizes = [1, 96], strides = [1, 1]} : vector<27x96xf32> to vector<1x96xf32>
    %377 = vector.shape_cast %376 : vector<1x96xf32> to vector<96xf32>
    %378 = vector.shape_cast %377 : vector<96xf32> to vector<1x1x1x96xf32>
    %379 = vector.broadcast %378 : vector<1x1x1x96xf32> to vector<1x8x8x96xf32>
    %380 = arith.mulf %375, %379 : vector<1x8x8x96xf32>
    %381 = arith.addf %374, %380 : vector<1x8x8x96xf32>
    %c0_234 = arith.constant 0 : index
    %c2_235 = arith.constant 2 : index
    %c0_236 = arith.constant 0 : index
    %c0_237 = arith.constant 0 : index
    %382 = vector.load %arg19[%c0_234, %c2_235, %c0_236, %c0_237] : memref<1x10x10x96xf32, #tpu.memory_space<vmem>>, vector<1x8x8x96xf32>
    %383 = vector.extract_strided_slice %242 {offsets = [20, 0], sizes = [1, 96], strides = [1, 1]} : vector<27x96xf32> to vector<1x96xf32>
    %384 = vector.shape_cast %383 : vector<1x96xf32> to vector<96xf32>
    %385 = vector.shape_cast %384 : vector<96xf32> to vector<1x1x1x96xf32>
    %386 = vector.broadcast %385 : vector<1x1x1x96xf32> to vector<1x8x8x96xf32>
    %387 = arith.mulf %382, %386 : vector<1x8x8x96xf32>
    %388 = arith.addf %381, %387 : vector<1x8x8x96xf32>
    %c0_238 = arith.constant 0 : index
    %c2_239 = arith.constant 2 : index
    %c1_240 = arith.constant 1 : index
    %c0_241 = arith.constant 0 : index
    %389 = vector.load %arg17[%c0_238, %c2_239, %c1_240, %c0_241] : memref<1x10x10x96xf32, #tpu.memory_space<vmem>>, vector<1x8x8x96xf32>
    %390 = vector.extract_strided_slice %242 {offsets = [21, 0], sizes = [1, 96], strides = [1, 1]} : vector<27x96xf32> to vector<1x96xf32>
    %391 = vector.shape_cast %390 : vector<1x96xf32> to vector<96xf32>
    %392 = vector.shape_cast %391 : vector<96xf32> to vector<1x1x1x96xf32>
    %393 = vector.broadcast %392 : vector<1x1x1x96xf32> to vector<1x8x8x96xf32>
    %394 = arith.mulf %389, %393 : vector<1x8x8x96xf32>
    %395 = arith.addf %388, %394 : vector<1x8x8x96xf32>
    %c0_242 = arith.constant 0 : index
    %c2_243 = arith.constant 2 : index
    %c1_244 = arith.constant 1 : index
    %c0_245 = arith.constant 0 : index
    %396 = vector.load %arg18[%c0_242, %c2_243, %c1_244, %c0_245] : memref<1x10x10x96xf32, #tpu.memory_space<vmem>>, vector<1x8x8x96xf32>
    %397 = vector.extract_strided_slice %242 {offsets = [22, 0], sizes = [1, 96], strides = [1, 1]} : vector<27x96xf32> to vector<1x96xf32>
    %398 = vector.shape_cast %397 : vector<1x96xf32> to vector<96xf32>
    %399 = vector.shape_cast %398 : vector<96xf32> to vector<1x1x1x96xf32>
    %400 = vector.broadcast %399 : vector<1x1x1x96xf32> to vector<1x8x8x96xf32>
    %401 = arith.mulf %396, %400 : vector<1x8x8x96xf32>
    %402 = arith.addf %395, %401 : vector<1x8x8x96xf32>
    %c0_246 = arith.constant 0 : index
    %c2_247 = arith.constant 2 : index
    %c1_248 = arith.constant 1 : index
    %c0_249 = arith.constant 0 : index
    %403 = vector.load %arg19[%c0_246, %c2_247, %c1_248, %c0_249] : memref<1x10x10x96xf32, #tpu.memory_space<vmem>>, vector<1x8x8x96xf32>
    %404 = vector.extract_strided_slice %242 {offsets = [23, 0], sizes = [1, 96], strides = [1, 1]} : vector<27x96xf32> to vector<1x96xf32>
    %405 = vector.shape_cast %404 : vector<1x96xf32> to vector<96xf32>
    %406 = vector.shape_cast %405 : vector<96xf32> to vector<1x1x1x96xf32>
    %407 = vector.broadcast %406 : vector<1x1x1x96xf32> to vector<1x8x8x96xf32>
    %408 = arith.mulf %403, %407 : vector<1x8x8x96xf32>
    %409 = arith.addf %402, %408 : vector<1x8x8x96xf32>
    %c0_250 = arith.constant 0 : index
    %c2_251 = arith.constant 2 : index
    %c2_252 = arith.constant 2 : index
    %c0_253 = arith.constant 0 : index
    %410 = vector.load %arg17[%c0_250, %c2_251, %c2_252, %c0_253] : memref<1x10x10x96xf32, #tpu.memory_space<vmem>>, vector<1x8x8x96xf32>
    %411 = vector.extract_strided_slice %242 {offsets = [24, 0], sizes = [1, 96], strides = [1, 1]} : vector<27x96xf32> to vector<1x96xf32>
    %412 = vector.shape_cast %411 : vector<1x96xf32> to vector<96xf32>
    %413 = vector.shape_cast %412 : vector<96xf32> to vector<1x1x1x96xf32>
    %414 = vector.broadcast %413 : vector<1x1x1x96xf32> to vector<1x8x8x96xf32>
    %415 = arith.mulf %410, %414 : vector<1x8x8x96xf32>
    %416 = arith.addf %409, %415 : vector<1x8x8x96xf32>
    %c0_254 = arith.constant 0 : index
    %c2_255 = arith.constant 2 : index
    %c2_256 = arith.constant 2 : index
    %c0_257 = arith.constant 0 : index
    %417 = vector.load %arg18[%c0_254, %c2_255, %c2_256, %c0_257] : memref<1x10x10x96xf32, #tpu.memory_space<vmem>>, vector<1x8x8x96xf32>
    %418 = vector.extract_strided_slice %242 {offsets = [25, 0], sizes = [1, 96], strides = [1, 1]} : vector<27x96xf32> to vector<1x96xf32>
    %419 = vector.shape_cast %418 : vector<1x96xf32> to vector<96xf32>
    %420 = vector.shape_cast %419 : vector<96xf32> to vector<1x1x1x96xf32>
    %421 = vector.broadcast %420 : vector<1x1x1x96xf32> to vector<1x8x8x96xf32>
    %422 = arith.mulf %417, %421 : vector<1x8x8x96xf32>
    %423 = arith.addf %416, %422 : vector<1x8x8x96xf32>
    %c0_258 = arith.constant 0 : index
    %c2_259 = arith.constant 2 : index
    %c2_260 = arith.constant 2 : index
    %c0_261 = arith.constant 0 : index
    %424 = vector.load %arg19[%c0_258, %c2_259, %c2_260, %c0_261] : memref<1x10x10x96xf32, #tpu.memory_space<vmem>>, vector<1x8x8x96xf32>
    %425 = vector.extract_strided_slice %242 {offsets = [26, 0], sizes = [1, 96], strides = [1, 1]} : vector<27x96xf32> to vector<1x96xf32>
    %426 = vector.shape_cast %425 : vector<1x96xf32> to vector<96xf32>
    %427 = vector.shape_cast %426 : vector<96xf32> to vector<1x1x1x96xf32>
    %428 = vector.broadcast %427 : vector<1x1x1x96xf32> to vector<1x8x8x96xf32>
    %429 = arith.mulf %424, %428 : vector<1x8x8x96xf32>
    %430 = arith.addf %423, %429 : vector<1x8x8x96xf32>
    %c0_262 = arith.constant 0 : index
    %c0_263 = arith.constant 0 : index
    %431 = vector.load %arg7[%c0_262, %c0_263] : memref<2x96xf32, #tpu.memory_space<vmem>>, vector<2x96xf32>
    %432 = vector.extract_strided_slice %431 {offsets = [0, 0], sizes = [1, 96], strides = [1, 1]} : vector<2x96xf32> to vector<1x96xf32>
    %433 = vector.shape_cast %432 : vector<1x96xf32> to vector<96xf32>
    %434 = vector.shape_cast %433 : vector<96xf32> to vector<1x1x1x96xf32>
    %435 = vector.broadcast %434 : vector<1x1x1x96xf32> to vector<1x8x8x96xf32>
    %436 = arith.mulf %430, %435 : vector<1x8x8x96xf32>
    %437 = vector.extract_strided_slice %431 {offsets = [1, 0], sizes = [1, 96], strides = [1, 1]} : vector<2x96xf32> to vector<1x96xf32>
    %438 = vector.shape_cast %437 : vector<1x96xf32> to vector<96xf32>
    %439 = vector.shape_cast %438 : vector<96xf32> to vector<1x1x1x96xf32>
    %440 = vector.broadcast %439 : vector<1x1x1x96xf32> to vector<1x8x8x96xf32>
    %441 = arith.addf %436, %440 : vector<1x8x8x96xf32>
    %442 = arith.negf %441 : vector<1x8x8x96xf32>
    %443 = math.exp %442 : vector<1x8x8x96xf32>
    %cst_264 = arith.constant 1.000000e+00 : f32
    %444 = vector.broadcast %cst_264 : f32 to vector<1x8x8x96xf32>
    %445 = arith.addf %444, %443 : vector<1x8x8x96xf32>
    %446 = arith.divf %444, %445 : vector<1x8x8x96xf32>
    %447 = arith.mulf %441, %446 : vector<1x8x8x96xf32>
    %cst_265 = arith.constant dense<0.000000e+00> : vector<1x8x96xf32>
    %448 = vector.multi_reduction <add>, %447, %cst_265 [1] : vector<1x8x8x96xf32> to vector<1x8x96xf32>
    %cst_266 = arith.constant dense<0.000000e+00> : vector<1x96xf32>
    %449 = vector.multi_reduction <add>, %448, %cst_266 [1] : vector<1x8x96xf32> to vector<1x96xf32>
    %450 = vector.extract_strided_slice %223 {offsets = [0, 0], sizes = [96, 12], strides = [1, 1]} : vector<120x12xf32> to vector<96x12xf32>
    %cst_267 = arith.constant dense<0.000000e+00> : vector<1x12xf32>
    %451 = tpu.matmul %449, %450, %cst_267 {dimension_numbers = #tpu.dot_dimension_numbers<[1], [0], [0], [1], [0, 0, 1, 1], [], []>} : vector<1x96xf32>, vector<96x12xf32>, vector<1x12xf32> -> vector<1x12xf32>
    %cst_268 = arith.constant 0.001953125 : f32
    %452 = vector.broadcast %cst_268 : f32 to vector<1x12xf32>
    %453 = arith.mulf %451, %452 : vector<1x12xf32>
    %c0_269 = arith.constant 0 : index
    %c0_270 = arith.constant 0 : index
    %454 = vector.load %arg15[%c0_269, %c0_270] : memref<8x128xf32, #tpu.memory_space<vmem>>, vector<8x128xf32>
    %455 = vector.extract_strided_slice %454 {offsets = [0, 0], sizes = [1, 3], strides = [1, 1]} : vector<8x128xf32> to vector<1x3xf32>
    %456 = vector.shape_cast %455 : vector<1x3xf32> to vector<3xf32>
    %457 = vector.extract_strided_slice %454 {offsets = [1, 0], sizes = [1, 12], strides = [1, 1]} : vector<8x128xf32> to vector<1x12xf32>
    %458 = vector.shape_cast %457 : vector<1x12xf32> to vector<12xf32>
    %459 = vector.extract_strided_slice %454 {offsets = [2, 0], sizes = [1, 12], strides = [1, 1]} : vector<8x128xf32> to vector<1x12xf32>
    %460 = vector.shape_cast %459 : vector<1x12xf32> to vector<12xf32>
    %461 = vector.extract_strided_slice %454 {offsets = [3, 0], sizes = [1, 12], strides = [1, 1]} : vector<8x128xf32> to vector<1x12xf32>
    %462 = vector.shape_cast %461 : vector<1x12xf32> to vector<12xf32>
    %463 = vector.extract_strided_slice %454 {offsets = [4, 0], sizes = [1, 32], strides = [1, 1]} : vector<8x128xf32> to vector<1x32xf32>
    %464 = vector.shape_cast %463 : vector<1x32xf32> to vector<32xf32>
    %465 = vector.extract_strided_slice %454 {offsets = [5, 0], sizes = [1, 128], strides = [1, 1]} : vector<8x128xf32> to vector<1x128xf32>
    %466 = vector.shape_cast %465 : vector<1x128xf32> to vector<128xf32>
    %467 = vector.extract_strided_slice %454 {offsets = [6, 0], sizes = [1, 10], strides = [1, 1]} : vector<8x128xf32> to vector<1x10xf32>
    %468 = vector.shape_cast %467 : vector<1x10xf32> to vector<10xf32>
    %c0_271 = arith.constant 0 : index
    %c0_272 = arith.constant 0 : index
    %469 = vector.load %arg9[%c0_271, %c0_272] : memref<12x3xf32, #tpu.memory_space<vmem>>, vector<12x3xf32>
    %cst_273 = arith.constant dense<0.000000e+00> : vector<1x3xf32>
    %470 = tpu.matmul %453, %469, %cst_273 {dimension_numbers = #tpu.dot_dimension_numbers<[1], [0], [0], [1], [0, 0, 1, 1], [], []>} : vector<1x12xf32>, vector<12x3xf32>, vector<1x3xf32> -> vector<1x3xf32>
    %471 = vector.shape_cast %456 : vector<3xf32> to vector<1x3xf32>
    %472 = arith.addf %470, %471 : vector<1x3xf32>
    %473 = arith.negf %472 : vector<1x3xf32>
    %474 = math.exp %473 : vector<1x3xf32>
    %cst_274 = arith.constant 1.000000e+00 : f32
    %475 = vector.broadcast %cst_274 : f32 to vector<1x3xf32>
    %476 = arith.addf %475, %474 : vector<1x3xf32>
    %477 = arith.divf %475, %476 : vector<1x3xf32>
    %478 = arith.mulf %472, %477 : vector<1x3xf32>
    %c0_275 = arith.constant 0 : index
    %c0_276 = arith.constant 0 : index
    %479 = vector.load %arg10[%c0_275, %c0_276] : memref<3x12xf32, #tpu.memory_space<vmem>>, vector<3x12xf32>
    %cst_277 = arith.constant dense<0.000000e+00> : vector<1x12xf32>
    %480 = tpu.matmul %478, %479, %cst_277 {dimension_numbers = #tpu.dot_dimension_numbers<[1], [0], [0], [1], [0, 0, 1, 1], [], []>} : vector<1x3xf32>, vector<3x12xf32>, vector<1x12xf32> -> vector<1x12xf32>
    %481 = vector.shape_cast %458 : vector<12xf32> to vector<1x12xf32>
    %482 = arith.addf %480, %481 : vector<1x12xf32>
    %483 = arith.negf %482 : vector<1x12xf32>
    %484 = math.exp %483 : vector<1x12xf32>
    %cst_278 = arith.constant 1.000000e+00 : f32
    %485 = vector.broadcast %cst_278 : f32 to vector<1x12xf32>
    %486 = arith.addf %485, %484 : vector<1x12xf32>
    %487 = arith.divf %485, %486 : vector<1x12xf32>
    %488 = arith.mulf %453, %487 : vector<1x12xf32>
    %c0_279 = arith.constant 0 : index
    %c0_280 = arith.constant 0 : index
    %489 = vector.load %arg11[%c0_279, %c0_280] : memref<12x12xf32, #tpu.memory_space<vmem>>, vector<12x12xf32>
    %cst_281 = arith.constant dense<0.000000e+00> : vector<1x12xf32>
    %490 = tpu.matmul %488, %489, %cst_281 {dimension_numbers = #tpu.dot_dimension_numbers<[1], [0], [0], [1], [0, 0, 1, 1], [], []>} : vector<1x12xf32>, vector<12x12xf32>, vector<1x12xf32> -> vector<1x12xf32>
    %491 = vector.shape_cast %460 : vector<12xf32> to vector<1x12xf32>
    %492 = arith.mulf %490, %491 : vector<1x12xf32>
    %493 = vector.shape_cast %462 : vector<12xf32> to vector<1x12xf32>
    %494 = arith.addf %492, %493 : vector<1x12xf32>
    %495 = arith.addf %494, %228 : vector<1x12xf32>
    %c0_282 = arith.constant 0 : index
    %c0_283 = arith.constant 0 : index
    %496 = vector.load %arg12[%c0_282, %c0_283] : memref<12x32xf32, #tpu.memory_space<vmem>>, vector<12x32xf32>
    %cst_284 = arith.constant dense<0.000000e+00> : vector<1x32xf32>
    %497 = tpu.matmul %495, %496, %cst_284 {dimension_numbers = #tpu.dot_dimension_numbers<[1], [0], [0], [1], [0, 0, 1, 1], [], []>} : vector<1x12xf32>, vector<12x32xf32>, vector<1x32xf32> -> vector<1x32xf32>
    %498 = vector.shape_cast %464 : vector<32xf32> to vector<1x32xf32>
    %499 = arith.addf %497, %498 : vector<1x32xf32>
    %c0_285 = arith.constant 0 : index
    %c0_286 = arith.constant 0 : index
    %500 = vector.load %arg13[%c0_285, %c0_286] : memref<32x128xf32, #tpu.memory_space<vmem>>, vector<32x128xf32>
    %cst_287 = arith.constant dense<0.000000e+00> : vector<1x128xf32>
    %501 = tpu.matmul %499, %500, %cst_287 {dimension_numbers = #tpu.dot_dimension_numbers<[1], [0], [0], [1], [0, 0, 1, 1], [], []>} : vector<1x32xf32>, vector<32x128xf32>, vector<1x128xf32> -> vector<1x128xf32>
    %502 = vector.shape_cast %466 : vector<128xf32> to vector<1x128xf32>
    %503 = arith.addf %501, %502 : vector<1x128xf32>
    %cst_288 = arith.constant 0.000000e+00 : f32
    %504 = vector.broadcast %cst_288 : f32 to vector<1x128xf32>
    %505 = arith.maximumf %503, %504 : vector<1x128xf32>
    %c0_289 = arith.constant 0 : index
    %c0_290 = arith.constant 0 : index
    %506 = vector.load %arg14[%c0_289, %c0_290] : memref<128x10xf32, #tpu.memory_space<vmem>>, vector<128x10xf32>
    %cst_291 = arith.constant dense<0.000000e+00> : vector<1x10xf32>
    %507 = tpu.matmul %505, %506, %cst_291 {dimension_numbers = #tpu.dot_dimension_numbers<[1], [0], [0], [1], [0, 0, 1, 1], [], []>} : vector<1x128xf32>, vector<128x10xf32>, vector<1x10xf32> -> vector<1x10xf32>
    %508 = vector.shape_cast %468 : vector<10xf32> to vector<1x10xf32>
    %509 = arith.addf %507, %508 : vector<1x10xf32>
    %c0_292 = arith.constant 0 : index
    %c0_293 = arith.constant 0 : index
    %c0_294 = arith.constant 0 : index
    %510 = vector.load %arg16[%c0_292, %c0_293, %c0_294] : memref<1x1x10xf32, #tpu.memory_space<vmem>>, vector<1x1x10xf32>
    %511 = vector.shape_cast %510 : vector<1x1x10xf32> to vector<1x10xf32>
    %512 = vector.shape_cast %509 : vector<1x10xf32> to vector<1x1x10xf32>
    tpu.vector_store %arg16[%c0_292, %c0_293, %c0_294], %512 {strides = array<i32>} : memref<1x1x10xf32, #tpu.memory_space<vmem>>, vector<1x1x10xf32>,
    return
  }
  func.func @transform_0(%arg0: i32) -> (i32, i32, i32, i32) {
    %c0_i32 = arith.constant 0 : i32
    %c0_i32_0 = arith.constant 0 : i32
    %c0_i32_1 = arith.constant 0 : i32
    %c0_i32_2 = arith.constant 0 : i32
    return %arg0, %c0_i32, %c0_i32_0, %c0_i32_1 : i32, i32, i32, i32
  }
  func.func @transform_1(%arg0: i32) -> (i32, i32, i32, i32) {
    %c0_i32 = arith.constant 0 : i32
    %c0_i32_0 = arith.constant 0 : i32
    %c0_i32_1 = arith.constant 0 : i32
    %c0_i32_2 = arith.constant 0 : i32
    return %arg0, %c0_i32, %c0_i32_0, %c0_i32_1 : i32, i32, i32, i32
  }
  func.func @transform_2(%arg0: i32) -> (i32, i32, i32, i32) {
    %c0_i32 = arith.constant 0 : i32
    %c0_i32_0 = arith.constant 0 : i32
    %c0_i32_1 = arith.constant 0 : i32
    %c0_i32_2 = arith.constant 0 : i32
    return %arg0, %c0_i32, %c0_i32_0, %c0_i32_1 : i32, i32, i32, i32
  }
  func.func @transform_3(%arg0: i32) -> (i32, i32) {
    %c0_i32 = arith.constant 0 : i32
    %c0_i32_0 = arith.constant 0 : i32
    %c0_i32_1 = arith.constant 0 : i32
    return %c0_i32, %c0_i32_0 : i32, i32
  }
  func.func @transform_4(%arg0: i32) -> (i32, i32) {
    %c0_i32 = arith.constant 0 : i32
    %c0_i32_0 = arith.constant 0 : i32
    %c0_i32_1 = arith.constant 0 : i32
    return %c0_i32, %c0_i32_0 : i32, i32
  }
  func.func @transform_5(%arg0: i32) -> (i32, i32) {
    %c0_i32 = arith.constant 0 : i32
    %c0_i32_0 = arith.constant 0 : i32
    %c0_i32_1 = arith.constant 0 : i32
    return %c0_i32, %c0_i32_0 : i32, i32
  }
  func.func @transform_6(%arg0: i32) -> (i32, i32) {
    %c0_i32 = arith.constant 0 : i32
    %c0_i32_0 = arith.constant 0 : i32
    %c0_i32_1 = arith.constant 0 : i32
    return %c0_i32, %c0_i32_0 : i32, i32
  }
  func.func @transform_7(%arg0: i32) -> (i32, i32) {
    %c0_i32 = arith.constant 0 : i32
    %c0_i32_0 = arith.constant 0 : i32
    %c0_i32_1 = arith.constant 0 : i32
    return %c0_i32, %c0_i32_0 : i32, i32
  }
  func.func @transform_8(%arg0: i32) -> (i32, i32) {
    %c0_i32 = arith.constant 0 : i32
    %c0_i32_0 = arith.constant 0 : i32
    %c0_i32_1 = arith.constant 0 : i32
    return %c0_i32, %c0_i32_0 : i32, i32
  }
  func.func @transform_9(%arg0: i32) -> (i32, i32) {
    %c0_i32 = arith.constant 0 : i32
    %c0_i32_0 = arith.constant 0 : i32
    %c0_i32_1 = arith.constant 0 : i32
    return %c0_i32, %c0_i32_0 : i32, i32
  }
  func.func @transform_10(%arg0: i32) -> (i32, i32) {
    %c0_i32 = arith.constant 0 : i32
    %c0_i32_0 = arith.constant 0 : i32
    %c0_i32_1 = arith.constant 0 : i32
    return %c0_i32, %c0_i32_0 : i32, i32
  }
  func.func @transform_11(%arg0: i32) -> (i32, i32) {
    %c0_i32 = arith.constant 0 : i32
    %c0_i32_0 = arith.constant 0 : i32
    %c0_i32_1 = arith.constant 0 : i32
    return %c0_i32, %c0_i32_0 : i32, i32
  }
  func.func @transform_12(%arg0: i32) -> (i32, i32) {
    %c0_i32 = arith.constant 0 : i32
    %c0_i32_0 = arith.constant 0 : i32
    %c0_i32_1 = arith.constant 0 : i32
    return %c0_i32, %c0_i32_0 : i32, i32
  }
  func.func @transform_13(%arg0: i32) -> (i32, i32) {
    %c0_i32 = arith.constant 0 : i32
    %c0_i32_0 = arith.constant 0 : i32
    %c0_i32_1 = arith.constant 0 : i32
    return %c0_i32, %c0_i32_0 : i32, i32
  }
  func.func @transform_14(%arg0: i32) -> (i32, i32) {
    %c0_i32 = arith.constant 0 : i32
    %c0_i32_0 = arith.constant 0 : i32
    %c0_i32_1 = arith.constant 0 : i32
    return %c0_i32, %c0_i32_0 : i32, i32
  }
  func.func @transform_15(%arg0: i32) -> (i32, i32, i32) {
    %c0_i32 = arith.constant 0 : i32
    %c0_i32_0 = arith.constant 0 : i32
    %c0_i32_1 = arith.constant 0 : i32
    return %arg0, %c0_i32, %c0_i32_0 : i32, i32, i32
  }
}

</mosaic_0001>

<llo_original>
// kernel: tile.30
$region0: #{tile.30}
  %s0 = inlined_call_operand.vmem [shape: f32[27,10,12], index: 0, kind: input, shape index: {}]
  %s1 = inlined_call_operand.vmem [shape: f32[27,120], index: 1, kind: output, shape index: {}]
  %v2 = vld [vmem:[%s0] sm:$0xff]
  %vm3 = vcmask 220160
  %4 = vst.msk [vmem:[%s1] sm:$0xff] %vm3, %v2
  %s5 = scalar_lea.vmem %s0, 8
  %v6 = vld [vmem:[%s5] sm:$0xf]
  %vm7 = vcmask 220160
  %s8 = scalar_lea.vmem %s1, 8
  %9 = vst.msk [vmem:[%s8] sm:$0xf] %vm7, %v6
  %s10 = scalar_lea.vmem %s0, 16
  %v11 = vld [vmem:[%s10] sm:$0xff]
  %vm12 = vcmask 220160
  %s13 = scalar_lea.vmem %s1, 12
  %14 = vst.msk [vmem:[%s13] sm:$0xff] %vm12, %v11
  %s15 = scalar_lea.vmem %s0, 24
  %v16 = vld [vmem:[%s15] sm:$0xf]
  %vm17 = vcmask 220160
  %s18 = scalar_lea.vmem %s1, 20
  %19 = vst.msk [vmem:[%s18] sm:$0xf] %vm17, %v16
  %s20 = scalar_lea.vmem %s0, 32
  %v21 = vld [vmem:[%s20] sm:$0xff]
  %vm22 = vcmask 220160
  %s23 = scalar_lea.vmem %s1, 24
  %24 = vst.msk [vmem:[%s23] sm:$0xff] %vm22, %v21
  %s25 = scalar_lea.vmem %s0, 40
  %v26 = vld [vmem:[%s25] sm:$0xf]
  %vm27 = vcmask 220160
  %s28 = scalar_lea.vmem %s1, 32
  %29 = vst.msk [vmem:[%s28] sm:$0xf] %vm27, %v26
  %s30 = scalar_lea.vmem %s0, 48
  %v31 = vld [vmem:[%s30] sm:$0xff]
  %vm32 = vcmask 220160
  %s33 = scalar_lea.vmem %s1, 36
  %34 = vst.msk [vmem:[%s33] sm:$0xff] %vm32, %v31
  %s35 = scalar_lea.vmem %s0, 56
  %v36 = vld [vmem:[%s35] sm:$0xf]
  %vm37 = vcmask 220160
  %s38 = scalar_lea.vmem %s1, 44
  %39 = vst.msk [vmem:[%s38] sm:$0xf] %vm37, %v36
  %s40 = scalar_lea.vmem %s0, 64
  %v41 = vld [vmem:[%s40] sm:$0xff]
  %vm42 = vcmask 220160
  %s43 = scalar_lea.vmem %s1, 48
  %44 = vst.msk [vmem:[%s43] sm:$0xff] %vm42, %v41
  %s45 = scalar_lea.vmem %s0, 72
  %v46 = vld [vmem:[%s45] sm:$0xf]
  %vm47 = vcmask 220160
  %s48 = scalar_lea.vmem %s1, 56
  %49 = vst.msk [vmem:[%s48] sm:$0xf] %vm47, %v46
  %s50 = scalar_lea.vmem %s0, 80
  %v51 = vld [vmem:[%s50] sm:$0xff]
  %vm52 = vcmask 220160
  %s53 = scalar_lea.vmem %s1, 60
  %54 = vst.msk [vmem:[%s53] sm:$0xff] %vm52, %v51
  %s55 = scalar_lea.vmem %s0, 88
  %v56 = vld [vmem:[%s55] sm:$0xf]
  %vm57 = vcmask 220160
  %s58 = scalar_lea.vmem %s1, 68
  %59 = vst.msk [vmem:[%s58] sm:$0xf] %vm57, %v56
  %s60 = scalar_lea.vmem %s0, 96
  %v61 = vld [vmem:[%s60] sm:$0xff]
  %vm62 = vcmask 220160
  %s63 = scalar_lea.vmem %s1, 72
  %64 = vst.msk [vmem:[%s63] sm:$0xff] %vm62, %v61
  %s65 = scalar_lea.vmem %s0, 104
  %v66 = vld [vmem:[%s65] sm:$0xf]
  %vm67 = vcmask 220160
  %s68 = scalar_lea.vmem %s1, 80
  %69 = vst.msk [vmem:[%s68] sm:$0xf] %vm67, %v66
  %s70 = scalar_lea.vmem %s0, 112
  %v71 = vld [vmem:[%s70] sm:$0xff]
  %vm72 = vcmask 220160
  %s73 = scalar_lea.vmem %s1, 84
  %74 = vst.msk [vmem:[%s73] sm:$0xff] %vm72, %v71
  %s75 = scalar_lea.vmem %s0, 120
  %v76 = vld [vmem:[%s75] sm:$0xf]
  %vm77 = vcmask 220160
  %s78 = scalar_lea.vmem %s1, 92
  %79 = vst.msk [vmem:[%s78] sm:$0xf] %vm77, %v76
  %s80 = scalar_lea.vmem %s0, 128
  %v81 = vld [vmem:[%s80] sm:$0xff]
  %vm82 = vcmask 220160
  %s83 = scalar_lea.vmem %s1, 96
  %84 = vst.msk [vmem:[%s83] sm:$0xff] %vm82, %v81
  %s85 = scalar_lea.vmem %s0, 136
  %v86 = vld [vmem:[%s85] sm:$0xf]
  %vm87 = vcmask 220160
  %s88 = scalar_lea.vmem %s1, 104
  %89 = vst.msk [vmem:[%s88] sm:$0xf] %vm87, %v86
  %s90 = scalar_lea.vmem %s0, 144
  %v91 = vld [vmem:[%s90] sm:$0xff]
  %vm92 = vcmask 220160
  %s93 = scalar_lea.vmem %s1, 108
  %94 = vst.msk [vmem:[%s93] sm:$0xff] %vm92, %v91
  %s95 = scalar_lea.vmem %s0, 152
  %v96 = vld [vmem:[%s95] sm:$0xf]
  %vm97 = vcmask 220160
  %s98 = scalar_lea.vmem %s1, 116
  %99 = vst.msk [vmem:[%s98] sm:$0xf] %vm97, %v96

// kernel: tile.43
$region0: #{tile.43}
  %s0 = inlined_call_operand.vmem [shape: f32[27,8,12], index: 0, kind: input, shape index: {}]
  %s1 = inlined_call_operand.vmem [shape: f32[27,96], index: 1, kind: output, shape index: {}]
  %v2 = vld [vmem:[%s0] sm:$0xff]
  %vm3 = vcmask 220160
  %4 = vst.msk [vmem:[%s1] sm:$0xff] %vm3, %v2
  %s5 = scalar_lea.vmem %s0, 8
  %v6 = vld [vmem:[%s5] sm:$0xf]
  %vm7 = vcmask 220160
  %s8 = scalar_lea.vmem %s1, 8
  %9 = vst.msk [vmem:[%s8] sm:$0xf] %vm7, %v6
  %s10 = scalar_lea.vmem %s0, 16
  %v11 = vld [vmem:[%s10] sm:$0xff]
  %vm12 = vcmask 220160
  %s13 = scalar_lea.vmem %s1, 12
  %14 = vst.msk [vmem:[%s13] sm:$0xff] %vm12, %v11
  %s15 = scalar_lea.vmem %s0, 24
  %v16 = vld [vmem:[%s15] sm:$0xf]
  %vm17 = vcmask 220160
  %s18 = scalar_lea.vmem %s1, 20
  %19 = vst.msk [vmem:[%s18] sm:$0xf] %vm17, %v16
  %s20 = scalar_lea.vmem %s0, 32
  %v21 = vld [vmem:[%s20] sm:$0xff]
  %vm22 = vcmask 220160
  %s23 = scalar_lea.vmem %s1, 24
  %24 = vst.msk [vmem:[%s23] sm:$0xff] %vm22, %v21
  %s25 = scalar_lea.vmem %s0, 40
  %v26 = vld [vmem:[%s25] sm:$0xf]
  %vm27 = vcmask 220160
  %s28 = scalar_lea.vmem %s1, 32
  %29 = vst.msk [vmem:[%s28] sm:$0xf] %vm27, %v26
  %s30 = scalar_lea.vmem %s0, 48
  %v31 = vld [vmem:[%s30] sm:$0xff]
  %vm32 = vcmask 220160
  %s33 = scalar_lea.vmem %s1, 36
  %34 = vst.msk [vmem:[%s33] sm:$0xff] %vm32, %v31
  %s35 = scalar_lea.vmem %s0, 56
  %v36 = vld [vmem:[%s35] sm:$0xf]
  %vm37 = vcmask 220160
  %s38 = scalar_lea.vmem %s1, 44
  %39 = vst.msk [vmem:[%s38] sm:$0xf] %vm37, %v36
  %s40 = scalar_lea.vmem %s0, 64
  %v41 = vld [vmem:[%s40] sm:$0xff]
  %vm42 = vcmask 220160
  %s43 = scalar_lea.vmem %s1, 48
  %44 = vst.msk [vmem:[%s43] sm:$0xff] %vm42, %v41
  %s45 = scalar_lea.vmem %s0, 72
  %v46 = vld [vmem:[%s45] sm:$0xf]
  %vm47 = vcmask 220160
  %s48 = scalar_lea.vmem %s1, 56
  %49 = vst.msk [vmem:[%s48] sm:$0xf] %vm47, %v46
  %s50 = scalar_lea.vmem %s0, 80
  %v51 = vld [vmem:[%s50] sm:$0xff]
  %vm52 = vcmask 220160
  %s53 = scalar_lea.vmem %s1, 60
  %54 = vst.msk [vmem:[%s53] sm:$0xff] %vm52, %v51
  %s55 = scalar_lea.vmem %s0, 88
  %v56 = vld [vmem:[%s55] sm:$0xf]
  %vm57 = vcmask 220160
  %s58 = scalar_lea.vmem %s1, 68
  %59 = vst.msk [vmem:[%s58] sm:$0xf] %vm57, %v56
  %s60 = scalar_lea.vmem %s0, 96
  %v61 = vld [vmem:[%s60] sm:$0xff]
  %vm62 = vcmask 220160
  %s63 = scalar_lea.vmem %s1, 72
  %64 = vst.msk [vmem:[%s63] sm:$0xff] %vm62, %v61
  %s65 = scalar_lea.vmem %s0, 104
  %v66 = vld [vmem:[%s65] sm:$0xf]
  %vm67 = vcmask 220160
  %s68 = scalar_lea.vmem %s1, 80
  %69 = vst.msk [vmem:[%s68] sm:$0xf] %vm67, %v66
  %s70 = scalar_lea.vmem %s0, 112
  %v71 = vld [vmem:[%s70] sm:$0xff]
  %vm72 = vcmask 220160
  %s73 = scalar_lea.vmem %s1, 84
  %74 = vst.msk [vmem:[%s73] sm:$0xff] %vm72, %v71
  %s75 = scalar_lea.vmem %s0, 120
  %v76 = vld [vmem:[%s75] sm:$0xf]
  %vm77 = vcmask 220160
  %s78 = scalar_lea.vmem %s1, 92
  %79 = vst.msk [vmem:[%s78] sm:$0xf] %vm77, %v76

// kernel: pomen_forward.1
$region0: #{pomen_forward.1}
  #allocation0 [shape = 'u32[]', space=smem, size = 0x4, offset = 0x4, fixed_abs, tag = 'smem constant byte address 0x4 - core index']
  #allocation1 [shape = 'u32[144,128]{1,0:T(1,128)}', space=vmem, size = 0x12000, scoped, tag = 'internal scratch']
  #allocation2 [shape = 'f32[1,10,10,96]{3,2,1,0:T(8,128)}', space=vmem, size = 0x14000, scoped, tag = 'scratch operand']
  #allocation3 [shape = 'f32[1,10,10,96]{3,2,1,0:T(8,128)}', space=vmem, size = 0x14000, scoped, tag = 'scratch operand']
  #allocation4 [shape = 'f32[1,10,10,96]{3,2,1,0:T(8,128)}', space=vmem, size = 0x14000, scoped, tag = 'scratch operand']
  %s0 = inlined_call_operand.vmem [shape: f32[2,10,12,120], index: 0, kind: input, shape index: {}]
  %s1 = inlined_call_operand.vmem [shape: f32[2,10,12,120], index: 1, kind: input, shape index: {}]
  %s2 = inlined_call_operand.vmem [shape: f32[2,10,12,120], index: 2, kind: input, shape index: {}]
  %s3 = inlined_call_operand.vmem [shape: f32[27,120], index: 3, kind: input, shape index: {}]
  %s4 = inlined_call_operand.vmem [shape: f32[2,120], index: 4, kind: input, shape index: {}]
  %s5 = inlined_call_operand.vmem [shape: f32[27,96], index: 5, kind: input, shape index: {}]
  %s6 = inlined_call_operand.vmem [shape: f32[2,96], index: 6, kind: input, shape index: {}]
  %s7 = inlined_call_operand.vmem [shape: f32[120,12], index: 7, kind: input, shape index: {}]
  %s8 = inlined_call_operand.vmem [shape: f32[12,3], index: 8, kind: input, shape index: {}]
  %s9 = inlined_call_operand.vmem [shape: f32[3,12], index: 9, kind: input, shape index: {}]
  %s10 = inlined_call_operand.vmem [shape: f32[12,12], index: 10, kind: input, shape index: {}]
  %s11 = inlined_call_operand.vmem [shape: f32[12,32], index: 11, kind: input, shape index: {}]
  %s12 = inlined_call_operand.vmem [shape: f32[32,128], index: 12, kind: input, shape index: {}]
  %s13 = inlined_call_operand.vmem [shape: f32[128,10], index: 13, kind: input, shape index: {}]
  %s14 = inlined_call_operand.vmem [shape: f32[8,128], index: 14, kind: input, shape index: {}]
  %s15 = inlined_call_operand.hbm [shape: f32[2,1,10], index: 15, kind: output, shape index: {}]
  %s16 = sld [smem:[#allocation0]]
  $region93: #{pomen_forward.1} parent=0
    _
  %s18 = ssub.s32 1, %s16
  %s19 = scalar_select 0, %s18, %s16
  $region1: #{pomen_forward.1} parent=0
    #allocation5 [shape = 'u8[1024]{0}', space=vmem, size = 0x400, scoped, tag = 'output window, operand 0']
    #allocation6 [shape = 's32[2]{0}', space=sflag, size = 0x8, scoped, tag = 'scoped memory for pomen_forward.1']
    %20 = vsyncpa [#allocation6], 0
    %s21 = scalar_lea.sflag [#allocation6], 1
    %22 = vsyncpa %s21, 0
    loop: start=0, step=1, limit=4
    $region2: #{pomen_forward.1} parent=1 // loop_pre_header
      _
    $region3: #{pomen_forward.1} parent=1 // loop_header
      %s24 = sphi 0, %s28
      %p25 = scmp.ge.s32.totalorder %s24, 4
      %s34 = sphi 0, %s36
      %s37 = sphi 0, %s34
      %s38 = sphi 0, %s37
      %s54 = sphi 0, %s38
      %s60 = sphi 0, %s62
      %s63 = sphi 0, %s60
      %s64 = sphi 0, %s63
      %s80 = sphi 0, %s64
      %s86 = sphi 0, %s88
      %s89 = sphi 0, %s86
      %s90 = sphi 0, %s89
      %s106 = sphi 0, %s90
      %s110 = sphi 0, %s110
      %s112 = sphi 0, %s110
      %s113 = sphi 0, %s112
      %s127 = sphi 0, %s113
      %s131 = sphi 0, %s131
      %s133 = sphi 0, %s131
      %s134 = sphi 0, %s133
      %s148 = sphi 0, %s134
      %s152 = sphi 0, %s152
      %s154 = sphi 0, %s152
      %s155 = sphi 0, %s154
      %s169 = sphi 0, %s155
      %s173 = sphi 0, %s173
      %s175 = sphi 0, %s173
      %s176 = sphi 0, %s175
      %s190 = sphi 0, %s176
      %s194 = sphi 0, %s194
      %s196 = sphi 0, %s194
      %s197 = sphi 0, %s196
      %s211 = sphi 0, %s197
      %s215 = sphi 0, %s215
      %s217 = sphi 0, %s215
      %s218 = sphi 0, %s217
      %s232 = sphi 0, %s218
      %s236 = sphi 0, %s236
      %s238 = sphi 0, %s236
      %s239 = sphi 0, %s238
      %s253 = sphi 0, %s239
      %s257 = sphi 0, %s257
      %s259 = sphi 0, %s257
      %s260 = sphi 0, %s259
      %s274 = sphi 0, %s260
      %s278 = sphi 0, %s278
      %s280 = sphi 0, %s278
      %s281 = sphi 0, %s280
      %s295 = sphi 0, %s281
      %s299 = sphi 0, %s299
      %s301 = sphi 0, %s299
      %s302 = sphi 0, %s301
      %s316 = sphi 0, %s302
      %s320 = sphi 0, %s320
      %s322 = sphi 0, %s320
      %s323 = sphi 0, %s322
      %s337 = sphi 0, %s323
      %s341 = sphi 0, %s341
      %s343 = sphi 0, %s341
      %s344 = sphi 0, %s343
      %s358 = sphi 0, %s344
      %s364 = sphi 0, %s366
      %s367 = sphi 0, %s364
      %s368 = sphi 0, %s367
      %s384 = sphi 0, %s368
    $region4: #{pomen_forward.1} parent=1 // loop_header_branch
      %27 = sbr.rel (%p25) target = $region8
    $region5: #{pomen_forward.1} parent=1 // loop_body
      %s29 = ssub.s32 %s24, 1
      %s30 = ssub.s32 %s24, 2
      %s31 = sadd.s32 %s24, 1
      %s32 = ssub.s32 %s24, %s31
      %p33 = scmp.eq.s32.totalorder %s32, 0
      %s35 = sadd.s32 %s34, 1
      %s36 = scalar_select %p33, %s34, %s35
      %p39 = pneg %p33
      %p40 = scmp.eq.s32.totalorder %s24, 1
      %p41 = por %p39, %p40
      %p42 = scmp.ne.s32.totalorder %s34, %s37
      %p43 = scmp.eq.s32.totalorder %s24, 0
      %p44 = por %p42, %p43
      %p45 = scmp.ne.s32.totalorder %s34, %s37
      %p46 = scmp.eq.s32.totalorder %s29, 1
      %p47 = por %p45, %p46
      %p48 = scmp.ne.s32.totalorder %s37, %s38
      %p49 = scmp.eq.s32.totalorder %s29, 0
      %p50 = por %p48, %p49
      %p51 = scmp.ne.s32.totalorder %s37, %s38
      %p52 = scmp.eq.s32.totalorder %s30, 1
      %p53 = por %p51, %p52
      %p55 = scmp.ne.s32.totalorder %s38, %s54
      %p56 = scmp.eq.s32.totalorder %s30, 0
      %p57 = por %p55, %p56
      %s58 = ssub.s32 %s24, %s31
      %p59 = scmp.eq.s32.totalorder %s58, 0
      %s61 = sadd.s32 %s60, 1
      %s62 = scalar_select %p59, %s60, %s61
      %p65 = pneg %p59
      %p66 = scmp.eq.s32.totalorder %s24, 1
      %p67 = por %p65, %p66
      %p68 = scmp.ne.s32.totalorder %s60, %s63
      %p69 = scmp.eq.s32.totalorder %s24, 0
      %p70 = por %p68, %p69
      %p71 = scmp.ne.s32.totalorder %s60, %s63
      %p72 = scmp.eq.s32.totalorder %s29, 1
      %p73 = por %p71, %p72
      %p74 = scmp.ne.s32.totalorder %s63, %s64
      %p75 = scmp.eq.s32.totalorder %s29, 0
      %p76 = por %p74, %p75
      %p77 = scmp.ne.s32.totalorder %s63, %s64
      %p78 = scmp.eq.s32.totalorder %s30, 1
      %p79 = por %p77, %p78
      %p81 = scmp.ne.s32.totalorder %s64, %s80
      %p82 = scmp.eq.s32.totalorder %s30, 0
      %p83 = por %p81, %p82
      %s84 = ssub.s32 %s24, %s31
      %p85 = scmp.eq.s32.totalorder %s84, 0
      %s87 = sadd.s32 %s86, 1
      %s88 = scalar_select %p85, %s86, %s87
      %p91 = pneg %p85
      %p92 = scmp.eq.s32.totalorder %s24, 1
      %p93 = por %p91, %p92
      %p94 = scmp.ne.s32.totalorder %s86, %s89
      %p95 = scmp.eq.s32.totalorder %s24, 0
      %p96 = por %p94, %p95
      %p97 = scmp.ne.s32.totalorder %s86, %s89
      %p98 = scmp.eq.s32.totalorder %s29, 1
      %p99 = por %p97, %p98
      %p100 = scmp.ne.s32.totalorder %s89, %s90
      %p101 = scmp.eq.s32.totalorder %s29, 0
      %p102 = por %p100, %p101
      %p103 = scmp.ne.s32.totalorder %s89, %s90
      %p104 = scmp.eq.s32.totalorder %s30, 1
      %p105 = por %p103, %p104
      %p107 = scmp.ne.s32.totalorder %s90, %s106
      %p108 = scmp.eq.s32.totalorder %s30, 0
      %p109 = por %p107, %p108
      %s111 = sadd.s32 %s110, 1
      %p114 = scmp.eq.s32.totalorder %s24, 1
      %p115 = scmp.ne.s32.totalorder %s110, %s112
      %p116 = scmp.eq.s32.totalorder %s24, 0
      %p117 = por %p115, %p116
      %p118 = scmp.ne.s32.totalorder %s110, %s112
      %p119 = scmp.eq.s32.totalorder %s29, 1
      %p120 = por %p118, %p119
      %p121 = scmp.ne.s32.totalorder %s112, %s113
      %p122 = scmp.eq.s32.totalorder %s29, 0
      %p123 = por %p121, %p122
      %p124 = scmp.ne.s32.totalorder %s112, %s113
      %p125 = scmp.eq.s32.totalorder %s30, 1
      %p126 = por %p124, %p125
      %p128 = scmp.ne.s32.totalorder %s113, %s127
      %p129 = scmp.eq.s32.totalorder %s30, 0
      %p130 = por %p128, %p129
      %s132 = sadd.s32 %s131, 1
      %p135 = scmp.eq.s32.totalorder %s24, 1
      %p136 = scmp.ne.s32.totalorder %s131, %s133
      %p137 = scmp.eq.s32.totalorder %s24, 0
      %p138 = por %p136, %p137
      %p139 = scmp.ne.s32.totalorder %s131, %s133
      %p140 = scmp.eq.s32.totalorder %s29, 1
      %p141 = por %p139, %p140
      %p142 = scmp.ne.s32.totalorder %s133, %s134
      %p143 = scmp.eq.s32.totalorder %s29, 0
      %p144 = por %p142, %p143
      %p145 = scmp.ne.s32.totalorder %s133, %s134
      %p146 = scmp.eq.s32.totalorder %s30, 1
      %p147 = por %p145, %p146
      %p149 = scmp.ne.s32.totalorder %s134, %s148
      %p150 = scmp.eq.s32.totalorder %s30, 0
      %p151 = por %p149, %p150
      %s153 = sadd.s32 %s152, 1
      %p156 = scmp.eq.s32.totalorder %s24, 1
      %p157 = scmp.ne.s32.totalorder %s152, %s154
      %p158 = scmp.eq.s32.totalorder %s24, 0
      %p159 = por %p157, %p158
      %p160 = scmp.ne.s32.totalorder %s152, %s154
      %p161 = scmp.eq.s32.totalorder %s29, 1
      %p162 = por %p160, %p161
      %p163 = scmp.ne.s32.totalorder %s154, %s155
      %p164 = scmp.eq.s32.totalorder %s29, 0
      %p165 = por %p163, %p164
      %p166 = scmp.ne.s32.totalorder %s154, %s155
      %p167 = scmp.eq.s32.totalorder %s30, 1
      %p168 = por %p166, %p167
      %p170 = scmp.ne.s32.totalorder %s155, %s169
      %p171 = scmp.eq.s32.totalorder %s30, 0
      %p172 = por %p170, %p171
      %s174 = sadd.s32 %s173, 1
      %p177 = scmp.eq.s32.totalorder %s24, 1
      %p178 = scmp.ne.s32.totalorder %s173, %s175
      %p179 = scmp.eq.s32.totalorder %s24, 0
      %p180 = por %p178, %p179
      %p181 = scmp.ne.s32.totalorder %s173, %s175
      %p182 = scmp.eq.s32.totalorder %s29, 1
      %p183 = por %p181, %p182
      %p184 = scmp.ne.s32.totalorder %s175, %s176
      %p185 = scmp.eq.s32.totalorder %s29, 0
      %p186 = por %p184, %p185
      %p187 = scmp.ne.s32.totalorder %s175, %s176
      %p188 = scmp.eq.s32.totalorder %s30, 1
      %p189 = por %p187, %p188
      %p191 = scmp.ne.s32.totalorder %s176, %s190
      %p192 = scmp.eq.s32.totalorder %s30, 0
      %p193 = por %p191, %p192
      %s195 = sadd.s32 %s194, 1
      %p198 = scmp.eq.s32.totalorder %s24, 1
      %p199 = scmp.ne.s32.totalorder %s194, %s196
      %p200 = scmp.eq.s32.totalorder %s24, 0
      %p201 = por %p199, %p200
      %p202 = scmp.ne.s32.totalorder %s194, %s196
      %p203 = scmp.eq.s32.totalorder %s29, 1
      %p204 = por %p202, %p203
      %p205 = scmp.ne.s32.totalorder %s196, %s197
      %p206 = scmp.eq.s32.totalorder %s29, 0
      %p207 = por %p205, %p206
      %p208 = scmp.ne.s32.totalorder %s196, %s197
      %p209 = scmp.eq.s32.totalorder %s30, 1
      %p210 = por %p208, %p209
      %p212 = scmp.ne.s32.totalorder %s197, %s211
      %p213 = scmp.eq.s32.totalorder %s30, 0
      %p214 = por %p212, %p213
      %s216 = sadd.s32 %s215, 1
      %p219 = scmp.eq.s32.totalorder %s24, 1
      %p220 = scmp.ne.s32.totalorder %s215, %s217
      %p221 = scmp.eq.s32.totalorder %s24, 0
      %p222 = por %p220, %p221
      %p223 = scmp.ne.s32.totalorder %s215, %s217
      %p224 = scmp.eq.s32.totalorder %s29, 1
      %p225 = por %p223, %p224
      %p226 = scmp.ne.s32.totalorder %s217, %s218
      %p227 = scmp.eq.s32.totalorder %s29, 0
      %p228 = por %p226, %p227
      %p229 = scmp.ne.s32.totalorder %s217, %s218
      %p230 = scmp.eq.s32.totalorder %s30, 1
      %p231 = por %p229, %p230
      %p233 = scmp.ne.s32.totalorder %s218, %s232
      %p234 = scmp.eq.s32.totalorder %s30, 0
      %p235 = por %p233, %p234
      %s237 = sadd.s32 %s236, 1
      %p240 = scmp.eq.s32.totalorder %s24, 1
      %p241 = scmp.ne.s32.totalorder %s236, %s238
      %p242 = scmp.eq.s32.totalorder %s24, 0
      %p243 = por %p241, %p242
      %p244 = scmp.ne.s32.totalorder %s236, %s238
      %p245 = scmp.eq.s32.totalorder %s29, 1
      %p246 = por %p244, %p245
      %p247 = scmp.ne.s32.totalorder %s238, %s239
      %p248 = scmp.eq.s32.totalorder %s29, 0
      %p249 = por %p247, %p248
      %p250 = scmp.ne.s32.totalorder %s238, %s239
      %p251 = scmp.eq.s32.totalorder %s30, 1
      %p252 = por %p250, %p251
      %p254 = scmp.ne.s32.totalorder %s239, %s253
      %p255 = scmp.eq.s32.totalorder %s30, 0
      %p256 = por %p254, %p255
      %s258 = sadd.s32 %s257, 1
      %p261 = scmp.eq.s32.totalorder %s24, 1
      %p262 = scmp.ne.s32.totalorder %s257, %s259
      %p263 = scmp.eq.s32.totalorder %s24, 0
      %p264 = por %p262, %p263
      %p265 = scmp.ne.s32.totalorder %s257, %s259
      %p266 = scmp.eq.s32.totalorder %s29, 1
      %p267 = por %p265, %p266
      %p268 = scmp.ne.s32.totalorder %s259, %s260
      %p269 = scmp.eq.s32.totalorder %s29, 0
      %p270 = por %p268, %p269
      %p271 = scmp.ne.s32.totalorder %s259, %s260
      %p272 = scmp.eq.s32.totalorder %s30, 1
      %p273 = por %p271, %p272
      %p275 = scmp.ne.s32.totalorder %s260, %s274
      %p276 = scmp.eq.s32.totalorder %s30, 0
      %p277 = por %p275, %p276
      %s279 = sadd.s32 %s278, 1
      %p282 = scmp.eq.s32.totalorder %s24, 1
      %p283 = scmp.ne.s32.totalorder %s278, %s280
      %p284 = scmp.eq.s32.totalorder %s24, 0
      %p285 = por %p283, %p284
      %p286 = scmp.ne.s32.totalorder %s278, %s280
      %p287 = scmp.eq.s32.totalorder %s29, 1
      %p288 = por %p286, %p287
      %p289 = scmp.ne.s32.totalorder %s280, %s281
      %p290 = scmp.eq.s32.totalorder %s29, 0
      %p291 = por %p289, %p290
      %p292 = scmp.ne.s32.totalorder %s280, %s281
      %p293 = scmp.eq.s32.totalorder %s30, 1
      %p294 = por %p292, %p293
      %p296 = scmp.ne.s32.totalorder %s281, %s295
      %p297 = scmp.eq.s32.totalorder %s30, 0
      %p298 = por %p296, %p297
      %s300 = sadd.s32 %s299, 1
      %p303 = scmp.eq.s32.totalorder %s24, 1
      %p304 = scmp.ne.s32.totalorder %s299, %s301
      %p305 = scmp.eq.s32.totalorder %s24, 0
      %p306 = por %p304, %p305
      %p307 = scmp.ne.s32.totalorder %s299, %s301
      %p308 = scmp.eq.s32.totalorder %s29, 1
      %p309 = por %p307, %p308
      %p310 = scmp.ne.s32.totalorder %s301, %s302
      %p311 = scmp.eq.s32.totalorder %s29, 0
      %p312 = por %p310, %p311
      %p313 = scmp.ne.s32.totalorder %s301, %s302
      %p314 = scmp.eq.s32.totalorder %s30, 1
      %p315 = por %p313, %p314
      %p317 = scmp.ne.s32.totalorder %s302, %s316
      %p318 = scmp.eq.s32.totalorder %s30, 0
      %p319 = por %p317, %p318
      %s321 = sadd.s32 %s320, 1
      %p324 = scmp.eq.s32.totalorder %s24, 1
      %p325 = scmp.ne.s32.totalorder %s320, %s322
      %p326 = scmp.eq.s32.totalorder %s24, 0
      %p327 = por %p325, %p326
      %p328 = scmp.ne.s32.totalorder %s320, %s322
      %p329 = scmp.eq.s32.totalorder %s29, 1
      %p330 = por %p328, %p329
      %p331 = scmp.ne.s32.totalorder %s322, %s323
      %p332 = scmp.eq.s32.totalorder %s29, 0
      %p333 = por %p331, %p332
      %p334 = scmp.ne.s32.totalorder %s322, %s323
      %p335 = scmp.eq.s32.totalorder %s30, 1
      %p336 = por %p334, %p335
      %p338 = scmp.ne.s32.totalorder %s323, %s337
      %p339 = scmp.eq.s32.totalorder %s30, 0
      %p340 = por %p338, %p339
      %s342 = sadd.s32 %s341, 1
      %p345 = scmp.eq.s32.totalorder %s24, 1
      %p346 = scmp.ne.s32.totalorder %s341, %s343
      %p347 = scmp.eq.s32.totalorder %s24, 0
      %p348 = por %p346, %p347
      %p349 = scmp.ne.s32.totalorder %s341, %s343
      %p350 = scmp.eq.s32.totalorder %s29, 1
      %p351 = por %p349, %p350
      %p352 = scmp.ne.s32.totalorder %s343, %s344
      %p353 = scmp.eq.s32.totalorder %s29, 0
      %p354 = por %p352, %p353
      %p355 = scmp.ne.s32.totalorder %s343, %s344
      %p356 = scmp.eq.s32.totalorder %s30, 1
      %p357 = por %p355, %p356
      %p359 = scmp.ne.s32.totalorder %s344, %s358
      %p360 = scmp.eq.s32.totalorder %s30, 0
      %p361 = por %p359, %p360
      %s362 = ssub.s32 %s24, %s31
      %p363 = scmp.eq.s32.totalorder %s362, 0
      %s365 = sadd.s32 %s364, 1
      %s366 = scalar_select %p363, %s364, %s365
      %p369 = pneg %p363
      %p370 = scmp.eq.s32.totalorder %s24, 1
      %p371 = por %p369, %p370
      %p372 = scmp.ne.s32.totalorder %s364, %s367
      %p373 = scmp.eq.s32.totalorder %s24, 0
      %p374 = por %p372, %p373
      %p375 = scmp.ne.s32.totalorder %s364, %s367
      %p376 = scmp.eq.s32.totalorder %s29, 1
      %p377 = por %p375, %p376
      %p378 = scmp.ne.s32.totalorder %s367, %s368
      %p379 = scmp.eq.s32.totalorder %s29, 0
      %p380 = por %p378, %p379
      %p381 = scmp.ne.s32.totalorder %s367, %s368
      %p382 = scmp.eq.s32.totalorder %s30, 1
      %p383 = por %p381, %p382
      %p385 = scmp.ne.s32.totalorder %s368, %s384
      %p386 = scmp.eq.s32.totalorder %s30, 0
      %p387 = por %p385, %p386
      %p388 = scmp.le.s32.totalorder 1, %s24
      %p389 = scmp.lt.s32.totalorder %s24, 3
      %p390 = pnand %p388, %p389
      %p391 = pneg %p390
      // Predicated region
      $region9: #{pomen_forward.1} parent=5 // pred_check
        _
      $region10: #{pomen_forward.1} parent=5 // pred_check_branch
        %393 = sbr.rel (%p390) target = $region12
      $region11: #{pomen_forward.1} parent=5 // pred_region
        %s394 = ssub.s32 %s24, 1
        // Predicated region
        $region13: #{pomen_forward.1} parent=11 // pred_check
          %p395 = pneg %p123
        $region14: #{pomen_forward.1} parent=11 // pred_check_branch
          %397 = sbr.rel (%p395) target = $region16
        $region15: #{pomen_forward.1} parent=11 // pred_region
          _
        $region16: #{pomen_forward.1} parent=11 // pred_fallthru
          _
        // Predicated region
        $region17: #{pomen_forward.1} parent=11 // pred_check
          %p398 = pneg %p144
        $region18: #{pomen_forward.1} parent=11 // pred_check_branch
          %400 = sbr.rel (%p398) target = $region20
        $region19: #{pomen_forward.1} parent=11 // pred_region
          _
        $region20: #{pomen_forward.1} parent=11 // pred_fallthru
          _
        // Predicated region
        $region21: #{pomen_forward.1} parent=11 // pred_check
          %p401 = pneg %p165
        $region22: #{pomen_forward.1} parent=11 // pred_check_branch
          %403 = sbr.rel (%p401) target = $region24
        $region23: #{pomen_forward.1} parent=11 // pred_region
          _
        $region24: #{pomen_forward.1} parent=11 // pred_fallthru
          _
        // Predicated region
        $region25: #{pomen_forward.1} parent=11 // pred_check
          %p404 = pneg %p186
        $region26: #{pomen_forward.1} parent=11 // pred_check_branch
          %406 = sbr.rel (%p404) target = $region28
        $region27: #{pomen_forward.1} parent=11 // pred_region
          _
        $region28: #{pomen_forward.1} parent=11 // pred_fallthru
          _
        // Predicated region
        $region29: #{pomen_forward.1} parent=11 // pred_check
          %p407 = pneg %p207
        $region30: #{pomen_forward.1} parent=11 // pred_check_branch
          %409 = sbr.rel (%p407) target = $region32
        $region31: #{pomen_forward.1} parent=11 // pred_region
          _
        $region32: #{pomen_forward.1} parent=11 // pred_fallthru
          _
        // Predicated region
        $region33: #{pomen_forward.1} parent=11 // pred_check
          %p410 = pneg %p228
        $region34: #{pomen_forward.1} parent=11 // pred_check_branch
          %412 = sbr.rel (%p410) target = $region36
        $region35: #{pomen_forward.1} parent=11 // pred_region
          _
        $region36: #{pomen_forward.1} parent=11 // pred_fallthru
          _
        // Predicated region
        $region37: #{pomen_forward.1} parent=11 // pred_check
          %p413 = pneg %p249
        $region38: #{pomen_forward.1} parent=11 // pred_check_branch
          %415 = sbr.rel (%p413) target = $region40
        $region39: #{pomen_forward.1} parent=11 // pred_region
          _
        $region40: #{pomen_forward.1} parent=11 // pred_fallthru
          _
        // Predicated region
        $region41: #{pomen_forward.1} parent=11 // pred_check
          %p416 = pneg %p270
        $region42: #{pomen_forward.1} parent=11 // pred_check_branch
          %418 = sbr.rel (%p416) target = $region44
        $region43: #{pomen_forward.1} parent=11 // pred_region
          _
        $region44: #{pomen_forward.1} parent=11 // pred_fallthru
          _
        // Predicated region
        $region45: #{pomen_forward.1} parent=11 // pred_check
          %p419 = pneg %p291
        $region46: #{pomen_forward.1} parent=11 // pred_check_branch
          %421 = sbr.rel (%p419) target = $region48
        $region47: #{pomen_forward.1} parent=11 // pred_region
          _
        $region48: #{pomen_forward.1} parent=11 // pred_fallthru
          _
        // Predicated region
        $region49: #{pomen_forward.1} parent=11 // pred_check
          %p422 = pneg %p312
        $region50: #{pomen_forward.1} parent=11 // pred_check_branch
          %424 = sbr.rel (%p422) target = $region52
        $region51: #{pomen_forward.1} parent=11 // pred_region
          _
        $region52: #{pomen_forward.1} parent=11 // pred_fallthru
          _
        // Predicated region
        $region53: #{pomen_forward.1} parent=11 // pred_check
          %p425 = pneg %p333
        $region54: #{pomen_forward.1} parent=11 // pred_check_branch
          %427 = sbr.rel (%p425) target = $region56
        $region55: #{pomen_forward.1} parent=11 // pred_region
          _
        $region56: #{pomen_forward.1} parent=11 // pred_fallthru
          _
        // Predicated region
        $region57: #{pomen_forward.1} parent=11 // pred_check
          %p428 = pneg %p354
        $region58: #{pomen_forward.1} parent=11 // pred_check_branch
          %430 = sbr.rel (%p428) target = $region60
        $region59: #{pomen_forward.1} parent=11 // pred_region
          _
        $region60: #{pomen_forward.1} parent=11 // pred_fallthru
          _
      $region12: #{pomen_forward.1} parent=5 // pred_fallthru
        _
      %p431 = scmp.lt.s32.totalorder %s24, 2
      // Predicated region
      $region61: #{pomen_forward.1} parent=5 // pred_check
        %p432 = pneg %p431
      $region62: #{pomen_forward.1} parent=5 // pred_check_branch
        %434 = sbr.rel (%p432) target = $region64
      $region63: #{pomen_forward.1} parent=5 // pred_region
        // Predicated region
        $region65: #{pomen_forward.1} parent=63 // pred_check
          %p435 = pneg %p44
        $region66: #{pomen_forward.1} parent=63 // pred_check_branch
          %437 = sbr.rel (%p435) target = $region68
        $region67: #{pomen_forward.1} parent=63 // pred_region
          %p438 = scmp.lt.s32.totalorder %s24, 1
          %s439 = scalar_select %p438, %s24, 1
          %s440 = smul.addr %s439, 20
          %s441 = smul.addr %s440, 8
          %s442 = scalar_lea.vmem %s0, %s441
        $region68: #{pomen_forward.1} parent=63 // pred_fallthru
          _
        // Predicated region
        $region69: #{pomen_forward.1} parent=63 // pred_check
          %p443 = pneg %p70
        $region70: #{pomen_forward.1} parent=63 // pred_check_branch
          %445 = sbr.rel (%p443) target = $region72
        $region71: #{pomen_forward.1} parent=63 // pred_region
          %p446 = scmp.lt.s32.totalorder %s24, 1
          %s447 = scalar_select %p446, %s24, 1
          %s448 = smul.addr %s447, 20
          %s449 = smul.addr %s448, 8
          %s450 = scalar_lea.vmem %s1, %s449
        $region72: #{pomen_forward.1} parent=63 // pred_fallthru
          _
        // Predicated region
        $region73: #{pomen_forward.1} parent=63 // pred_check
          %p451 = pneg %p96
        $region74: #{pomen_forward.1} parent=63 // pred_check_branch
          %453 = sbr.rel (%p451) target = $region76
        $region75: #{pomen_forward.1} parent=63 // pred_region
          %p454 = scmp.lt.s32.totalorder %s24, 1
          %s455 = scalar_select %p454, %s24, 1
          %s456 = smul.addr %s455, 20
          %s457 = smul.addr %s456, 8
          %s458 = scalar_lea.vmem %s2, %s457
        $region76: #{pomen_forward.1} parent=63 // pred_fallthru
          _
      $region64: #{pomen_forward.1} parent=5 // pred_fallthru
        _
      %p459 = scmp.le.s32.totalorder 1, %s24
      %p460 = scmp.lt.s32.totalorder %s24, 3
      %p461 = pnand %p459, %p460
      %p462 = pneg %p461
      // Predicated region
      $region77: #{pomen_forward.1} parent=5 // pred_check
        _
      $region78: #{pomen_forward.1} parent=5 // pred_check_branch
        %464 = sbr.rel (%p461) target = $region80
      $region79: #{pomen_forward.1} parent=5 // pred_region
        %s465 = ssub.s32 %s24, 1
        %p466 = scmp.lt.s32.totalorder %s29, 1
        %s467 = scalar_select %p466, %s29, 1
        %s468 = smul.addr %s467, 20
        %s469 = smul.addr %s468, 8
        %s470 = scalar_lea.vmem %s0, %s469
        %p471 = pneg %p50
        %p472 = pneg %p47
        %p473 = scmp.lt.s32.totalorder %s29, 1
        %s474 = scalar_select %p473, %s29, 1
        %s475 = smul.addr %s474, 20
        %s476 = smul.addr %s475, 8
        %s477 = scalar_lea.vmem %s1, %s476
        %p478 = pneg %p76
        %p479 = pneg %p73
        %p480 = scmp.lt.s32.totalorder %s29, 1
        %s481 = scalar_select %p480, %s29, 1
        %s482 = smul.addr %s481, 20
        %s483 = smul.addr %s482, 8
        %s484 = scalar_lea.vmem %s2, %s483
        %p485 = pneg %p102
        %p486 = pneg %p99
        %p487 = pneg %p123
        %p488 = pneg %p120
        %p489 = pneg %p144
        %p490 = pneg %p141
        %p491 = pneg %p165
        %p492 = pneg %p162
        %p493 = pneg %p186
        %p494 = pneg %p183
        %p495 = pneg %p207
        %p496 = pneg %p204
        %p497 = pneg %p228
        %p498 = pneg %p225
        %p499 = pneg %p249
        %p500 = pneg %p246
        %p501 = pneg %p270
        %p502 = pneg %p267
        %p503 = pneg %p291
        %p504 = pneg %p288
        %p505 = pneg %p312
        %p506 = pneg %p309
        %p507 = pneg %p333
        %p508 = pneg %p330
        %p509 = pneg %p354
        %p510 = pneg %p351
        %p511 = pneg %p380
        %p512 = pneg %p377
        %s513 = sand.u32 %s367, 1
        %s514 = scalar_lea.sflag [#allocation6], %s513
        %s515 = sand.u32 %s367, 1
        %s516 = scalar_lea.vmem [#allocation5], %s515
        %p517 = scmp.lt.s32.totalorder %s29, 1
        %s518 = scalar_select %p517, %s29, 1
        %s519 = smul.addr %s518, 20
        %s520 = smul.addr %s519, 8
        %s521 = scalar_lea.vmem %s0, %s520
        %p522 = scmp.lt.s32.totalorder %s29, 1
        %s523 = scalar_select %p522, %s29, 1
        %s524 = smul.addr %s523, 20
        %s525 = smul.addr %s524, 8
        %s526 = scalar_lea.vmem %s1, %s525
        %p527 = scmp.lt.s32.totalorder %s29, 1
        %s528 = scalar_select %p527, %s29, 1
        %s529 = smul.addr %s528, 20
        %s530 = smul.addr %s529, 8
        %s531 = scalar_lea.vmem %s2, %s530
        %v532 = vld [vmem:[%s3] sm:$0xff]
        %v533 = vld [vmem:[%s3 + $0x8] sm:$0xff]
        %v534 = vld [vmem:[%s3 + $0x10] sm:$0xff]
        %v535 = vld [vmem:[%s3 + $0x18] sm:$0x7]
        %v536 = vld [vmem:[%s521] sm:$0xff]
        %v537 = vld [vmem:[%s521 + $0x8] sm:$0x3]
        %v538 = vld [vmem:[%s521 + $0x10] sm:$0xff]
        %v539 = vld [vmem:[%s521 + $0x18] sm:$0x3]
        %v540 = vld [vmem:[%s521 + $0x20] sm:$0xff]
        %v541 = vld [vmem:[%s521 + $0x28] sm:$0x3]
        %v542 = vld [vmem:[%s521 + $0x30] sm:$0xff]
        %v543 = vld [vmem:[%s521 + $0x38] sm:$0x3]
        %v544 = vld [vmem:[%s521 + $0x40] sm:$0xff]
        %v545 = vld [vmem:[%s521 + $0x48] sm:$0x3]
        %v546 = vld [vmem:[%s521 + $0x50] sm:$0xff]
        %v547 = vld [vmem:[%s521 + $0x58] sm:$0x3]
        %v548 = vld [vmem:[%s521 + $0x60] sm:$0xff]
        %v549 = vld [vmem:[%s521 + $0x68] sm:$0x3]
        %v550 = vld [vmem:[%s521 + $0x70] sm:$0xff]
        %v551 = vld [vmem:[%s521 + $0x78] sm:$0x3]
        %v552 = vlaneseq
        %v553 = vshrl.u32 %v552, 7
        %v554 = vsub.s32 0, %v553
        %v555 = vrot.slane %v532, %v554
        %v556 = vmul.f32 %v536, %v555
        %v557 = vmul.f32 %v537, %v555
        %v558 = vmul.f32 %v538, %v555
        %v559 = vmul.f32 %v539, %v555
        %v560 = vmul.f32 %v540, %v555
        %v561 = vmul.f32 %v541, %v555
        %v562 = vmul.f32 %v542, %v555
        %v563 = vmul.f32 %v543, %v555
        %v564 = vmul.f32 %v544, %v555
        %v565 = vmul.f32 %v545, %v555
        %v566 = vmul.f32 %v546, %v555
        %v567 = vmul.f32 %v547, %v555
        %v568 = vmul.f32 %v548, %v555
        %v569 = vmul.f32 %v549, %v555
        %v570 = vmul.f32 %v550, %v555
        %v571 = vmul.f32 %v551, %v555
        %v572 = vld [vmem:[%s526] sm:$0xff]
        %v573 = vld [vmem:[%s526 + $0x8] sm:$0x3]
        %v574 = vld [vmem:[%s526 + $0x10] sm:$0xff]
        %v575 = vld [vmem:[%s526 + $0x18] sm:$0x3]
        %v576 = vld [vmem:[%s526 + $0x20] sm:$0xff]
        %v577 = vld [vmem:[%s526 + $0x28] sm:$0x3]
        %v578 = vld [vmem:[%s526 + $0x30] sm:$0xff]
        %v579 = vld [vmem:[%s526 + $0x38] sm:$0x3]
        %v580 = vld [vmem:[%s526 + $0x40] sm:$0xff]
        %v581 = vld [vmem:[%s526 + $0x48] sm:$0x3]
        %v582 = vld [vmem:[%s526 + $0x50] sm:$0xff]
        %v583 = vld [vmem:[%s526 + $0x58] sm:$0x3]
        %v584 = vld [vmem:[%s526 + $0x60] sm:$0xff]
        %v585 = vld [vmem:[%s526 + $0x68] sm:$0x3]
        %v586 = vld [vmem:[%s526 + $0x70] sm:$0xff]
        %v587 = vld [vmem:[%s526 + $0x78] sm:$0x3]
        %v588 = vlaneseq
        %v589 = vshrl.u32 %v588, 7
        %v590 = vsub.s32 1, %v589
        %v591 = vrot.slane %v532, %v590
        %v592 = vmul.f32 %v572, %v591
        %v593 = vmul.f32 %v573, %v591
        %v594 = vmul.f32 %v574, %v591
        %v595 = vmul.f32 %v575, %v591
        %v596 = vmul.f32 %v576, %v591
        %v597 = vmul.f32 %v577, %v591
        %v598 = vmul.f32 %v578, %v591
        %v599 = vmul.f32 %v579, %v591
        %v600 = vmul.f32 %v580, %v591
        %v601 = vmul.f32 %v581, %v591
        %v602 = vmul.f32 %v582, %v591
        %v603 = vmul.f32 %v583, %v591
        %v604 = vmul.f32 %v584, %v591
        %v605 = vmul.f32 %v585, %v591
        %v606 = vmul.f32 %v586, %v591
        %v607 = vmul.f32 %v587, %v591
        %v608 = vadd.f32 %v556, %v592
        %v609 = vadd.f32 %v557, %v593
        %v610 = vadd.f32 %v558, %v594
        %v611 = vadd.f32 %v559, %v595
        %v612 = vadd.f32 %v560, %v596
        %v613 = vadd.f32 %v561, %v597
        %v614 = vadd.f32 %v562, %v598
        %v615 = vadd.f32 %v563, %v599
        %v616 = vadd.f32 %v564, %v600
        %v617 = vadd.f32 %v565, %v601
        %v618 = vadd.f32 %v566, %v602
        %v619 = vadd.f32 %v567, %v603
        %v620 = vadd.f32 %v568, %v604
        %v621 = vadd.f32 %v569, %v605
        %v622 = vadd.f32 %v570, %v606
        %v623 = vadd.f32 %v571, %v607
        %v624 = vld [vmem:[%s531] sm:$0xff]
        %v625 = vld [vmem:[%s531 + $0x8] sm:$0x3]
        %v626 = vld [vmem:[%s531 + $0x10] sm:$0xff]
        %v627 = vld [vmem:[%s531 + $0x18] sm:$0x3]
        %v628 = vld [vmem:[%s531 + $0x20] sm:$0xff]
        %v629 = vld [vmem:[%s531 + $0x28] sm:$0x3]
        %v630 = vld [vmem:[%s531 + $0x30] sm:$0xff]
        %v631 = vld [vmem:[%s531 + $0x38] sm:$0x3]
        %v632 = vld [vmem:[%s531 + $0x40] sm:$0xff]
        %v633 = vld [vmem:[%s531 + $0x48] sm:$0x3]
        %v634 = vld [vmem:[%s531 + $0x50] sm:$0xff]
        %v635 = vld [vmem:[%s531 + $0x58] sm:$0x3]
        %v636 = vld [vmem:[%s531 + $0x60] sm:$0xff]
        %v637 = vld [vmem:[%s531 + $0x68] sm:$0x3]
        %v638 = vld [vmem:[%s531 + $0x70] sm:$0xff]
        %v639 = vld [vmem:[%s531 + $0x78] sm:$0x3]
        %v640 = vlaneseq
        %v641 = vshrl.u32 %v640, 7
        %v642 = vsub.s32 2, %v641
        %v643 = vrot.slane %v532, %v642
        %v644 = vmul.f32 %v624, %v643
        %v645 = vmul.f32 %v625, %v643
        %v646 = vmul.f32 %v626, %v643
        %v647 = vmul.f32 %v627, %v643
        %v648 = vmul.f32 %v628, %v643
        %v649 = vmul.f32 %v629, %v643
        %v650 = vmul.f32 %v630, %v643
        %v651 = vmul.f32 %v631, %v643
        %v652 = vmul.f32 %v632, %v643
        %v653 = vmul.f32 %v633, %v643
        %v654 = vmul.f32 %v634, %v643
        %v655 = vmul.f32 %v635, %v643
        %v656 = vmul.f32 %v636, %v643
        %v657 = vmul.f32 %v637, %v643
        %v658 = vmul.f32 %v638, %v643
        %v659 = vmul.f32 %v639, %v643
        %v660 = vadd.f32 %v608, %v644
        %v661 = vadd.f32 %v609, %v645
        %v662 = vadd.f32 %v610, %v646
        %v663 = vadd.f32 %v611, %v647
        %v664 = vadd.f32 %v612, %v648
        %v665 = vadd.f32 %v613, %v649
        %v666 = vadd.f32 %v614, %v650
        %v667 = vadd.f32 %v615, %v651
        %v668 = vadd.f32 %v616, %v652
        %v669 = vadd.f32 %v617, %v653
        %v670 = vadd.f32 %v618, %v654
        %v671 = vadd.f32 %v619, %v655
        %v672 = vadd.f32 %v620, %v656
        %v673 = vadd.f32 %v621, %v657
        %v674 = vadd.f32 %v622, %v658
        %v675 = vadd.f32 %v623, %v659
        %v676 = vld [vmem:[%s521 + $0x1] sm:$0xff]
        %v677 = vld [vmem:[%s521 + $0x9] sm:$0x3]
        %v678 = vld [vmem:[%s521 + $0x11] sm:$0xff]
        %v679 = vld [vmem:[%s521 + $0x19] sm:$0x3]
        %v680 = vld [vmem:[%s521 + $0x21] sm:$0xff]
        %v681 = vld [vmem:[%s521 + $0x29] sm:$0x3]
        %v682 = vld [vmem:[%s521 + $0x31] sm:$0xff]
        %v683 = vld [vmem:[%s521 + $0x39] sm:$0x3]
        %v684 = vld [vmem:[%s521 + $0x41] sm:$0xff]
        %v685 = vld [vmem:[%s521 + $0x49] sm:$0x3]
        %v686 = vld [vmem:[%s521 + $0x51] sm:$0xff]
        %v687 = vld [vmem:[%s521 + $0x59] sm:$0x3]
        %v688 = vld [vmem:[%s521 + $0x61] sm:$0xff]
        %v689 = vld [vmem:[%s521 + $0x69] sm:$0x3]
        %v690 = vld [vmem:[%s521 + $0x71] sm:$0xff]
        %v691 = vld [vmem:[%s521 + $0x79] sm:$0x3]
        %v692 = vlaneseq
        %v693 = vshrl.u32 %v692, 7
        %v694 = vsub.s32 3, %v693
        %v695 = vrot.slane %v532, %v694
        %v696 = vmul.f32 %v676, %v695
        %v697 = vmul.f32 %v677, %v695
        %v698 = vmul.f32 %v678, %v695
        %v699 = vmul.f32 %v679, %v695
        %v700 = vmul.f32 %v680, %v695
        %v701 = vmul.f32 %v681, %v695
        %v702 = vmul.f32 %v682, %v695
        %v703 = vmul.f32 %v683, %v695
        %v704 = vmul.f32 %v684, %v695
        %v705 = vmul.f32 %v685, %v695
        %v706 = vmul.f32 %v686, %v695
        %v707 = vmul.f32 %v687, %v695
        %v708 = vmul.f32 %v688, %v695
        %v709 = vmul.f32 %v689, %v695
        %v710 = vmul.f32 %v690, %v695
        %v711 = vmul.f32 %v691, %v695
        %v712 = vadd.f32 %v660, %v696
        %v713 = vadd.f32 %v661, %v697
        %v714 = vadd.f32 %v662, %v698
        %v715 = vadd.f32 %v663, %v699
        %v716 = vadd.f32 %v664, %v700
        %v717 = vadd.f32 %v665, %v701
        %v718 = vadd.f32 %v666, %v702
        %v719 = vadd.f32 %v667, %v703
        %v720 = vadd.f32 %v668, %v704
        %v721 = vadd.f32 %v669, %v705
        %v722 = vadd.f32 %v670, %v706
        %v723 = vadd.f32 %v671, %v707
        %v724 = vadd.f32 %v672, %v708
        %v725 = vadd.f32 %v673, %v709
        %v726 = vadd.f32 %v674, %v710
        %v727 = vadd.f32 %v675, %v711
        %v728 = vld [vmem:[%s526 + $0x1] sm:$0xff]
        %v729 = vld [vmem:[%s526 + $0x9] sm:$0x3]
        %v730 = vld [vmem:[%s526 + $0x11] sm:$0xff]
        %v731 = vld [vmem:[%s526 + $0x19] sm:$0x3]
        %v732 = vld [vmem:[%s526 + $0x21] sm:$0xff]
        %v733 = vld [vmem:[%s526 + $0x29] sm:$0x3]
        %v734 = vld [vmem:[%s526 + $0x31] sm:$0xff]
        %v735 = vld [vmem:[%s526 + $0x39] sm:$0x3]
        %v736 = vld [vmem:[%s526 + $0x41] sm:$0xff]
        %v737 = vld [vmem:[%s526 + $0x49] sm:$0x3]
        %v738 = vld [vmem:[%s526 + $0x51] sm:$0xff]
        %v739 = vld [vmem:[%s526 + $0x59] sm:$0x3]
        %v740 = vld [vmem:[%s526 + $0x61] sm:$0xff]
        %v741 = vld [vmem:[%s526 + $0x69] sm:$0x3]
        %v742 = vld [vmem:[%s526 + $0x71] sm:$0xff]
        %v743 = vld [vmem:[%s526 + $0x79] sm:$0x3]
        %v744 = vlaneseq
        %v745 = vshrl.u32 %v744, 7
        %v746 = vsub.s32 4, %v745
        %v747 = vrot.slane %v532, %v746
        %v748 = vmul.f32 %v728, %v747
        %v749 = vmul.f32 %v729, %v747
        %v750 = vmul.f32 %v730, %v747
        %v751 = vmul.f32 %v731, %v747
        %v752 = vmul.f32 %v732, %v747
        %v753 = vmul.f32 %v733, %v747
        %v754 = vmul.f32 %v734, %v747
        %v755 = vmul.f32 %v735, %v747
        %v756 = vmul.f32 %v736, %v747
        %v757 = vmul.f32 %v737, %v747
        %v758 = vmul.f32 %v738, %v747
        %v759 = vmul.f32 %v739, %v747
        %v760 = vmul.f32 %v740, %v747
        %v761 = vmul.f32 %v741, %v747
        %v762 = vmul.f32 %v742, %v747
        %v763 = vmul.f32 %v743, %v747
        %v764 = vadd.f32 %v712, %v748
        %v765 = vadd.f32 %v713, %v749
        %v766 = vadd.f32 %v714, %v750
        %v767 = vadd.f32 %v715, %v751
        %v768 = vadd.f32 %v716, %v752
        %v769 = vadd.f32 %v717, %v753
        %v770 = vadd.f32 %v718, %v754
        %v771 = vadd.f32 %v719, %v755
        %v772 = vadd.f32 %v720, %v756
        %v773 = vadd.f32 %v721, %v757
        %v774 = vadd.f32 %v722, %v758
        %v775 = vadd.f32 %v723, %v759
        %v776 = vadd.f32 %v724, %v760
        %v777 = vadd.f32 %v725, %v761
        %v778 = vadd.f32 %v726, %v762
        %v779 = vadd.f32 %v727, %v763
        %v780 = vld [vmem:[%s531 + $0x1] sm:$0xff]
        %v781 = vld [vmem:[%s531 + $0x9] sm:$0x3]
        %v782 = vld [vmem:[%s531 + $0x11] sm:$0xff]
        %v783 = vld [vmem:[%s531 + $0x19] sm:$0x3]
        %v784 = vld [vmem:[%s531 + $0x21] sm:$0xff]
        %v785 = vld [vmem:[%s531 + $0x29] sm:$0x3]
        %v786 = vld [vmem:[%s531 + $0x31] sm:$0xff]
        %v787 = vld [vmem:[%s531 + $0x39] sm:$0x3]
        %v788 = vld [vmem:[%s531 + $0x41] sm:$0xff]
        %v789 = vld [vmem:[%s531 + $0x49] sm:$0x3]
        %v790 = vld [vmem:[%s531 + $0x51] sm:$0xff]
        %v791 = vld [vmem:[%s531 + $0x59] sm:$0x3]
        %v792 = vld [vmem:[%s531 + $0x61] sm:$0xff]
        %v793 = vld [vmem:[%s531 + $0x69] sm:$0x3]
        %v794 = vld [vmem:[%s531 + $0x71] sm:$0xff]
        %v795 = vld [vmem:[%s531 + $0x79] sm:$0x3]
        %v796 = vlaneseq
        %v797 = vshrl.u32 %v796, 7
        %v798 = vsub.s32 5, %v797
        %v799 = vrot.slane %v532, %v798
        %v800 = vmul.f32 %v780, %v799
        %v801 = vmul.f32 %v781, %v799
        %v802 = vmul.f32 %v782, %v799
        %v803 = vmul.f32 %v783, %v799
        %v804 = vmul.f32 %v784, %v799
        %v805 = vmul.f32 %v785, %v799
        %v806 = vmul.f32 %v786, %v799
        %v807 = vmul.f32 %v787, %v799
        %v808 = vmul.f32 %v788, %v799
        %v809 = vmul.f32 %v789, %v799
        %v810 = vmul.f32 %v790, %v799
        %v811 = vmul.f32 %v791, %v799
        %v812 = vmul.f32 %v792, %v799
        %v813 = vmul.f32 %v793, %v799
        %v814 = vmul.f32 %v794, %v799
        %v815 = vmul.f32 %v795, %v799
        %v816 = vadd.f32 %v764, %v800
        %v817 = vadd.f32 %v765, %v801
        %v818 = vadd.f32 %v766, %v802
        %v819 = vadd.f32 %v767, %v803
        %v820 = vadd.f32 %v768, %v804
        %v821 = vadd.f32 %v769, %v805
        %v822 = vadd.f32 %v770, %v806
        %v823 = vadd.f32 %v771, %v807
        %v824 = vadd.f32 %v772, %v808
        %v825 = vadd.f32 %v773, %v809
        %v826 = vadd.f32 %v774, %v810
        %v827 = vadd.f32 %v775, %v811
        %v828 = vadd.f32 %v776, %v812
        %v829 = vadd.f32 %v777, %v813
        %v830 = vadd.f32 %v778, %v814
        %v831 = vadd.f32 %v779, %v815
        %v832 = vld [vmem:[%s521 + $0x2] sm:$0xff]
        %v833 = vld [vmem:[%s521 + $0xa] sm:$0x3]
        %v834 = vld [vmem:[%s521 + $0x12] sm:$0xff]
        %v835 = vld [vmem:[%s521 + $0x1a] sm:$0x3]
        %v836 = vld [vmem:[%s521 + $0x22] sm:$0xff]
        %v837 = vld [vmem:[%s521 + $0x2a] sm:$0x3]
        %v838 = vld [vmem:[%s521 + $0x32] sm:$0xff]
        %v839 = vld [vmem:[%s521 + $0x3a] sm:$0x3]
        %v840 = vld [vmem:[%s521 + $0x42] sm:$0xff]
        %v841 = vld [vmem:[%s521 + $0x4a] sm:$0x3]
        %v842 = vld [vmem:[%s521 + $0x52] sm:$0xff]
        %v843 = vld [vmem:[%s521 + $0x5a] sm:$0x3]
        %v844 = vld [vmem:[%s521 + $0x62] sm:$0xff]
        %v845 = vld [vmem:[%s521 + $0x6a] sm:$0x3]
        %v846 = vld [vmem:[%s521 + $0x72] sm:$0xff]
        %v847 = vld [vmem:[%s521 + $0x7a] sm:$0x3]
        %v848 = vlaneseq
        %v849 = vshrl.u32 %v848, 7
        %v850 = vsub.s32 6, %v849
        %v851 = vrot.slane %v532, %v850
        %v852 = vmul.f32 %v832, %v851
        %v853 = vmul.f32 %v833, %v851
        %v854 = vmul.f32 %v834, %v851
        %v855 = vmul.f32 %v835, %v851
        %v856 = vmul.f32 %v836, %v851
        %v857 = vmul.f32 %v837, %v851
        %v858 = vmul.f32 %v838, %v851
        %v859 = vmul.f32 %v839, %v851
        %v860 = vmul.f32 %v840, %v851
        %v861 = vmul.f32 %v841, %v851
        %v862 = vmul.f32 %v842, %v851
        %v863 = vmul.f32 %v843, %v851
        %v864 = vmul.f32 %v844, %v851
        %v865 = vmul.f32 %v845, %v851
        %v866 = vmul.f32 %v846, %v851
        %v867 = vmul.f32 %v847, %v851
        %v868 = vadd.f32 %v816, %v852
        %v869 = vadd.f32 %v817, %v853
        %v870 = vadd.f32 %v818, %v854
        %v871 = vadd.f32 %v819, %v855
        %v872 = vadd.f32 %v820, %v856
        %v873 = vadd.f32 %v821, %v857
        %v874 = vadd.f32 %v822, %v858
        %v875 = vadd.f32 %v823, %v859
        %v876 = vadd.f32 %v824, %v860
        %v877 = vadd.f32 %v825, %v861
        %v878 = vadd.f32 %v826, %v862
        %v879 = vadd.f32 %v827, %v863
        %v880 = vadd.f32 %v828, %v864
        %v881 = vadd.f32 %v829, %v865
        %v882 = vadd.f32 %v830, %v866
        %v883 = vadd.f32 %v831, %v867
        %v884 = vld [vmem:[%s526 + $0x2] sm:$0xff]
        %v885 = vld [vmem:[%s526 + $0xa] sm:$0x3]
        %v886 = vld [vmem:[%s526 + $0x12] sm:$0xff]
        %v887 = vld [vmem:[%s526 + $0x1a] sm:$0x3]
        %v888 = vld [vmem:[%s526 + $0x22] sm:$0xff]
        %v889 = vld [vmem:[%s526 + $0x2a] sm:$0x3]
        %v890 = vld [vmem:[%s526 + $0x32] sm:$0xff]
        %v891 = vld [vmem:[%s526 + $0x3a] sm:$0x3]
        %v892 = vld [vmem:[%s526 + $0x42] sm:$0xff]
        %v893 = vld [vmem:[%s526 + $0x4a] sm:$0x3]
        %v894 = vld [vmem:[%s526 + $0x52] sm:$0xff]
        %v895 = vld [vmem:[%s526 + $0x5a] sm:$0x3]
        %v896 = vld [vmem:[%s526 + $0x62] sm:$0xff]
        %v897 = vld [vmem:[%s526 + $0x6a] sm:$0x3]
        %v898 = vld [vmem:[%s526 + $0x72] sm:$0xff]
        %v899 = vld [vmem:[%s526 + $0x7a] sm:$0x3]
        %v900 = vlaneseq
        %v901 = vshrl.u32 %v900, 7
        %v902 = vsub.s32 7, %v901
        %v903 = vrot.slane %v532, %v902
        %v904 = vmul.f32 %v884, %v903
        %v905 = vmul.f32 %v885, %v903
        %v906 = vmul.f32 %v886, %v903
        %v907 = vmul.f32 %v887, %v903
        %v908 = vmul.f32 %v888, %v903
        %v909 = vmul.f32 %v889, %v903
        %v910 = vmul.f32 %v890, %v903
        %v911 = vmul.f32 %v891, %v903
        %v912 = vmul.f32 %v892, %v903
        %v913 = vmul.f32 %v893, %v903
        %v914 = vmul.f32 %v894, %v903
        %v915 = vmul.f32 %v895, %v903
        %v916 = vmul.f32 %v896, %v903
        %v917 = vmul.f32 %v897, %v903
        %v918 = vmul.f32 %v898, %v903
        %v919 = vmul.f32 %v899, %v903
        %v920 = vadd.f32 %v868, %v904
        %v921 = vadd.f32 %v869, %v905
        %v922 = vadd.f32 %v870, %v906
        %v923 = vadd.f32 %v871, %v907
        %v924 = vadd.f32 %v872, %v908
        %v925 = vadd.f32 %v873, %v909
        %v926 = vadd.f32 %v874, %v910
        %v927 = vadd.f32 %v875, %v911
        %v928 = vadd.f32 %v876, %v912
        %v929 = vadd.f32 %v877, %v913
        %v930 = vadd.f32 %v878, %v914
        %v931 = vadd.f32 %v879, %v915
        %v932 = vadd.f32 %v880, %v916
        %v933 = vadd.f32 %v881, %v917
        %v934 = vadd.f32 %v882, %v918
        %v935 = vadd.f32 %v883, %v919
        %v936 = vld [vmem:[%s531 + $0x2] sm:$0xff]
        %v937 = vld [vmem:[%s531 + $0xa] sm:$0x3]
        %v938 = vld [vmem:[%s531 + $0x12] sm:$0xff]
        %v939 = vld [vmem:[%s531 + $0x1a] sm:$0x3]
        %v940 = vld [vmem:[%s531 + $0x22] sm:$0xff]
        %v941 = vld [vmem:[%s531 + $0x2a] sm:$0x3]
        %v942 = vld [vmem:[%s531 + $0x32] sm:$0xff]
        %v943 = vld [vmem:[%s531 + $0x3a] sm:$0x3]
        %v944 = vld [vmem:[%s531 + $0x42] sm:$0xff]
        %v945 = vld [vmem:[%s531 + $0x4a] sm:$0x3]
        %v946 = vld [vmem:[%s531 + $0x52] sm:$0xff]
        %v947 = vld [vmem:[%s531 + $0x5a] sm:$0x3]
        %v948 = vld [vmem:[%s531 + $0x62] sm:$0xff]
        %v949 = vld [vmem:[%s531 + $0x6a] sm:$0x3]
        %v950 = vld [vmem:[%s531 + $0x72] sm:$0xff]
        %v951 = vld [vmem:[%s531 + $0x7a] sm:$0x3]
        %v952 = vlaneseq
        %v953 = vshrl.u32 %v952, 7
        %v954 = vsub.s32 0, %v953
        %v955 = vrot.slane %v533, %v954
        %v956 = vmul.f32 %v936, %v955
        %v957 = vmul.f32 %v937, %v955
        %v958 = vmul.f32 %v938, %v955
        %v959 = vmul.f32 %v939, %v955
        %v960 = vmul.f32 %v940, %v955
        %v961 = vmul.f32 %v941, %v955
        %v962 = vmul.f32 %v942, %v955
        %v963 = vmul.f32 %v943, %v955
        %v964 = vmul.f32 %v944, %v955
        %v965 = vmul.f32 %v945, %v955
        %v966 = vmul.f32 %v946, %v955
        %v967 = vmul.f32 %v947, %v955
        %v968 = vmul.f32 %v948, %v955
        %v969 = vmul.f32 %v949, %v955
        %v970 = vmul.f32 %v950, %v955
        %v971 = vmul.f32 %v951, %v955
        %v972 = vadd.f32 %v920, %v956
        %v973 = vadd.f32 %v921, %v957
        %v974 = vadd.f32 %v922, %v958
        %v975 = vadd.f32 %v923, %v959
        %v976 = vadd.f32 %v924, %v960
        %v977 = vadd.f32 %v925, %v961
        %v978 = vadd.f32 %v926, %v962
        %v979 = vadd.f32 %v927, %v963
        %v980 = vadd.f32 %v928, %v964
        %v981 = vadd.f32 %v929, %v965
        %v982 = vadd.f32 %v930, %v966
        %v983 = vadd.f32 %v931, %v967
        %v984 = vadd.f32 %v932, %v968
        %v985 = vadd.f32 %v933, %v969
        %v986 = vadd.f32 %v934, %v970
        %v987 = vadd.f32 %v935, %v971
        %s988 = scalar_lea.vmem %s521, 16
        %v989 = vld [vmem:[%s988] sm:$0xff]
        %v990 = vld [vmem:[%s988 + $0x8] sm:$0x3]
        %v991 = vld [vmem:[%s988 + $0x10] sm:$0xff]
        %v992 = vld [vmem:[%s988 + $0x18] sm:$0x3]
        %v993 = vld [vmem:[%s988 + $0x20] sm:$0xff]
        %v994 = vld [vmem:[%s988 + $0x28] sm:$0x3]
        %v995 = vld [vmem:[%s988 + $0x30] sm:$0xff]
        %v996 = vld [vmem:[%s988 + $0x38] sm:$0x3]
        %v997 = vld [vmem:[%s988 + $0x40] sm:$0xff]
        %v998 = vld [vmem:[%s988 + $0x48] sm:$0x3]
        %v999 = vld [vmem:[%s988 + $0x50] sm:$0xff]
        %v1000 = vld [vmem:[%s988 + $0x58] sm:$0x3]
        %v1001 = vld [vmem:[%s988 + $0x60] sm:$0xff]
        %v1002 = vld [vmem:[%s988 + $0x68] sm:$0x3]
        %v1003 = vld [vmem:[%s988 + $0x70] sm:$0xff]
        %v1004 = vld [vmem:[%s988 + $0x78] sm:$0x3]
        %v1005 = vlaneseq
        %v1006 = vshrl.u32 %v1005, 7
        %v1007 = vsub.s32 1, %v1006
        %v1008 = vrot.slane %v533, %v1007
        %v1009 = vmul.f32 %v989, %v1008
        %v1010 = vmul.f32 %v990, %v1008
        %v1011 = vmul.f32 %v991, %v1008
        %v1012 = vmul.f32 %v992, %v1008
        %v1013 = vmul.f32 %v993, %v1008
        %v1014 = vmul.f32 %v994, %v1008
        %v1015 = vmul.f32 %v995, %v1008
        %v1016 = vmul.f32 %v996, %v1008
        %v1017 = vmul.f32 %v997, %v1008
        %v1018 = vmul.f32 %v998, %v1008
        %v1019 = vmul.f32 %v999, %v1008
        %v1020 = vmul.f32 %v1000, %v1008
        %v1021 = vmul.f32 %v1001, %v1008
        %v1022 = vmul.f32 %v1002, %v1008
        %v1023 = vmul.f32 %v1003, %v1008
        %v1024 = vmul.f32 %v1004, %v1008
        %v1025 = vadd.f32 %v972, %v1009
        %v1026 = vadd.f32 %v973, %v1010
        %v1027 = vadd.f32 %v974, %v1011
        %v1028 = vadd.f32 %v975, %v1012
        %v1029 = vadd.f32 %v976, %v1013
        %v1030 = vadd.f32 %v977, %v1014
        %v1031 = vadd.f32 %v978, %v1015
        %v1032 = vadd.f32 %v979, %v1016
        %v1033 = vadd.f32 %v980, %v1017
        %v1034 = vadd.f32 %v981, %v1018
        %v1035 = vadd.f32 %v982, %v1019
        %v1036 = vadd.f32 %v983, %v1020
        %v1037 = vadd.f32 %v984, %v1021
        %v1038 = vadd.f32 %v985, %v1022
        %v1039 = vadd.f32 %v986, %v1023
        %v1040 = vadd.f32 %v987, %v1024
        %s1041 = scalar_lea.vmem %s526, 16
        %v1042 = vld [vmem:[%s1041] sm:$0xff]
        %v1043 = vld [vmem:[%s1041 + $0x8] sm:$0x3]
        %v1044 = vld [vmem:[%s1041 + $0x10] sm:$0xff]
        %v1045 = vld [vmem:[%s1041 + $0x18] sm:$0x3]
        %v1046 = vld [vmem:[%s1041 + $0x20] sm:$0xff]
        %v1047 = vld [vmem:[%s1041 + $0x28] sm:$0x3]
        %v1048 = vld [vmem:[%s1041 + $0x30] sm:$0xff]
        %v1049 = vld [vmem:[%s1041 + $0x38] sm:$0x3]
        %v1050 = vld [vmem:[%s1041 + $0x40] sm:$0xff]
        %v1051 = vld [vmem:[%s1041 + $0x48] sm:$0x3]
        %v1052 = vld [vmem:[%s1041 + $0x50] sm:$0xff]
        %v1053 = vld [vmem:[%s1041 + $0x58] sm:$0x3]
        %v1054 = vld [vmem:[%s1041 + $0x60] sm:$0xff]
        %v1055 = vld [vmem:[%s1041 + $0x68] sm:$0x3]
        %v1056 = vld [vmem:[%s1041 + $0x70] sm:$0xff]
        %v1057 = vld [vmem:[%s1041 + $0x78] sm:$0x3]
        %v1058 = vlaneseq
        %v1059 = vshrl.u32 %v1058, 7
        %v1060 = vsub.s32 2, %v1059
        %v1061 = vrot.slane %v533, %v1060
        %v1062 = vmul.f32 %v1042, %v1061
        %v1063 = vmul.f32 %v1043, %v1061
        %v1064 = vmul.f32 %v1044, %v1061
        %v1065 = vmul.f32 %v1045, %v1061
        %v1066 = vmul.f32 %v1046, %v1061
        %v1067 = vmul.f32 %v1047, %v1061
        %v1068 = vmul.f32 %v1048, %v1061
        %v1069 = vmul.f32 %v1049, %v1061
        %v1070 = vmul.f32 %v1050, %v1061
        %v1071 = vmul.f32 %v1051, %v1061
        %v1072 = vmul.f32 %v1052, %v1061
        %v1073 = vmul.f32 %v1053, %v1061
        %v1074 = vmul.f32 %v1054, %v1061
        %v1075 = vmul.f32 %v1055, %v1061
        %v1076 = vmul.f32 %v1056, %v1061
        %v1077 = vmul.f32 %v1057, %v1061
        %v1078 = vadd.f32 %v1025, %v1062
        %v1079 = vadd.f32 %v1026, %v1063
        %v1080 = vadd.f32 %v1027, %v1064
        %v1081 = vadd.f32 %v1028, %v1065
        %v1082 = vadd.f32 %v1029, %v1066
        %v1083 = vadd.f32 %v1030, %v1067
        %v1084 = vadd.f32 %v1031, %v1068
        %v1085 = vadd.f32 %v1032, %v1069
        %v1086 = vadd.f32 %v1033, %v1070
        %v1087 = vadd.f32 %v1034, %v1071
        %v1088 = vadd.f32 %v1035, %v1072
        %v1089 = vadd.f32 %v1036, %v1073
        %v1090 = vadd.f32 %v1037, %v1074
        %v1091 = vadd.f32 %v1038, %v1075
        %v1092 = vadd.f32 %v1039, %v1076
        %v1093 = vadd.f32 %v1040, %v1077
        %s1094 = scalar_lea.vmem %s531, 16
        %v1095 = vld [vmem:[%s1094] sm:$0xff]
        %v1096 = vld [vmem:[%s1094 + $0x8] sm:$0x3]
        %v1097 = vld [vmem:[%s1094 + $0x10] sm:$0xff]
        %v1098 = vld [vmem:[%s1094 + $0x18] sm:$0x3]
        %v1099 = vld [vmem:[%s1094 + $0x20] sm:$0xff]
        %v1100 = vld [vmem:[%s1094 + $0x28] sm:$0x3]
        %v1101 = vld [vmem:[%s1094 + $0x30] sm:$0xff]
        %v1102 = vld [vmem:[%s1094 + $0x38] sm:$0x3]
        %v1103 = vld [vmem:[%s1094 + $0x40] sm:$0xff]
        %v1104 = vld [vmem:[%s1094 + $0x48] sm:$0x3]
        %v1105 = vld [vmem:[%s1094 + $0x50] sm:$0xff]
        %v1106 = vld [vmem:[%s1094 + $0x58] sm:$0x3]
        %v1107 = vld [vmem:[%s1094 + $0x60] sm:$0xff]
        %v1108 = vld [vmem:[%s1094 + $0x68] sm:$0x3]
        %v1109 = vld [vmem:[%s1094 + $0x70] sm:$0xff]
        %v1110 = vld [vmem:[%s1094 + $0x78] sm:$0x3]
        %v1111 = vlaneseq
        %v1112 = vshrl.u32 %v1111, 7
        %v1113 = vsub.s32 3, %v1112
        %v1114 = vrot.slane %v533, %v1113
        %v1115 = vmul.f32 %v1095, %v1114
        %v1116 = vmul.f32 %v1096, %v1114
        %v1117 = vmul.f32 %v1097, %v1114
        %v1118 = vmul.f32 %v1098, %v1114
        %v1119 = vmul.f32 %v1099, %v1114
        %v1120 = vmul.f32 %v1100, %v1114
        %v1121 = vmul.f32 %v1101, %v1114
        %v1122 = vmul.f32 %v1102, %v1114
        %v1123 = vmul.f32 %v1103, %v1114
        %v1124 = vmul.f32 %v1104, %v1114
        %v1125 = vmul.f32 %v1105, %v1114
        %v1126 = vmul.f32 %v1106, %v1114
        %v1127 = vmul.f32 %v1107, %v1114
        %v1128 = vmul.f32 %v1108, %v1114
        %v1129 = vmul.f32 %v1109, %v1114
        %v1130 = vmul.f32 %v1110, %v1114
        %v1131 = vadd.f32 %v1078, %v1115
        %v1132 = vadd.f32 %v1079, %v1116
        %v1133 = vadd.f32 %v1080, %v1117
        %v1134 = vadd.f32 %v1081, %v1118
        %v1135 = vadd.f32 %v1082, %v1119
        %v1136 = vadd.f32 %v1083, %v1120
        %v1137 = vadd.f32 %v1084, %v1121
        %v1138 = vadd.f32 %v1085, %v1122
        %v1139 = vadd.f32 %v1086, %v1123
        %v1140 = vadd.f32 %v1087, %v1124
        %v1141 = vadd.f32 %v1088, %v1125
        %v1142 = vadd.f32 %v1089, %v1126
        %v1143 = vadd.f32 %v1090, %v1127
        %v1144 = vadd.f32 %v1091, %v1128
        %v1145 = vadd.f32 %v1092, %v1129
        %v1146 = vadd.f32 %v1093, %v1130
        %v1147 = vld [vmem:[%s988 + $0x1] sm:$0xff]
        %v1148 = vld [vmem:[%s988 + $0x9] sm:$0x3]
        %v1149 = vld [vmem:[%s988 + $0x11] sm:$0xff]
        %v1150 = vld [vmem:[%s988 + $0x19] sm:$0x3]
        %v1151 = vld [vmem:[%s988 + $0x21] sm:$0xff]
        %v1152 = vld [vmem:[%s988 + $0x29] sm:$0x3]
        %v1153 = vld [vmem:[%s988 + $0x31] sm:$0xff]
        %v1154 = vld [vmem:[%s988 + $0x39] sm:$0x3]
        %v1155 = vld [vmem:[%s988 + $0x41] sm:$0xff]
        %v1156 = vld [vmem:[%s988 + $0x49] sm:$0x3]
        %v1157 = vld [vmem:[%s988 + $0x51] sm:$0xff]
        %v1158 = vld [vmem:[%s988 + $0x59] sm:$0x3]
        %v1159 = vld [vmem:[%s988 + $0x61] sm:$0xff]
        %v1160 = vld [vmem:[%s988 + $0x69] sm:$0x3]
        %v1161 = vld [vmem:[%s988 + $0x71] sm:$0xff]
        %v1162 = vld [vmem:[%s988 + $0x79] sm:$0x3]
        %v1163 = vlaneseq
        %v1164 = vshrl.u32 %v1163, 7
        %v1165 = vsub.s32 4, %v1164
        %v1166 = vrot.slane %v533, %v1165
        %v1167 = vmul.f32 %v1147, %v1166
        %v1168 = vmul.f32 %v1148, %v1166
        %v1169 = vmul.f32 %v1149, %v1166
        %v1170 = vmul.f32 %v1150, %v1166
        %v1171 = vmul.f32 %v1151, %v1166
        %v1172 = vmul.f32 %v1152, %v1166
        %v1173 = vmul.f32 %v1153, %v1166
        %v1174 = vmul.f32 %v1154, %v1166
        %v1175 = vmul.f32 %v1155, %v1166
        %v1176 = vmul.f32 %v1156, %v1166
        %v1177 = vmul.f32 %v1157, %v1166
        %v1178 = vmul.f32 %v1158, %v1166
        %v1179 = vmul.f32 %v1159, %v1166
        %v1180 = vmul.f32 %v1160, %v1166
        %v1181 = vmul.f32 %v1161, %v1166
        %v1182 = vmul.f32 %v1162, %v1166
        %v1183 = vadd.f32 %v1131, %v1167
        %v1184 = vadd.f32 %v1132, %v1168
        %v1185 = vadd.f32 %v1133, %v1169
        %v1186 = vadd.f32 %v1134, %v1170
        %v1187 = vadd.f32 %v1135, %v1171
        %v1188 = vadd.f32 %v1136, %v1172
        %v1189 = vadd.f32 %v1137, %v1173
        %v1190 = vadd.f32 %v1138, %v1174
        %v1191 = vadd.f32 %v1139, %v1175
        %v1192 = vadd.f32 %v1140, %v1176
        %v1193 = vadd.f32 %v1141, %v1177
        %v1194 = vadd.f32 %v1142, %v1178
        %v1195 = vadd.f32 %v1143, %v1179
        %v1196 = vadd.f32 %v1144, %v1180
        %v1197 = vadd.f32 %v1145, %v1181
        %v1198 = vadd.f32 %v1146, %v1182
        %v1199 = vld [vmem:[%s1041 + $0x1] sm:$0xff]
        %v1200 = vld [vmem:[%s1041 + $0x9] sm:$0x3]
        %v1201 = vld [vmem:[%s1041 + $0x11] sm:$0xff]
        %v1202 = vld [vmem:[%s1041 + $0x19] sm:$0x3]
        %v1203 = vld [vmem:[%s1041 + $0x21] sm:$0xff]
        %v1204 = vld [vmem:[%s1041 + $0x29] sm:$0x3]
        %v1205 = vld [vmem:[%s1041 + $0x31] sm:$0xff]
        %v1206 = vld [vmem:[%s1041 + $0x39] sm:$0x3]
        %v1207 = vld [vmem:[%s1041 + $0x41] sm:$0xff]
        %v1208 = vld [vmem:[%s1041 + $0x49] sm:$0x3]
        %v1209 = vld [vmem:[%s1041 + $0x51] sm:$0xff]
        %v1210 = vld [vmem:[%s1041 + $0x59] sm:$0x3]
        %v1211 = vld [vmem:[%s1041 + $0x61] sm:$0xff]
        %v1212 = vld [vmem:[%s1041 + $0x69] sm:$0x3]
        %v1213 = vld [vmem:[%s1041 + $0x71] sm:$0xff]
        %v1214 = vld [vmem:[%s1041 + $0x79] sm:$0x3]
        %v1215 = vlaneseq
        %v1216 = vshrl.u32 %v1215, 7
        %v1217 = vsub.s32 5, %v1216
        %v1218 = vrot.slane %v533, %v1217
        %v1219 = vmul.f32 %v1199, %v1218
        %v1220 = vmul.f32 %v1200, %v1218
        %v1221 = vmul.f32 %v1201, %v1218
        %v1222 = vmul.f32 %v1202, %v1218
        %v1223 = vmul.f32 %v1203, %v1218
        %v1224 = vmul.f32 %v1204, %v1218
        %v1225 = vmul.f32 %v1205, %v1218
        %v1226 = vmul.f32 %v1206, %v1218
        %v1227 = vmul.f32 %v1207, %v1218
        %v1228 = vmul.f32 %v1208, %v1218
        %v1229 = vmul.f32 %v1209, %v1218
        %v1230 = vmul.f32 %v1210, %v1218
        %v1231 = vmul.f32 %v1211, %v1218
        %v1232 = vmul.f32 %v1212, %v1218
        %v1233 = vmul.f32 %v1213, %v1218
        %v1234 = vmul.f32 %v1214, %v1218
        %v1235 = vadd.f32 %v1183, %v1219
        %v1236 = vadd.f32 %v1184, %v1220
        %v1237 = vadd.f32 %v1185, %v1221
        %v1238 = vadd.f32 %v1186, %v1222
        %v1239 = vadd.f32 %v1187, %v1223
        %v1240 = vadd.f32 %v1188, %v1224
        %v1241 = vadd.f32 %v1189, %v1225
        %v1242 = vadd.f32 %v1190, %v1226
        %v1243 = vadd.f32 %v1191, %v1227
        %v1244 = vadd.f32 %v1192, %v1228
        %v1245 = vadd.f32 %v1193, %v1229
        %v1246 = vadd.f32 %v1194, %v1230
        %v1247 = vadd.f32 %v1195, %v1231
        %v1248 = vadd.f32 %v1196, %v1232
        %v1249 = vadd.f32 %v1197, %v1233
        %v1250 = vadd.f32 %v1198, %v1234
        %v1251 = vld [vmem:[%s1094 + $0x1] sm:$0xff]
        %v1252 = vld [vmem:[%s1094 + $0x9] sm:$0x3]
        %v1253 = vld [vmem:[%s1094 + $0x11] sm:$0xff]
        %v1254 = vld [vmem:[%s1094 + $0x19] sm:$0x3]
        %v1255 = vld [vmem:[%s1094 + $0x21] sm:$0xff]
        %v1256 = vld [vmem:[%s1094 + $0x29] sm:$0x3]
        %v1257 = vld [vmem:[%s1094 + $0x31] sm:$0xff]
        %v1258 = vld [vmem:[%s1094 + $0x39] sm:$0x3]
        %v1259 = vld [vmem:[%s1094 + $0x41] sm:$0xff]
        %v1260 = vld [vmem:[%s1094 + $0x49] sm:$0x3]
        %v1261 = vld [vmem:[%s1094 + $0x51] sm:$0xff]
        %v1262 = vld [vmem:[%s1094 + $0x59] sm:$0x3]
        %v1263 = vld [vmem:[%s1094 + $0x61] sm:$0xff]
        %v1264 = vld [vmem:[%s1094 + $0x69] sm:$0x3]
        %v1265 = vld [vmem:[%s1094 + $0x71] sm:$0xff]
        %v1266 = vld [vmem:[%s1094 + $0x79] sm:$0x3]
        %v1267 = vlaneseq
        %v1268 = vshrl.u32 %v1267, 7
        %v1269 = vsub.s32 6, %v1268
        %v1270 = vrot.slane %v533, %v1269
        %v1271 = vmul.f32 %v1251, %v1270
        %v1272 = vmul.f32 %v1252, %v1270
        %v1273 = vmul.f32 %v1253, %v1270
        %v1274 = vmul.f32 %v1254, %v1270
        %v1275 = vmul.f32 %v1255, %v1270
        %v1276 = vmul.f32 %v1256, %v1270
        %v1277 = vmul.f32 %v1257, %v1270
        %v1278 = vmul.f32 %v1258, %v1270
        %v1279 = vmul.f32 %v1259, %v1270
        %v1280 = vmul.f32 %v1260, %v1270
        %v1281 = vmul.f32 %v1261, %v1270
        %v1282 = vmul.f32 %v1262, %v1270
        %v1283 = vmul.f32 %v1263, %v1270
        %v1284 = vmul.f32 %v1264, %v1270
        %v1285 = vmul.f32 %v1265, %v1270
        %v1286 = vmul.f32 %v1266, %v1270
        %v1287 = vadd.f32 %v1235, %v1271
        %v1288 = vadd.f32 %v1236, %v1272
        %v1289 = vadd.f32 %v1237, %v1273
        %v1290 = vadd.f32 %v1238, %v1274
        %v1291 = vadd.f32 %v1239, %v1275
        %v1292 = vadd.f32 %v1240, %v1276
        %v1293 = vadd.f32 %v1241, %v1277
        %v1294 = vadd.f32 %v1242, %v1278
        %v1295 = vadd.f32 %v1243, %v1279
        %v1296 = vadd.f32 %v1244, %v1280
        %v1297 = vadd.f32 %v1245, %v1281
        %v1298 = vadd.f32 %v1246, %v1282
        %v1299 = vadd.f32 %v1247, %v1283
        %v1300 = vadd.f32 %v1248, %v1284
        %v1301 = vadd.f32 %v1249, %v1285
        %v1302 = vadd.f32 %v1250, %v1286
        %v1303 = vld [vmem:[%s988 + $0x2] sm:$0xff]
        %v1304 = vld [vmem:[%s988 + $0xa] sm:$0x3]
        %v1305 = vld [vmem:[%s988 + $0x12] sm:$0xff]
        %v1306 = vld [vmem:[%s988 + $0x1a] sm:$0x3]
        %v1307 = vld [vmem:[%s988 + $0x22] sm:$0xff]
        %v1308 = vld [vmem:[%s988 + $0x2a] sm:$0x3]
        %v1309 = vld [vmem:[%s988 + $0x32] sm:$0xff]
        %v1310 = vld [vmem:[%s988 + $0x3a] sm:$0x3]
        %v1311 = vld [vmem:[%s988 + $0x42] sm:$0xff]
        %v1312 = vld [vmem:[%s988 + $0x4a] sm:$0x3]
        %v1313 = vld [vmem:[%s988 + $0x52] sm:$0xff]
        %v1314 = vld [vmem:[%s988 + $0x5a] sm:$0x3]
        %v1315 = vld [vmem:[%s988 + $0x62] sm:$0xff]
        %v1316 = vld [vmem:[%s988 + $0x6a] sm:$0x3]
        %v1317 = vld [vmem:[%s988 + $0x72] sm:$0xff]
        %v1318 = vld [vmem:[%s988 + $0x7a] sm:$0x3]
        %v1319 = vlaneseq
        %v1320 = vshrl.u32 %v1319, 7
        %v1321 = vsub.s32 7, %v1320
        %v1322 = vrot.slane %v533, %v1321
        %v1323 = vmul.f32 %v1303, %v1322
        %v1324 = vmul.f32 %v1304, %v1322
        %v1325 = vmul.f32 %v1305, %v1322
        %v1326 = vmul.f32 %v1306, %v1322
        %v1327 = vmul.f32 %v1307, %v1322
        %v1328 = vmul.f32 %v1308, %v1322
        %v1329 = vmul.f32 %v1309, %v1322
        %v1330 = vmul.f32 %v1310, %v1322
        %v1331 = vmul.f32 %v1311, %v1322
        %v1332 = vmul.f32 %v1312, %v1322
        %v1333 = vmul.f32 %v1313, %v1322
        %v1334 = vmul.f32 %v1314, %v1322
        %v1335 = vmul.f32 %v1315, %v1322
        %v1336 = vmul.f32 %v1316, %v1322
        %v1337 = vmul.f32 %v1317, %v1322
        %v1338 = vmul.f32 %v1318, %v1322
        %v1339 = vadd.f32 %v1287, %v1323
        %v1340 = vadd.f32 %v1288, %v1324
        %v1341 = vadd.f32 %v1289, %v1325
        %v1342 = vadd.f32 %v1290, %v1326
        %v1343 = vadd.f32 %v1291, %v1327
        %v1344 = vadd.f32 %v1292, %v1328
        %v1345 = vadd.f32 %v1293, %v1329
        %v1346 = vadd.f32 %v1294, %v1330
        %v1347 = vadd.f32 %v1295, %v1331
        %v1348 = vadd.f32 %v1296, %v1332
        %v1349 = vadd.f32 %v1297, %v1333
        %v1350 = vadd.f32 %v1298, %v1334
        %v1351 = vadd.f32 %v1299, %v1335
        %v1352 = vadd.f32 %v1300, %v1336
        %v1353 = vadd.f32 %v1301, %v1337
        %v1354 = vadd.f32 %v1302, %v1338
        %v1355 = vld [vmem:[%s1041 + $0x2] sm:$0xff]
        %v1356 = vld [vmem:[%s1041 + $0xa] sm:$0x3]
        %v1357 = vld [vmem:[%s1041 + $0x12] sm:$0xff]
        %v1358 = vld [vmem:[%s1041 + $0x1a] sm:$0x3]
        %v1359 = vld [vmem:[%s1041 + $0x22] sm:$0xff]
        %v1360 = vld [vmem:[%s1041 + $0x2a] sm:$0x3]
        %v1361 = vld [vmem:[%s1041 + $0x32] sm:$0xff]
        %v1362 = vld [vmem:[%s1041 + $0x3a] sm:$0x3]
        %v1363 = vld [vmem:[%s1041 + $0x42] sm:$0xff]
        %v1364 = vld [vmem:[%s1041 + $0x4a] sm:$0x3]
        %v1365 = vld [vmem:[%s1041 + $0x52] sm:$0xff]
        %v1366 = vld [vmem:[%s1041 + $0x5a] sm:$0x3]
        %v1367 = vld [vmem:[%s1041 + $0x62] sm:$0xff]
        %v1368 = vld [vmem:[%s1041 + $0x6a] sm:$0x3]
        %v1369 = vld [vmem:[%s1041 + $0x72] sm:$0xff]
        %v1370 = vld [vmem:[%s1041 + $0x7a] sm:$0x3]
        %v1371 = vlaneseq
        %v1372 = vshrl.u32 %v1371, 7
        %v1373 = vsub.s32 0, %v1372
        %v1374 = vrot.slane %v534, %v1373
        %v1375 = vmul.f32 %v1355, %v1374
        %v1376 = vmul.f32 %v1356, %v1374
        %v1377 = vmul.f32 %v1357, %v1374
        %v1378 = vmul.f32 %v1358, %v1374
        %v1379 = vmul.f32 %v1359, %v1374
        %v1380 = vmul.f32 %v1360, %v1374
        %v1381 = vmul.f32 %v1361, %v1374
        %v1382 = vmul.f32 %v1362, %v1374
        %v1383 = vmul.f32 %v1363, %v1374
        %v1384 = vmul.f32 %v1364, %v1374
        %v1385 = vmul.f32 %v1365, %v1374
        %v1386 = vmul.f32 %v1366, %v1374
        %v1387 = vmul.f32 %v1367, %v1374
        %v1388 = vmul.f32 %v1368, %v1374
        %v1389 = vmul.f32 %v1369, %v1374
        %v1390 = vmul.f32 %v1370, %v1374
        %v1391 = vadd.f32 %v1339, %v1375
        %v1392 = vadd.f32 %v1340, %v1376
        %v1393 = vadd.f32 %v1341, %v1377
        %v1394 = vadd.f32 %v1342, %v1378
        %v1395 = vadd.f32 %v1343, %v1379
        %v1396 = vadd.f32 %v1344, %v1380
        %v1397 = vadd.f32 %v1345, %v1381
        %v1398 = vadd.f32 %v1346, %v1382
        %v1399 = vadd.f32 %v1347, %v1383
        %v1400 = vadd.f32 %v1348, %v1384
        %v1401 = vadd.f32 %v1349, %v1385
        %v1402 = vadd.f32 %v1350, %v1386
        %v1403 = vadd.f32 %v1351, %v1387
        %v1404 = vadd.f32 %v1352, %v1388
        %v1405 = vadd.f32 %v1353, %v1389
        %v1406 = vadd.f32 %v1354, %v1390
        %v1407 = vld [vmem:[%s1094 + $0x2] sm:$0xff]
        %v1408 = vld [vmem:[%s1094 + $0xa] sm:$0x3]
        %v1409 = vld [vmem:[%s1094 + $0x12] sm:$0xff]
        %v1410 = vld [vmem:[%s1094 + $0x1a] sm:$0x3]
        %v1411 = vld [vmem:[%s1094 + $0x22] sm:$0xff]
        %v1412 = vld [vmem:[%s1094 + $0x2a] sm:$0x3]
        %v1413 = vld [vmem:[%s1094 + $0x32] sm:$0xff]
        %v1414 = vld [vmem:[%s1094 + $0x3a] sm:$0x3]
        %v1415 = vld [vmem:[%s1094 + $0x42] sm:$0xff]
        %v1416 = vld [vmem:[%s1094 + $0x4a] sm:$0x3]
        %v1417 = vld [vmem:[%s1094 + $0x52] sm:$0xff]
        %v1418 = vld [vmem:[%s1094 + $0x5a] sm:$0x3]
        %v1419 = vld [vmem:[%s1094 + $0x62] sm:$0xff]
        %v1420 = vld [vmem:[%s1094 + $0x6a] sm:$0x3]
        %v1421 = vld [vmem:[%s1094 + $0x72] sm:$0xff]
        %v1422 = vld [vmem:[%s1094 + $0x7a] sm:$0x3]
        %v1423 = vlaneseq
        %v1424 = vshrl.u32 %v1423, 7
        %v1425 = vsub.s32 1, %v1424
        %v1426 = vrot.slane %v534, %v1425
        %v1427 = vmul.f32 %v1407, %v1426
        %v1428 = vmul.f32 %v1408, %v1426
        %v1429 = vmul.f32 %v1409, %v1426
        %v1430 = vmul.f32 %v1410, %v1426
        %v1431 = vmul.f32 %v1411, %v1426
        %v1432 = vmul.f32 %v1412, %v1426
        %v1433 = vmul.f32 %v1413, %v1426
        %v1434 = vmul.f32 %v1414, %v1426
        %v1435 = vmul.f32 %v1415, %v1426
        %v1436 = vmul.f32 %v1416, %v1426
        %v1437 = vmul.f32 %v1417, %v1426
        %v1438 = vmul.f32 %v1418, %v1426
        %v1439 = vmul.f32 %v1419, %v1426
        %v1440 = vmul.f32 %v1420, %v1426
        %v1441 = vmul.f32 %v1421, %v1426
        %v1442 = vmul.f32 %v1422, %v1426
        %v1443 = vadd.f32 %v1391, %v1427
        %v1444 = vadd.f32 %v1392, %v1428
        %v1445 = vadd.f32 %v1393, %v1429
        %v1446 = vadd.f32 %v1394, %v1430
        %v1447 = vadd.f32 %v1395, %v1431
        %v1448 = vadd.f32 %v1396, %v1432
        %v1449 = vadd.f32 %v1397, %v1433
        %v1450 = vadd.f32 %v1398, %v1434
        %v1451 = vadd.f32 %v1399, %v1435
        %v1452 = vadd.f32 %v1400, %v1436
        %v1453 = vadd.f32 %v1401, %v1437
        %v1454 = vadd.f32 %v1402, %v1438
        %v1455 = vadd.f32 %v1403, %v1439
        %v1456 = vadd.f32 %v1404, %v1440
        %v1457 = vadd.f32 %v1405, %v1441
        %v1458 = vadd.f32 %v1406, %v1442
        %s1459 = scalar_lea.vmem %s521, 32
        %v1460 = vld [vmem:[%s1459] sm:$0xff]
        %v1461 = vld [vmem:[%s1459 + $0x8] sm:$0x3]
        %v1462 = vld [vmem:[%s1459 + $0x10] sm:$0xff]
        %v1463 = vld [vmem:[%s1459 + $0x18] sm:$0x3]
        %v1464 = vld [vmem:[%s1459 + $0x20] sm:$0xff]
        %v1465 = vld [vmem:[%s1459 + $0x28] sm:$0x3]
        %v1466 = vld [vmem:[%s1459 + $0x30] sm:$0xff]
        %v1467 = vld [vmem:[%s1459 + $0x38] sm:$0x3]
        %v1468 = vld [vmem:[%s1459 + $0x40] sm:$0xff]
        %v1469 = vld [vmem:[%s1459 + $0x48] sm:$0x3]
        %v1470 = vld [vmem:[%s1459 + $0x50] sm:$0xff]
        %v1471 = vld [vmem:[%s1459 + $0x58] sm:$0x3]
        %v1472 = vld [vmem:[%s1459 + $0x60] sm:$0xff]
        %v1473 = vld [vmem:[%s1459 + $0x68] sm:$0x3]
        %v1474 = vld [vmem:[%s1459 + $0x70] sm:$0xff]
        %v1475 = vld [vmem:[%s1459 + $0x78] sm:$0x3]
        %v1476 = vlaneseq
        %v1477 = vshrl.u32 %v1476, 7
        %v1478 = vsub.s32 2, %v1477
        %v1479 = vrot.slane %v534, %v1478
        %v1480 = vmul.f32 %v1460, %v1479
        %v1481 = vmul.f32 %v1461, %v1479
        %v1482 = vmul.f32 %v1462, %v1479
        %v1483 = vmul.f32 %v1463, %v1479
        %v1484 = vmul.f32 %v1464, %v1479
        %v1485 = vmul.f32 %v1465, %v1479
        %v1486 = vmul.f32 %v1466, %v1479
        %v1487 = vmul.f32 %v1467, %v1479
        %v1488 = vmul.f32 %v1468, %v1479
        %v1489 = vmul.f32 %v1469, %v1479
        %v1490 = vmul.f32 %v1470, %v1479
        %v1491 = vmul.f32 %v1471, %v1479
        %v1492 = vmul.f32 %v1472, %v1479
        %v1493 = vmul.f32 %v1473, %v1479
        %v1494 = vmul.f32 %v1474, %v1479
        %v1495 = vmul.f32 %v1475, %v1479
        %v1496 = vadd.f32 %v1443, %v1480
        %v1497 = vadd.f32 %v1444, %v1481
        %v1498 = vadd.f32 %v1445, %v1482
        %v1499 = vadd.f32 %v1446, %v1483
        %v1500 = vadd.f32 %v1447, %v1484
        %v1501 = vadd.f32 %v1448, %v1485
        %v1502 = vadd.f32 %v1449, %v1486
        %v1503 = vadd.f32 %v1450, %v1487
        %v1504 = vadd.f32 %v1451, %v1488
        %v1505 = vadd.f32 %v1452, %v1489
        %v1506 = vadd.f32 %v1453, %v1490
        %v1507 = vadd.f32 %v1454, %v1491
        %v1508 = vadd.f32 %v1455, %v1492
        %v1509 = vadd.f32 %v1456, %v1493
        %v1510 = vadd.f32 %v1457, %v1494
        %v1511 = vadd.f32 %v1458, %v1495
        %s1512 = scalar_lea.vmem %s526, 32
        %v1513 = vld [vmem:[%s1512] sm:$0xff]
        %v1514 = vld [vmem:[%s1512 + $0x8] sm:$0x3]
        %v1515 = vld [vmem:[%s1512 + $0x10] sm:$0xff]
        %v1516 = vld [vmem:[%s1512 + $0x18] sm:$0x3]
        %v1517 = vld [vmem:[%s1512 + $0x20] sm:$0xff]
        %v1518 = vld [vmem:[%s1512 + $0x28] sm:$0x3]
        %v1519 = vld [vmem:[%s1512 + $0x30] sm:$0xff]
        %v1520 = vld [vmem:[%s1512 + $0x38] sm:$0x3]
        %v1521 = vld [vmem:[%s1512 + $0x40] sm:$0xff]
        %v1522 = vld [vmem:[%s1512 + $0x48] sm:$0x3]
        %v1523 = vld [vmem:[%s1512 + $0x50] sm:$0xff]
        %v1524 = vld [vmem:[%s1512 + $0x58] sm:$0x3]
        %v1525 = vld [vmem:[%s1512 + $0x60] sm:$0xff]
        %v1526 = vld [vmem:[%s1512 + $0x68] sm:$0x3]
        %v1527 = vld [vmem:[%s1512 + $0x70] sm:$0xff]
        %v1528 = vld [vmem:[%s1512 + $0x78] sm:$0x3]
        %v1529 = vlaneseq
        %v1530 = vshrl.u32 %v1529, 7
        %v1531 = vsub.s32 3, %v1530
        %v1532 = vrot.slane %v534, %v1531
        %v1533 = vmul.f32 %v1513, %v1532
        %v1534 = vmul.f32 %v1514, %v1532
        %v1535 = vmul.f32 %v1515, %v1532
        %v1536 = vmul.f32 %v1516, %v1532
        %v1537 = vmul.f32 %v1517, %v1532
        %v1538 = vmul.f32 %v1518, %v1532
        %v1539 = vmul.f32 %v1519, %v1532
        %v1540 = vmul.f32 %v1520, %v1532
        %v1541 = vmul.f32 %v1521, %v1532
        %v1542 = vmul.f32 %v1522, %v1532
        %v1543 = vmul.f32 %v1523, %v1532
        %v1544 = vmul.f32 %v1524, %v1532
        %v1545 = vmul.f32 %v1525, %v1532
        %v1546 = vmul.f32 %v1526, %v1532
        %v1547 = vmul.f32 %v1527, %v1532
        %v1548 = vmul.f32 %v1528, %v1532
        %v1549 = vadd.f32 %v1496, %v1533
        %v1550 = vadd.f32 %v1497, %v1534
        %v1551 = vadd.f32 %v1498, %v1535
        %v1552 = vadd.f32 %v1499, %v1536
        %v1553 = vadd.f32 %v1500, %v1537
        %v1554 = vadd.f32 %v1501, %v1538
        %v1555 = vadd.f32 %v1502, %v1539
        %v1556 = vadd.f32 %v1503, %v1540
        %v1557 = vadd.f32 %v1504, %v1541
        %v1558 = vadd.f32 %v1505, %v1542
        %v1559 = vadd.f32 %v1506, %v1543
        %v1560 = vadd.f32 %v1507, %v1544
        %v1561 = vadd.f32 %v1508, %v1545
        %v1562 = vadd.f32 %v1509, %v1546
        %v1563 = vadd.f32 %v1510, %v1547
        %v1564 = vadd.f32 %v1511, %v1548
        %s1565 = scalar_lea.vmem %s531, 32
        %v1566 = vld [vmem:[%s1565] sm:$0xff]
        %v1567 = vld [vmem:[%s1565 + $0x8] sm:$0x3]
        %v1568 = vld [vmem:[%s1565 + $0x10] sm:$0xff]
        %v1569 = vld [vmem:[%s1565 + $0x18] sm:$0x3]
        %v1570 = vld [vmem:[%s1565 + $0x20] sm:$0xff]
        %v1571 = vld [vmem:[%s1565 + $0x28] sm:$0x3]
        %v1572 = vld [vmem:[%s1565 + $0x30] sm:$0xff]
        %v1573 = vld [vmem:[%s1565 + $0x38] sm:$0x3]
        %v1574 = vld [vmem:[%s1565 + $0x40] sm:$0xff]
        %v1575 = vld [vmem:[%s1565 + $0x48] sm:$0x3]
        %v1576 = vld [vmem:[%s1565 + $0x50] sm:$0xff]
        %v1577 = vld [vmem:[%s1565 + $0x58] sm:$0x3]
        %v1578 = vld [vmem:[%s1565 + $0x60] sm:$0xff]
        %v1579 = vld [vmem:[%s1565 + $0x68] sm:$0x3]
        %v1580 = vld [vmem:[%s1565 + $0x70] sm:$0xff]
        %v1581 = vld [vmem:[%s1565 + $0x78] sm:$0x3]
        %v1582 = vlaneseq
        %v1583 = vshrl.u32 %v1582, 7
        %v1584 = vsub.s32 4, %v1583
        %v1585 = vrot.slane %v534, %v1584
        %v1586 = vmul.f32 %v1566, %v1585
        %v1587 = vmul.f32 %v1567, %v1585
        %v1588 = vmul.f32 %v1568, %v1585
        %v1589 = vmul.f32 %v1569, %v1585
        %v1590 = vmul.f32 %v1570, %v1585
        %v1591 = vmul.f32 %v1571, %v1585
        %v1592 = vmul.f32 %v1572, %v1585
        %v1593 = vmul.f32 %v1573, %v1585
        %v1594 = vmul.f32 %v1574, %v1585
        %v1595 = vmul.f32 %v1575, %v1585
        %v1596 = vmul.f32 %v1576, %v1585
        %v1597 = vmul.f32 %v1577, %v1585
        %v1598 = vmul.f32 %v1578, %v1585
        %v1599 = vmul.f32 %v1579, %v1585
        %v1600 = vmul.f32 %v1580, %v1585
        %v1601 = vmul.f32 %v1581, %v1585
        %v1602 = vadd.f32 %v1549, %v1586
        %v1603 = vadd.f32 %v1550, %v1587
        %v1604 = vadd.f32 %v1551, %v1588
        %v1605 = vadd.f32 %v1552, %v1589
        %v1606 = vadd.f32 %v1553, %v1590
        %v1607 = vadd.f32 %v1554, %v1591
        %v1608 = vadd.f32 %v1555, %v1592
        %v1609 = vadd.f32 %v1556, %v1593
        %v1610 = vadd.f32 %v1557, %v1594
        %v1611 = vadd.f32 %v1558, %v1595
        %v1612 = vadd.f32 %v1559, %v1596
        %v1613 = vadd.f32 %v1560, %v1597
        %v1614 = vadd.f32 %v1561, %v1598
        %v1615 = vadd.f32 %v1562, %v1599
        %v1616 = vadd.f32 %v1563, %v1600
        %v1617 = vadd.f32 %v1564, %v1601
        %v1618 = vld [vmem:[%s1459 + $0x1] sm:$0xff]
        %v1619 = vld [vmem:[%s1459 + $0x9] sm:$0x3]
        %v1620 = vld [vmem:[%s1459 + $0x11] sm:$0xff]
        %v1621 = vld [vmem:[%s1459 + $0x19] sm:$0x3]
        %v1622 = vld [vmem:[%s1459 + $0x21] sm:$0xff]
        %v1623 = vld [vmem:[%s1459 + $0x29] sm:$0x3]
        %v1624 = vld [vmem:[%s1459 + $0x31] sm:$0xff]
        %v1625 = vld [vmem:[%s1459 + $0x39] sm:$0x3]
        %v1626 = vld [vmem:[%s1459 + $0x41] sm:$0xff]
        %v1627 = vld [vmem:[%s1459 + $0x49] sm:$0x3]
        %v1628 = vld [vmem:[%s1459 + $0x51] sm:$0xff]
        %v1629 = vld [vmem:[%s1459 + $0x59] sm:$0x3]
        %v1630 = vld [vmem:[%s1459 + $0x61] sm:$0xff]
        %v1631 = vld [vmem:[%s1459 + $0x69] sm:$0x3]
        %v1632 = vld [vmem:[%s1459 + $0x71] sm:$0xff]
        %v1633 = vld [vmem:[%s1459 + $0x79] sm:$0x3]
        %v1634 = vlaneseq
        %v1635 = vshrl.u32 %v1634, 7
        %v1636 = vsub.s32 5, %v1635
        %v1637 = vrot.slane %v534, %v1636
        %v1638 = vmul.f32 %v1618, %v1637
        %v1639 = vmul.f32 %v1619, %v1637
        %v1640 = vmul.f32 %v1620, %v1637
        %v1641 = vmul.f32 %v1621, %v1637
        %v1642 = vmul.f32 %v1622, %v1637
        %v1643 = vmul.f32 %v1623, %v1637
        %v1644 = vmul.f32 %v1624, %v1637
        %v1645 = vmul.f32 %v1625, %v1637
        %v1646 = vmul.f32 %v1626, %v1637
        %v1647 = vmul.f32 %v1627, %v1637
        %v1648 = vmul.f32 %v1628, %v1637
        %v1649 = vmul.f32 %v1629, %v1637
        %v1650 = vmul.f32 %v1630, %v1637
        %v1651 = vmul.f32 %v1631, %v1637
        %v1652 = vmul.f32 %v1632, %v1637
        %v1653 = vmul.f32 %v1633, %v1637
        %v1654 = vadd.f32 %v1602, %v1638
        %v1655 = vadd.f32 %v1603, %v1639
        %v1656 = vadd.f32 %v1604, %v1640
        %v1657 = vadd.f32 %v1605, %v1641
        %v1658 = vadd.f32 %v1606, %v1642
        %v1659 = vadd.f32 %v1607, %v1643
        %v1660 = vadd.f32 %v1608, %v1644
        %v1661 = vadd.f32 %v1609, %v1645
        %v1662 = vadd.f32 %v1610, %v1646
        %v1663 = vadd.f32 %v1611, %v1647
        %v1664 = vadd.f32 %v1612, %v1648
        %v1665 = vadd.f32 %v1613, %v1649
        %v1666 = vadd.f32 %v1614, %v1650
        %v1667 = vadd.f32 %v1615, %v1651
        %v1668 = vadd.f32 %v1616, %v1652
        %v1669 = vadd.f32 %v1617, %v1653
        %v1670 = vld [vmem:[%s1512 + $0x1] sm:$0xff]
        %v1671 = vld [vmem:[%s1512 + $0x9] sm:$0x3]
        %v1672 = vld [vmem:[%s1512 + $0x11] sm:$0xff]
        %v1673 = vld [vmem:[%s1512 + $0x19] sm:$0x3]
        %v1674 = vld [vmem:[%s1512 + $0x21] sm:$0xff]
        %v1675 = vld [vmem:[%s1512 + $0x29] sm:$0x3]
        %v1676 = vld [vmem:[%s1512 + $0x31] sm:$0xff]
        %v1677 = vld [vmem:[%s1512 + $0x39] sm:$0x3]
        %v1678 = vld [vmem:[%s1512 + $0x41] sm:$0xff]
        %v1679 = vld [vmem:[%s1512 + $0x49] sm:$0x3]
        %v1680 = vld [vmem:[%s1512 + $0x51] sm:$0xff]
        %v1681 = vld [vmem:[%s1512 + $0x59] sm:$0x3]
        %v1682 = vld [vmem:[%s1512 + $0x61] sm:$0xff]
        %v1683 = vld [vmem:[%s1512 + $0x69] sm:$0x3]
        %v1684 = vld [vmem:[%s1512 + $0x71] sm:$0xff]
        %v1685 = vld [vmem:[%s1512 + $0x79] sm:$0x3]
        %v1686 = vlaneseq
        %v1687 = vshrl.u32 %v1686, 7
        %v1688 = vsub.s32 6, %v1687
        %v1689 = vrot.slane %v534, %v1688
        %v1690 = vmul.f32 %v1670, %v1689
        %v1691 = vmul.f32 %v1671, %v1689
        %v1692 = vmul.f32 %v1672, %v1689
        %v1693 = vmul.f32 %v1673, %v1689
        %v1694 = vmul.f32 %v1674, %v1689
        %v1695 = vmul.f32 %v1675, %v1689
        %v1696 = vmul.f32 %v1676, %v1689
        %v1697 = vmul.f32 %v1677, %v1689
        %v1698 = vmul.f32 %v1678, %v1689
        %v1699 = vmul.f32 %v1679, %v1689
        %v1700 = vmul.f32 %v1680, %v1689
        %v1701 = vmul.f32 %v1681, %v1689
        %v1702 = vmul.f32 %v1682, %v1689
        %v1703 = vmul.f32 %v1683, %v1689
        %v1704 = vmul.f32 %v1684, %v1689
        %v1705 = vmul.f32 %v1685, %v1689
        %v1706 = vadd.f32 %v1654, %v1690
        %v1707 = vadd.f32 %v1655, %v1691
        %v1708 = vadd.f32 %v1656, %v1692
        %v1709 = vadd.f32 %v1657, %v1693
        %v1710 = vadd.f32 %v1658, %v1694
        %v1711 = vadd.f32 %v1659, %v1695
        %v1712 = vadd.f32 %v1660, %v1696
        %v1713 = vadd.f32 %v1661, %v1697
        %v1714 = vadd.f32 %v1662, %v1698
        %v1715 = vadd.f32 %v1663, %v1699
        %v1716 = vadd.f32 %v1664, %v1700
        %v1717 = vadd.f32 %v1665, %v1701
        %v1718 = vadd.f32 %v1666, %v1702
        %v1719 = vadd.f32 %v1667, %v1703
        %v1720 = vadd.f32 %v1668, %v1704
        %v1721 = vadd.f32 %v1669, %v1705
        %v1722 = vld [vmem:[%s1565 + $0x1] sm:$0xff]
        %v1723 = vld [vmem:[%s1565 + $0x9] sm:$0x3]
        %v1724 = vld [vmem:[%s1565 + $0x11] sm:$0xff]
        %v1725 = vld [vmem:[%s1565 + $0x19] sm:$0x3]
        %v1726 = vld [vmem:[%s1565 + $0x21] sm:$0xff]
        %v1727 = vld [vmem:[%s1565 + $0x29] sm:$0x3]
        %v1728 = vld [vmem:[%s1565 + $0x31] sm:$0xff]
        %v1729 = vld [vmem:[%s1565 + $0x39] sm:$0x3]
        %v1730 = vld [vmem:[%s1565 + $0x41] sm:$0xff]
        %v1731 = vld [vmem:[%s1565 + $0x49] sm:$0x3]
        %v1732 = vld [vmem:[%s1565 + $0x51] sm:$0xff]
        %v1733 = vld [vmem:[%s1565 + $0x59] sm:$0x3]
        %v1734 = vld [vmem:[%s1565 + $0x61] sm:$0xff]
        %v1735 = vld [vmem:[%s1565 + $0x69] sm:$0x3]
        %v1736 = vld [vmem:[%s1565 + $0x71] sm:$0xff]
        %v1737 = vld [vmem:[%s1565 + $0x79] sm:$0x3]
        %v1738 = vlaneseq
        %v1739 = vshrl.u32 %v1738, 7
        %v1740 = vsub.s32 7, %v1739
        %v1741 = vrot.slane %v534, %v1740
        %v1742 = vmul.f32 %v1722, %v1741
        %v1743 = vmul.f32 %v1723, %v1741
        %v1744 = vmul.f32 %v1724, %v1741
        %v1745 = vmul.f32 %v1725, %v1741
        %v1746 = vmul.f32 %v1726, %v1741
        %v1747 = vmul.f32 %v1727, %v1741
        %v1748 = vmul.f32 %v1728, %v1741
        %v1749 = vmul.f32 %v1729, %v1741
        %v1750 = vmul.f32 %v1730, %v1741
        %v1751 = vmul.f32 %v1731, %v1741
        %v1752 = vmul.f32 %v1732, %v1741
        %v1753 = vmul.f32 %v1733, %v1741
        %v1754 = vmul.f32 %v1734, %v1741
        %v1755 = vmul.f32 %v1735, %v1741
        %v1756 = vmul.f32 %v1736, %v1741
        %v1757 = vmul.f32 %v1737, %v1741
        %v1758 = vadd.f32 %v1706, %v1742
        %v1759 = vadd.f32 %v1707, %v1743
        %v1760 = vadd.f32 %v1708, %v1744
        %v1761 = vadd.f32 %v1709, %v1745
        %v1762 = vadd.f32 %v1710, %v1746
        %v1763 = vadd.f32 %v1711, %v1747
        %v1764 = vadd.f32 %v1712, %v1748
        %v1765 = vadd.f32 %v1713, %v1749
        %v1766 = vadd.f32 %v1714, %v1750
        %v1767 = vadd.f32 %v1715, %v1751
        %v1768 = vadd.f32 %v1716, %v1752
        %v1769 = vadd.f32 %v1717, %v1753
        %v1770 = vadd.f32 %v1718, %v1754
        %v1771 = vadd.f32 %v1719, %v1755
        %v1772 = vadd.f32 %v1720, %v1756
        %v1773 = vadd.f32 %v1721, %v1757
        %v1774 = vld [vmem:[%s1459 + $0x2] sm:$0xff]
        %v1775 = vld [vmem:[%s1459 + $0xa] sm:$0x3]
        %v1776 = vld [vmem:[%s1459 + $0x12] sm:$0xff]
        %v1777 = vld [vmem:[%s1459 + $0x1a] sm:$0x3]
        %v1778 = vld [vmem:[%s1459 + $0x22] sm:$0xff]
        %v1779 = vld [vmem:[%s1459 + $0x2a] sm:$0x3]
        %v1780 = vld [vmem:[%s1459 + $0x32] sm:$0xff]
        %v1781 = vld [vmem:[%s1459 + $0x3a] sm:$0x3]
        %v1782 = vld [vmem:[%s1459 + $0x42] sm:$0xff]
        %v1783 = vld [vmem:[%s1459 + $0x4a] sm:$0x3]
        %v1784 = vld [vmem:[%s1459 + $0x52] sm:$0xff]
        %v1785 = vld [vmem:[%s1459 + $0x5a] sm:$0x3]
        %v1786 = vld [vmem:[%s1459 + $0x62] sm:$0xff]
        %v1787 = vld [vmem:[%s1459 + $0x6a] sm:$0x3]
        %v1788 = vld [vmem:[%s1459 + $0x72] sm:$0xff]
        %v1789 = vld [vmem:[%s1459 + $0x7a] sm:$0x3]
        %v1790 = vlaneseq
        %v1791 = vshrl.u32 %v1790, 7
        %v1792 = vsub.s32 0, %v1791
        %v1793 = vrot.slane %v535, %v1792
        %v1794 = vmul.f32 %v1774, %v1793
        %v1795 = vmul.f32 %v1775, %v1793
        %v1796 = vmul.f32 %v1776, %v1793
        %v1797 = vmul.f32 %v1777, %v1793
        %v1798 = vmul.f32 %v1778, %v1793
        %v1799 = vmul.f32 %v1779, %v1793
        %v1800 = vmul.f32 %v1780, %v1793
        %v1801 = vmul.f32 %v1781, %v1793
        %v1802 = vmul.f32 %v1782, %v1793
        %v1803 = vmul.f32 %v1783, %v1793
        %v1804 = vmul.f32 %v1784, %v1793
        %v1805 = vmul.f32 %v1785, %v1793
        %v1806 = vmul.f32 %v1786, %v1793
        %v1807 = vmul.f32 %v1787, %v1793
        %v1808 = vmul.f32 %v1788, %v1793
        %v1809 = vmul.f32 %v1789, %v1793
        %v1810 = vadd.f32 %v1758, %v1794
        %v1811 = vadd.f32 %v1759, %v1795
        %v1812 = vadd.f32 %v1760, %v1796
        %v1813 = vadd.f32 %v1761, %v1797
        %v1814 = vadd.f32 %v1762, %v1798
        %v1815 = vadd.f32 %v1763, %v1799
        %v1816 = vadd.f32 %v1764, %v1800
        %v1817 = vadd.f32 %v1765, %v1801
        %v1818 = vadd.f32 %v1766, %v1802
        %v1819 = vadd.f32 %v1767, %v1803
        %v1820 = vadd.f32 %v1768, %v1804
        %v1821 = vadd.f32 %v1769, %v1805
        %v1822 = vadd.f32 %v1770, %v1806
        %v1823 = vadd.f32 %v1771, %v1807
        %v1824 = vadd.f32 %v1772, %v1808
        %v1825 = vadd.f32 %v1773, %v1809
        %v1826 = vld [vmem:[%s1512 + $0x2] sm:$0xff]
        %v1827 = vld [vmem:[%s1512 + $0xa] sm:$0x3]
        %v1828 = vld [vmem:[%s1512 + $0x12] sm:$0xff]
        %v1829 = vld [vmem:[%s1512 + $0x1a] sm:$0x3]
        %v1830 = vld [vmem:[%s1512 + $0x22] sm:$0xff]
        %v1831 = vld [vmem:[%s1512 + $0x2a] sm:$0x3]
        %v1832 = vld [vmem:[%s1512 + $0x32] sm:$0xff]
        %v1833 = vld [vmem:[%s1512 + $0x3a] sm:$0x3]
        %v1834 = vld [vmem:[%s1512 + $0x42] sm:$0xff]
        %v1835 = vld [vmem:[%s1512 + $0x4a] sm:$0x3]
        %v1836 = vld [vmem:[%s1512 + $0x52] sm:$0xff]
        %v1837 = vld [vmem:[%s1512 + $0x5a] sm:$0x3]
        %v1838 = vld [vmem:[%s1512 + $0x62] sm:$0xff]
        %v1839 = vld [vmem:[%s1512 + $0x6a] sm:$0x3]
        %v1840 = vld [vmem:[%s1512 + $0x72] sm:$0xff]
        %v1841 = vld [vmem:[%s1512 + $0x7a] sm:$0x3]
        %v1842 = vlaneseq
        %v1843 = vshrl.u32 %v1842, 7
        %v1844 = vsub.s32 1, %v1843
        %v1845 = vrot.slane %v535, %v1844
        %v1846 = vmul.f32 %v1826, %v1845
        %v1847 = vmul.f32 %v1827, %v1845
        %v1848 = vmul.f32 %v1828, %v1845
        %v1849 = vmul.f32 %v1829, %v1845
        %v1850 = vmul.f32 %v1830, %v1845
        %v1851 = vmul.f32 %v1831, %v1845
        %v1852 = vmul.f32 %v1832, %v1845
        %v1853 = vmul.f32 %v1833, %v1845
        %v1854 = vmul.f32 %v1834, %v1845
        %v1855 = vmul.f32 %v1835, %v1845
        %v1856 = vmul.f32 %v1836, %v1845
        %v1857 = vmul.f32 %v1837, %v1845
        %v1858 = vmul.f32 %v1838, %v1845
        %v1859 = vmul.f32 %v1839, %v1845
        %v1860 = vmul.f32 %v1840, %v1845
        %v1861 = vmul.f32 %v1841, %v1845
        %v1862 = vadd.f32 %v1810, %v1846
        %v1863 = vadd.f32 %v1811, %v1847
        %v1864 = vadd.f32 %v1812, %v1848
        %v1865 = vadd.f32 %v1813, %v1849
        %v1866 = vadd.f32 %v1814, %v1850
        %v1867 = vadd.f32 %v1815, %v1851
        %v1868 = vadd.f32 %v1816, %v1852
        %v1869 = vadd.f32 %v1817, %v1853
        %v1870 = vadd.f32 %v1818, %v1854
        %v1871 = vadd.f32 %v1819, %v1855
        %v1872 = vadd.f32 %v1820, %v1856
        %v1873 = vadd.f32 %v1821, %v1857
        %v1874 = vadd.f32 %v1822, %v1858
        %v1875 = vadd.f32 %v1823, %v1859
        %v1876 = vadd.f32 %v1824, %v1860
        %v1877 = vadd.f32 %v1825, %v1861
        %v1878 = vld [vmem:[%s1565 + $0x2] sm:$0xff]
        %v1879 = vld [vmem:[%s1565 + $0xa] sm:$0x3]
        %v1880 = vld [vmem:[%s1565 + $0x12] sm:$0xff]
        %v1881 = vld [vmem:[%s1565 + $0x1a] sm:$0x3]
        %v1882 = vld [vmem:[%s1565 + $0x22] sm:$0xff]
        %v1883 = vld [vmem:[%s1565 + $0x2a] sm:$0x3]
        %v1884 = vld [vmem:[%s1565 + $0x32] sm:$0xff]
        %v1885 = vld [vmem:[%s1565 + $0x3a] sm:$0x3]
        %v1886 = vld [vmem:[%s1565 + $0x42] sm:$0xff]
        %v1887 = vld [vmem:[%s1565 + $0x4a] sm:$0x3]
        %v1888 = vld [vmem:[%s1565 + $0x52] sm:$0xff]
        %v1889 = vld [vmem:[%s1565 + $0x5a] sm:$0x3]
        %v1890 = vld [vmem:[%s1565 + $0x62] sm:$0xff]
        %v1891 = vld [vmem:[%s1565 + $0x6a] sm:$0x3]
        %v1892 = vld [vmem:[%s1565 + $0x72] sm:$0xff]
        %v1893 = vld [vmem:[%s1565 + $0x7a] sm:$0x3]
        %v1894 = vlaneseq
        %v1895 = vshrl.u32 %v1894, 7
        %v1896 = vsub.s32 2, %v1895
        %v1897 = vrot.slane %v535, %v1896
        %v1898 = vmul.f32 %v1878, %v1897
        %v1899 = vmul.f32 %v1879, %v1897
        %v1900 = vmul.f32 %v1880, %v1897
        %v1901 = vmul.f32 %v1881, %v1897
        %v1902 = vmul.f32 %v1882, %v1897
        %v1903 = vmul.f32 %v1883, %v1897
        %v1904 = vmul.f32 %v1884, %v1897
        %v1905 = vmul.f32 %v1885, %v1897
        %v1906 = vmul.f32 %v1886, %v1897
        %v1907 = vmul.f32 %v1887, %v1897
        %v1908 = vmul.f32 %v1888, %v1897
        %v1909 = vmul.f32 %v1889, %v1897
        %v1910 = vmul.f32 %v1890, %v1897
        %v1911 = vmul.f32 %v1891, %v1897
        %v1912 = vmul.f32 %v1892, %v1897
        %v1913 = vmul.f32 %v1893, %v1897
        %v1914 = vadd.f32 %v1862, %v1898
        %v1915 = vadd.f32 %v1863, %v1899
        %v1916 = vadd.f32 %v1864, %v1900
        %v1917 = vadd.f32 %v1865, %v1901
        %v1918 = vadd.f32 %v1866, %v1902
        %v1919 = vadd.f32 %v1867, %v1903
        %v1920 = vadd.f32 %v1868, %v1904
        %v1921 = vadd.f32 %v1869, %v1905
        %v1922 = vadd.f32 %v1870, %v1906
        %v1923 = vadd.f32 %v1871, %v1907
        %v1924 = vadd.f32 %v1872, %v1908
        %v1925 = vadd.f32 %v1873, %v1909
        %v1926 = vadd.f32 %v1874, %v1910
        %v1927 = vadd.f32 %v1875, %v1911
        %v1928 = vadd.f32 %v1876, %v1912
        %v1929 = vadd.f32 %v1877, %v1913
        %v1930 = vld [vmem:[%s4] sm:$0x3]
        %v1931 = vlaneseq
        %v1932 = vshrl.u32 %v1931, 7
        %v1933 = vsub.s32 0, %v1932
        %v1934 = vrot.slane %v1930, %v1933
        %v1935 = vmul.f32 %v1914, %v1934
        %v1936 = vmul.f32 %v1915, %v1934
        %v1937 = vmul.f32 %v1916, %v1934
        %v1938 = vmul.f32 %v1917, %v1934
        %v1939 = vmul.f32 %v1918, %v1934
        %v1940 = vmul.f32 %v1919, %v1934
        %v1941 = vmul.f32 %v1920, %v1934
        %v1942 = vmul.f32 %v1921, %v1934
        %v1943 = vmul.f32 %v1922, %v1934
        %v1944 = vmul.f32 %v1923, %v1934
        %v1945 = vmul.f32 %v1924, %v1934
        %v1946 = vmul.f32 %v1925, %v1934
        %v1947 = vmul.f32 %v1926, %v1934
        %v1948 = vmul.f32 %v1927, %v1934
        %v1949 = vmul.f32 %v1928, %v1934
        %v1950 = vmul.f32 %v1929, %v1934
        %v1951 = vlaneseq
        %v1952 = vshrl.u32 %v1951, 7
        %v1953 = vsub.s32 1, %v1952
        %v1954 = vrot.slane %v1930, %v1953
        %v1955 = vadd.f32 %v1935, %v1954
        %v1956 = vadd.f32 %v1936, %v1954
        %v1957 = vadd.f32 %v1937, %v1954
        %v1958 = vadd.f32 %v1938, %v1954
        %v1959 = vadd.f32 %v1939, %v1954
        %v1960 = vadd.f32 %v1940, %v1954
        %v1961 = vadd.f32 %v1941, %v1954
        %v1962 = vadd.f32 %v1942, %v1954
        %v1963 = vadd.f32 %v1943, %v1954
        %v1964 = vadd.f32 %v1944, %v1954
        %v1965 = vadd.f32 %v1945, %v1954
        %v1966 = vadd.f32 %v1946, %v1954
        %v1967 = vadd.f32 %v1947, %v1954
        %v1968 = vadd.f32 %v1948, %v1954
        %v1969 = vadd.f32 %v1949, %v1954
        %v1970 = vadd.f32 %v1950, %v1954
        %v1971 = vxor.u32 %v1955, 2147483648
        %v1972 = vxor.u32 %v1956, 2147483648
        %v1973 = vxor.u32 %v1957, 2147483648
        %v1974 = vxor.u32 %v1958, 2147483648
        %v1975 = vxor.u32 %v1959, 2147483648
        %v1976 = vxor.u32 %v1960, 2147483648
        %v1977 = vxor.u32 %v1961, 2147483648
        %v1978 = vxor.u32 %v1962, 2147483648
        %v1979 = vxor.u32 %v1963, 2147483648
        %v1980 = vxor.u32 %v1964, 2147483648
        %v1981 = vxor.u32 %v1965, 2147483648
        %v1982 = vxor.u32 %v1966, 2147483648
        %v1983 = vxor.u32 %v1967, 2147483648
        %v1984 = vxor.u32 %v1968, 2147483648
        %v1985 = vxor.u32 %v1969, 2147483648
        %v1986 = vxor.u32 %v1970, 2147483648
        %v1987 = vmul.f32 %v1971, 1.442695
        %v1988 = vpow.pop %v1987
        %v1989 = vmul.f32 %v1972, 1.442695
        %v1990 = vpow.pop %v1989
        %v1991 = vmul.f32 %v1973, 1.442695
        %v1992 = vpow.pop %v1991
        %v1993 = vmul.f32 %v1974, 1.442695
        %v1994 = vpow.pop %v1993
        %v1995 = vmul.f32 %v1975, 1.442695
        %v1996 = vpow.pop %v1995
        %v1997 = vmul.f32 %v1976, 1.442695
        %v1998 = vpow.pop %v1997
        %v1999 = vmul.f32 %v1977, 1.442695
        %v2000 = vpow.pop %v1999
        %v2001 = vmul.f32 %v1978, 1.442695
        %v2002 = vpow.pop %v2001
        %v2003 = vmul.f32 %v1979, 1.442695
        %v2004 = vpow.pop %v2003
        %v2005 = vmul.f32 %v1980, 1.442695
        %v2006 = vpow.pop %v2005
        %v2007 = vmul.f32 %v1981, 1.442695
        %v2008 = vpow.pop %v2007
        %v2009 = vmul.f32 %v1982, 1.442695
        %v2010 = vpow.pop %v2009
        %v2011 = vmul.f32 %v1983, 1.442695
        %v2012 = vpow.pop %v2011
        %v2013 = vmul.f32 %v1984, 1.442695
        %v2014 = vpow.pop %v2013
        %v2015 = vmul.f32 %v1985, 1.442695
        %v2016 = vpow.pop %v2015
        %v2017 = vmul.f32 %v1986, 1.442695
        %v2018 = vpow.pop %v2017
        %v2019 = vadd.f32 %v1988, 1.0
        %v2020 = vadd.f32 %v1990, 1.0
        %v2021 = vadd.f32 %v1992, 1.0
        %v2022 = vadd.f32 %v1994, 1.0
        %v2023 = vadd.f32 %v1996, 1.0
        %v2024 = vadd.f32 %v1998, 1.0
        %v2025 = vadd.f32 %v2000, 1.0
        %v2026 = vadd.f32 %v2002, 1.0
        %v2027 = vadd.f32 %v2004, 1.0
        %v2028 = vadd.f32 %v2006, 1.0
        %v2029 = vadd.f32 %v2008, 1.0
        %v2030 = vadd.f32 %v2010, 1.0
        %v2031 = vadd.f32 %v2012, 1.0
        %v2032 = vadd.f32 %v2014, 1.0
        %v2033 = vadd.f32 %v2016, 1.0
        %v2034 = vadd.f32 %v2018, 1.0
        %v2035 = vrcp.pop %v2019
        %v2036 = vmul.f32 1.0, %v2035
        %v2037 = vrcp.pop %v2020
        %v2038 = vmul.f32 1.0, %v2037
        %v2039 = vrcp.pop %v2021
        %v2040 = vmul.f32 1.0, %v2039
        %v2041 = vrcp.pop %v2022
        %v2042 = vmul.f32 1.0, %v2041
        %v2043 = vrcp.pop %v2023
        %v2044 = vmul.f32 1.0, %v2043
        %v2045 = vrcp.pop %v2024
        %v2046 = vmul.f32 1.0, %v2045
        %v2047 = vrcp.pop %v2025
        %v2048 = vmul.f32 1.0, %v2047
        %v2049 = vrcp.pop %v2026
        %v2050 = vmul.f32 1.0, %v2049
        %v2051 = vrcp.pop %v2027
        %v2052 = vmul.f32 1.0, %v2051
        %v2053 = vrcp.pop %v2028
        %v2054 = vmul.f32 1.0, %v2053
        %v2055 = vrcp.pop %v2029
        %v2056 = vmul.f32 1.0, %v2055
        %v2057 = vrcp.pop %v2030
        %v2058 = vmul.f32 1.0, %v2057
        %v2059 = vrcp.pop %v2031
        %v2060 = vmul.f32 1.0, %v2059
        %v2061 = vrcp.pop %v2032
        %v2062 = vmul.f32 1.0, %v2061
        %v2063 = vrcp.pop %v2033
        %v2064 = vmul.f32 1.0, %v2063
        %v2065 = vrcp.pop %v2034
        %v2066 = vmul.f32 1.0, %v2065
        %v2067 = vmul.f32 %v1955, %v2036
        %v2068 = vmul.f32 %v1956, %v2038
        %v2069 = vmul.f32 %v1957, %v2040
        %v2070 = vmul.f32 %v1958, %v2042
        %v2071 = vmul.f32 %v1959, %v2044
        %v2072 = vmul.f32 %v1960, %v2046
        %v2073 = vmul.f32 %v1961, %v2048
        %v2074 = vmul.f32 %v1962, %v2050
        %v2075 = vmul.f32 %v1963, %v2052
        %v2076 = vmul.f32 %v1964, %v2054
        %v2077 = vmul.f32 %v1965, %v2056
        %v2078 = vmul.f32 %v1966, %v2058
        %v2079 = vmul.f32 %v1967, %v2060
        %v2080 = vmul.f32 %v1968, %v2062
        %v2081 = vmul.f32 %v1969, %v2064
        %v2082 = vmul.f32 %v1970, %v2066
        %v2083 = vlaneseq
        %v2084 = vshrl.u32 %v2083, 7
        %v2085 = vadd.s32 %v2084, 8
        %v2086 = vlaneseq
        %v2087 = vand.u32 %v2086, 127
        %vm2088 = vcmp.ge.s32.totalorder %v2084, 1
        %vm2089 = vcmp.ge.s32.totalorder %v2085, 1
        %vm2090 = vcmp.le.s32.totalorder %v2084, 8
        %vm2091 = vcmp.le.s32.totalorder %v2085, 8
        %vm2092 = vmand %vm2088, %vm2090
        %vm2093 = vmand %vm2089, %vm2091
        %vm2094 = vcmp.ge.s32.totalorder %v2087, 12
        %vm2095 = vmand %vm2092, %vm2094
        %vm2096 = vmand %vm2093, %vm2094
        %vm2097 = vcmp.lt.s32.totalorder %v2087, 108
        %vm2098 = vmand %vm2095, %vm2097
        %vm2099 = vmand %vm2096, %vm2097
        %v2100 = vsel %vm2098, 1, 0
        %v2101 = vsel %vm2099, 1, 0
        %vm2102 = vcmp.eq.s32.totalorder %v2100, 1
        %vm2103 = vcmp.eq.s32.totalorder %v2101, 1
        %v2104 = vsel %vm2102, %v2067, 0.0
        %v2105 = vsel %vm2103, %v2068, 0.0
        %v2106 = vsel %vm2102, %v2069, 0.0
        %v2107 = vsel %vm2103, %v2070, 0.0
        %v2108 = vsel %vm2102, %v2071, 0.0
        %v2109 = vsel %vm2103, %v2072, 0.0
        %v2110 = vsel %vm2102, %v2073, 0.0
        %v2111 = vsel %vm2103, %v2074, 0.0
        %v2112 = vsel %vm2102, %v2075, 0.0
        %v2113 = vsel %vm2103, %v2076, 0.0
        %v2114 = vsel %vm2102, %v2077, 0.0
        %v2115 = vsel %vm2103, %v2078, 0.0
        %v2116 = vsel %vm2102, %v2079, 0.0
        %v2117 = vsel %vm2103, %v2080, 0.0
        %v2118 = vsel %vm2102, %v2081, 0.0
        %v2119 = vsel %vm2103, %v2082, 0.0
        %v2120 = vld [vmem:[%s7] sm:$0xff]
        %v2121 = vld [vmem:[%s7 + $0x8] sm:$0xff]
        %v2122 = vld [vmem:[%s7 + $0x10] sm:$0xff]
        %v2123 = vld [vmem:[%s7 + $0x18] sm:$0xff]
        %v2124 = vld [vmem:[%s7 + $0x20] sm:$0xff]
        %v2125 = vld [vmem:[%s7 + $0x28] sm:$0xff]
        %v2126 = vld [vmem:[%s7 + $0x30] sm:$0xff]
        %v2127 = vld [vmem:[%s7 + $0x38] sm:$0xff]
        %v2128 = vld [vmem:[%s7 + $0x40] sm:$0xff]
        %v2129 = vld [vmem:[%s7 + $0x48] sm:$0xff]
        %v2130 = vld [vmem:[%s7 + $0x50] sm:$0xff]
        %v2131 = vld [vmem:[%s7 + $0x58] sm:$0xff]
        %v2132 = vld [vmem:[%s7 + $0x60] sm:$0xff]
        %v2133 = vld [vmem:[%s7 + $0x68] sm:$0xff]
        %v2134 = vld [vmem:[%s7 + $0x70] sm:$0xff]
        %vm2135 = vcmask 982016
        %v2136 = vsel %vm2135, %v2104, 0.0
        %v2137 = vsel %vm2135, %v2106, 0.0
        %v2138 = vadd.f32 %v2136, %v2137
        %v2139 = vsel %vm2135, %v2108, 0.0
        %v2140 = vadd.f32 %v2138, %v2139
        %v2141 = vsel %vm2135, %v2110, 0.0
        %v2142 = vadd.f32 %v2140, %v2141
        %v2143 = vsel %vm2135, %v2112, 0.0
        %v2144 = vadd.f32 %v2142, %v2143
        %v2145 = vsel %vm2135, %v2114, 0.0
        %v2146 = vadd.f32 %v2144, %v2145
        %v2147 = vsel %vm2135, %v2116, 0.0
        %v2148 = vadd.f32 %v2146, %v2147
        %v2149 = vsel %vm2135, %v2118, 0.0
        %v2150 = vadd.f32 %v2148, %v2149
        %vm2151 = vcmask 975872
        %v2152 = vsel %vm2151, %v2105, 0.0
        %v2153 = vsel %vm2151, %v2107, 0.0
        %v2154 = vadd.f32 %v2152, %v2153
        %v2155 = vsel %vm2151, %v2109, 0.0
        %v2156 = vadd.f32 %v2154, %v2155
        %v2157 = vsel %vm2151, %v2111, 0.0
        %v2158 = vadd.f32 %v2156, %v2157
        %v2159 = vsel %vm2151, %v2113, 0.0
        %v2160 = vadd.f32 %v2158, %v2159
        %v2161 = vsel %vm2151, %v2115, 0.0
        %v2162 = vadd.f32 %v2160, %v2161
        %v2163 = vsel %vm2151, %v2117, 0.0
        %v2164 = vadd.f32 %v2162, %v2163
        %v2165 = vsel %vm2151, %v2119, 0.0
        %v2166 = vadd.f32 %v2164, %v2165
        %v2167 = vsel %vm2135, %v2150, 0.0
        %v2168 = vsel %vm2151, %v2166, 0.0
        %v2169 = vadd.f32 %v2167, %v2168
        %v2170 = vrot.slane %v2169, 4
        %v2171 = vadd.f32 %v2169, %v2170
        %v2172 = vrot.slane %v2171, 2
        %v2173 = vadd.f32 %v2171, %v2172
        %v2174 = vrot.slane %v2173, 1
        %v2175 = vadd.f32 %v2173, %v2174
        %v2177 = vsel %vm2135, %v2175, 0
        %2179 = vmatprep.subr.mxu0 0.0
        %2180 = vmatpush1.msra.mxu0 0.0
        %2181 = vmatprep.subr.mxu0 0.0
        %2182 = vmatpush1.msra.mxu0 %v2134
        %2183 = vmatprep.subr.mxu0 0.0
        %2184 = vmatpush1.msra.mxu0 %v2133
        %2185 = vmatprep.subr.mxu0 0.0
        %2186 = vmatpush1.msra.mxu0 %v2132
        %2187 = vmatprep.subr.mxu0 0.0
        %2188 = vmatpush1.msra.mxu0 %v2131
        %2189 = vmatprep.subr.mxu0 0.0
        %2190 = vmatpush1.msra.mxu0 %v2130
        %2191 = vmatprep.subr.mxu0 0.0
        %2192 = vmatpush1.msra.mxu0 %v2129
        %2193 = vmatprep.subr.mxu0 0.0
        %2194 = vmatpush1.msra.mxu0 %v2128
        %2195 = vmatprep.subr.mxu0 0.0
        %2196 = vmatpush1.msra.mxu0 %v2127
        %2197 = vmatprep.subr.mxu0 0.0
        %2198 = vmatpush1.msra.mxu0 %v2126
        %2199 = vmatprep.subr.mxu0 0.0
        %2200 = vmatpush1.msra.mxu0 %v2125
        %2201 = vmatprep.subr.mxu0 0.0
        %2202 = vmatpush1.msra.mxu0 %v2124
        %2203 = vmatprep.subr.mxu0 0.0
        %2204 = vmatpush1.msra.mxu0 %v2123
        %2205 = vmatprep.subr.mxu0 0.0
        %2206 = vmatpush1.msra.mxu0 %v2122
        %2207 = vmatprep.subr.mxu0 0.0
        %2208 = vmatpush1.msra.mxu0 %v2121
        %2209 = vmatprep.subr.mxu0 0.0
        %2210 = vmatpush1.msra.mxu0 %v2120
        %2211 = vmatprep.subr.mxu0 0.0
        %2212 = vmatpush2.msra.mxu0 0.0
        %2213 = vmatprep.subr.mxu0 0.0
        %2214 = vmatpush2.msra.mxu0 0.0
        %2215 = vmatprep.subr.mxu0 0.0
        %2216 = vmatpush2.msra.mxu0 0.0
        %2217 = vmatprep.subr.mxu0 0.0
        %2218 = vmatpush2.msra.mxu0 0.0
        %2219 = vmatprep.subr.mxu0 0.0
        %2220 = vmatpush2.msra.mxu0 0.0
        %2221 = vmatprep.subr.mxu0 0.0
        %2222 = vmatpush2.msra.mxu0 0.0
        %2223 = vmatprep.subr.mxu0 0.0
        %2224 = vmatpush2.msra.mxu0 0.0
        %2225 = vmatprep.subr.mxu0 0.0
        %2226 = vmatpush2.msra.mxu0 0.0
        %2227 = vmatprep.subr.mxu0 0.0
        %2228 = vmatpush2.msra.mxu0 0.0
        %2229 = vmatprep.subr.mxu0 0.0
        %2230 = vmatpush2.msra.mxu0 0.0
        %2231 = vmatprep.subr.mxu0 0.0
        %2232 = vmatpush2.msra.mxu0 0.0
        %2233 = vmatprep.subr.mxu0 0.0
        %2234 = vmatpush2.msra.mxu0 0.0
        %2235 = vmatprep.subr.mxu0 0.0
        %2236 = vmatpush2.msra.mxu0 0.0
        %2237 = vmatprep.subr.mxu0 0.0
        %2238 = vmatpush2.msra.mxu0 0.0
        %2239 = vmatprep.subr.mxu0 0.0
        %2240 = vmatpush2.msra.mxu0 0.0
        %2241 = vmatprep.subr.mxu0 0.0
        %2242 = vmatpush2.msra.mxu0 0.0
        %2243 = vmatprep.mubr.f32.mxu0 0.0
        %2244 = vmatmul.mubr.f32.gmra.mxu0 %v2177
        %v2245 = vpop.f32.mrf.mxu0
        %v2246 = vadd.f32 0.0, %v2245
        %v2247 = vpop.f32.mrf.mxu0
        %2248 = vdwg.mxu0
        %v2249 = vmul.f32 %v2246, 0.001953125
        %vm2250 = vcmask 785408
        %2251 = vst.msk [vmem:[#allocation2] sm:$0xff] %vm2250, 0.0
        %vm2252 = vcmask 779264
        %2253 = vst.msk [vmem:[#allocation2 + $0x8] sm:$0x3] %vm2252, 0.0
        %s2254 = scalar_lea.vmem [#allocation2], 144
        %2255 = vst.msk [vmem:[%s2254] sm:$0xff] %vm2250, 0.0
        %2256 = vst.msk [vmem:[%s2254 + $0x8] sm:$0x3] %vm2252, 0.0
        %s2257 = scalar_lea.vmem [#allocation2], 16
        %2258 = vst.msk [vmem:[%s2257] sm:$0xff] %vm2250, %v2104
        %2259 = vst.msk [vmem:[%s2257 + $0x8] sm:$0x3] %vm2252, %v2105
        %2260 = vst.msk [vmem:[%s2257 + $0x10] sm:$0xff] %vm2250, %v2106
        %2261 = vst.msk [vmem:[%s2257 + $0x18] sm:$0x3] %vm2252, %v2107
        %2262 = vst.msk [vmem:[%s2257 + $0x20] sm:$0xff] %vm2250, %v2108
        %2263 = vst.msk [vmem:[%s2257 + $0x28] sm:$0x3] %vm2252, %v2109
        %2264 = vst.msk [vmem:[%s2257 + $0x30] sm:$0xff] %vm2250, %v2110
        %2265 = vst.msk [vmem:[%s2257 + $0x38] sm:$0x3] %vm2252, %v2111
        %2266 = vst.msk [vmem:[%s2257 + $0x40] sm:$0xff] %vm2250, %v2112
        %2267 = vst.msk [vmem:[%s2257 + $0x48] sm:$0x3] %vm2252, %v2113
        %2268 = vst.msk [vmem:[%s2257 + $0x50] sm:$0xff] %vm2250, %v2114
        %2269 = vst.msk [vmem:[%s2257 + $0x58] sm:$0x3] %vm2252, %v2115
        %2270 = vst.msk [vmem:[%s2257 + $0x60] sm:$0xff] %vm2250, %v2116
        %2271 = vst.msk [vmem:[%s2257 + $0x68] sm:$0x3] %vm2252, %v2117
        %2272 = vst.msk [vmem:[%s2257 + $0x70] sm:$0xff] %vm2250, %v2118
        %2273 = vst.msk [vmem:[%s2257 + $0x78] sm:$0x3] %vm2252, %v2119
        %2274 = vst.msk [vmem:[#allocation3] sm:$0xff] %vm2250, 0.0
        %2275 = vst.msk [vmem:[#allocation3 + $0x8] sm:$0x3] %vm2252, 0.0
        %s2276 = scalar_lea.vmem [#allocation3], 144
        %2277 = vst.msk [vmem:[%s2276] sm:$0xff] %vm2250, 0.0
        %2278 = vst.msk [vmem:[%s2276 + $0x8] sm:$0x3] %vm2252, 0.0
        %2295 = vrot.lane.b32.xlu0 %v2104, 116
        %v2296 = vpop.permute.xlu0 %2295
        %2297 = vrot.lane.b32.xlu0 %v2105, 116
        %v2298 = vpop.permute.xlu0 %2297
        %2299 = vrot.lane.b32.xlu0 %v2106, 116
        %v2300 = vpop.permute.xlu0 %2299
        %2301 = vrot.lane.b32.xlu0 %v2107, 116
        %v2302 = vpop.permute.xlu0 %2301
        %2303 = vrot.lane.b32.xlu0 %v2108, 116
        %v2304 = vpop.permute.xlu0 %2303
        %2305 = vrot.lane.b32.xlu0 %v2109, 116
        %v2306 = vpop.permute.xlu0 %2305
        %2307 = vrot.lane.b32.xlu0 %v2110, 116
        %v2308 = vpop.permute.xlu0 %2307
        %2309 = vrot.lane.b32.xlu0 %v2111, 116
        %v2310 = vpop.permute.xlu0 %2309
        %2311 = vrot.lane.b32.xlu0 %v2112, 116
        %v2312 = vpop.permute.xlu0 %2311
        %2313 = vrot.lane.b32.xlu0 %v2113, 116
        %v2314 = vpop.permute.xlu0 %2313
        %2315 = vrot.lane.b32.xlu0 %v2114, 116
        %v2316 = vpop.permute.xlu0 %2315
        %2317 = vrot.lane.b32.xlu0 %v2115, 116
        %v2318 = vpop.permute.xlu0 %2317
        %2319 = vrot.lane.b32.xlu0 %v2116, 116
        %v2320 = vpop.permute.xlu0 %2319
        %2321 = vrot.lane.b32.xlu0 %v2117, 116
        %v2322 = vpop.permute.xlu0 %2321
        %2323 = vrot.lane.b32.xlu0 %v2118, 116
        %v2324 = vpop.permute.xlu0 %2323
        %2325 = vrot.lane.b32.xlu0 %v2119, 116
        %v2326 = vpop.permute.xlu0 %2325
        %s2343 = scalar_lea.vmem [#allocation3], 16
        %2344 = vst.msk [vmem:[%s2343] sm:$0xff] %vm2250, %v2296
        %2345 = vst.msk [vmem:[%s2343 + $0x8] sm:$0x3] %vm2252, %v2298
        %2346 = vst.msk [vmem:[%s2343 + $0x10] sm:$0xff] %vm2250, %v2300
        %2347 = vst.msk [vmem:[%s2343 + $0x18] sm:$0x3] %vm2252, %v2302
        %2348 = vst.msk [vmem:[%s2343 + $0x20] sm:$0xff] %vm2250, %v2304
        %2349 = vst.msk [vmem:[%s2343 + $0x28] sm:$0x3] %vm2252, %v2306
        %2350 = vst.msk [vmem:[%s2343 + $0x30] sm:$0xff] %vm2250, %v2308
        %2351 = vst.msk [vmem:[%s2343 + $0x38] sm:$0x3] %vm2252, %v2310
        %2352 = vst.msk [vmem:[%s2343 + $0x40] sm:$0xff] %vm2250, %v2312
        %2353 = vst.msk [vmem:[%s2343 + $0x48] sm:$0x3] %vm2252, %v2314
        %2354 = vst.msk [vmem:[%s2343 + $0x50] sm:$0xff] %vm2250, %v2316
        %2355 = vst.msk [vmem:[%s2343 + $0x58] sm:$0x3] %vm2252, %v2318
        %2356 = vst.msk [vmem:[%s2343 + $0x60] sm:$0xff] %vm2250, %v2320
        %2357 = vst.msk [vmem:[%s2343 + $0x68] sm:$0x3] %vm2252, %v2322
        %2358 = vst.msk [vmem:[%s2343 + $0x70] sm:$0xff] %vm2250, %v2324
        %2359 = vst.msk [vmem:[%s2343 + $0x78] sm:$0x3] %vm2252, %v2326
        %2360 = vst.msk [vmem:[#allocation4] sm:$0xff] %vm2250, 0.0
        %2361 = vst.msk [vmem:[#allocation4 + $0x8] sm:$0x3] %vm2252, 0.0
        %s2362 = scalar_lea.vmem [#allocation4], 144
        %2363 = vst.msk [vmem:[%s2362] sm:$0xff] %vm2250, 0.0
        %2364 = vst.msk [vmem:[%s2362 + $0x8] sm:$0x3] %vm2252, 0.0
        %2365 = vrot.lane.b32.xlu0 %v2104, 104
        %v2366 = vpop.permute.xlu0 %2365
        %2367 = vrot.lane.b32.xlu0 %v2105, 104
        %v2368 = vpop.permute.xlu0 %2367
        %2369 = vrot.lane.b32.xlu0 %v2106, 104
        %v2370 = vpop.permute.xlu0 %2369
        %2371 = vrot.lane.b32.xlu0 %v2107, 104
        %v2372 = vpop.permute.xlu0 %2371
        %2373 = vrot.lane.b32.xlu0 %v2108, 104
        %v2374 = vpop.permute.xlu0 %2373
        %2375 = vrot.lane.b32.xlu0 %v2109, 104
        %v2376 = vpop.permute.xlu0 %2375
        %2377 = vrot.lane.b32.xlu0 %v2110, 104
        %v2378 = vpop.permute.xlu0 %2377
        %2379 = vrot.lane.b32.xlu0 %v2111, 104
        %v2380 = vpop.permute.xlu0 %2379
        %2381 = vrot.lane.b32.xlu0 %v2112, 104
        %v2382 = vpop.permute.xlu0 %2381
        %2383 = vrot.lane.b32.xlu0 %v2113, 104
        %v2384 = vpop.permute.xlu0 %2383
        %2385 = vrot.lane.b32.xlu0 %v2114, 104
        %v2386 = vpop.permute.xlu0 %2385
        %2387 = vrot.lane.b32.xlu0 %v2115, 104
        %v2388 = vpop.permute.xlu0 %2387
        %2389 = vrot.lane.b32.xlu0 %v2116, 104
        %v2390 = vpop.permute.xlu0 %2389
        %2391 = vrot.lane.b32.xlu0 %v2117, 104
        %v2392 = vpop.permute.xlu0 %2391
        %2393 = vrot.lane.b32.xlu0 %v2118, 104
        %v2394 = vpop.permute.xlu0 %2393
        %2395 = vrot.lane.b32.xlu0 %v2119, 104
        %v2396 = vpop.permute.xlu0 %2395
        %s2413 = scalar_lea.vmem [#allocation4], 16
        %2414 = vst.msk [vmem:[%s2413] sm:$0xff] %vm2250, %v2366
        %2415 = vst.msk [vmem:[%s2413 + $0x8] sm:$0x3] %vm2252, %v2368
        %2416 = vst.msk [vmem:[%s2413 + $0x10] sm:$0xff] %vm2250, %v2370
        %2417 = vst.msk [vmem:[%s2413 + $0x18] sm:$0x3] %vm2252, %v2372
        %2418 = vst.msk [vmem:[%s2413 + $0x20] sm:$0xff] %vm2250, %v2374
        %2419 = vst.msk [vmem:[%s2413 + $0x28] sm:$0x3] %vm2252, %v2376
        %2420 = vst.msk [vmem:[%s2413 + $0x30] sm:$0xff] %vm2250, %v2378
        %2421 = vst.msk [vmem:[%s2413 + $0x38] sm:$0x3] %vm2252, %v2380
        %2422 = vst.msk [vmem:[%s2413 + $0x40] sm:$0xff] %vm2250, %v2382
        %2423 = vst.msk [vmem:[%s2413 + $0x48] sm:$0x3] %vm2252, %v2384
        %2424 = vst.msk [vmem:[%s2413 + $0x50] sm:$0xff] %vm2250, %v2386
        %2425 = vst.msk [vmem:[%s2413 + $0x58] sm:$0x3] %vm2252, %v2388
        %2426 = vst.msk [vmem:[%s2413 + $0x60] sm:$0xff] %vm2250, %v2390
        %2427 = vst.msk [vmem:[%s2413 + $0x68] sm:$0x3] %vm2252, %v2392
        %2428 = vst.msk [vmem:[%s2413 + $0x70] sm:$0xff] %vm2250, %v2394
        %2429 = vst.msk [vmem:[%s2413 + $0x78] sm:$0x3] %vm2252, %v2396
        %v2430 = vld [vmem:[%s5] sm:$0xff]
        %v2431 = vld [vmem:[%s5 + $0x8] sm:$0xff]
        %v2432 = vld [vmem:[%s5 + $0x10] sm:$0xff]
        %v2433 = vld [vmem:[%s5 + $0x18] sm:$0x7]
        %v2434 = vld [vmem:[#allocation2] sm:$0xff]
        %v2435 = vld [vmem:[#allocation2 + $0x10] sm:$0xff]
        %v2436 = vld [vmem:[#allocation2 + $0x20] sm:$0xff]
        %v2437 = vld [vmem:[#allocation2 + $0x30] sm:$0xff]
        %v2438 = vld [vmem:[#allocation2 + $0x40] sm:$0xff]
        %v2439 = vld [vmem:[#allocation2 + $0x50] sm:$0xff]
        %v2440 = vld [vmem:[#allocation2 + $0x60] sm:$0xff]
        %v2441 = vld [vmem:[#allocation2 + $0x70] sm:$0xff]
        %v2442 = vlaneseq
        %v2443 = vshrl.u32 %v2442, 7
        %v2444 = vsub.s32 0, %v2443
        %v2445 = vrot.slane %v2430, %v2444
        %v2446 = vmul.f32 %v2434, %v2445
        %v2447 = vmul.f32 %v2435, %v2445
        %v2448 = vmul.f32 %v2436, %v2445
        %v2449 = vmul.f32 %v2437, %v2445
        %v2450 = vmul.f32 %v2438, %v2445
        %v2451 = vmul.f32 %v2439, %v2445
        %v2452 = vmul.f32 %v2440, %v2445
        %v2453 = vmul.f32 %v2441, %v2445
        %v2454 = vld [vmem:[#allocation3] sm:$0xff]
        %v2455 = vld [vmem:[#allocation3 + $0x10] sm:$0xff]
        %v2456 = vld [vmem:[#allocation3 + $0x20] sm:$0xff]
        %v2457 = vld [vmem:[#allocation3 + $0x30] sm:$0xff]
        %v2458 = vld [vmem:[#allocation3 + $0x40] sm:$0xff]
        %v2459 = vld [vmem:[#allocation3 + $0x50] sm:$0xff]
        %v2460 = vld [vmem:[#allocation3 + $0x60] sm:$0xff]
        %v2461 = vld [vmem:[#allocation3 + $0x70] sm:$0xff]
        %v2462 = vlaneseq
        %v2463 = vshrl.u32 %v2462, 7
        %v2464 = vsub.s32 1, %v2463
        %v2465 = vrot.slane %v2430, %v2464
        %v2466 = vmul.f32 %v2454, %v2465
        %v2467 = vmul.f32 %v2455, %v2465
        %v2468 = vmul.f32 %v2456, %v2465
        %v2469 = vmul.f32 %v2457, %v2465
        %v2470 = vmul.f32 %v2458, %v2465
        %v2471 = vmul.f32 %v2459, %v2465
        %v2472 = vmul.f32 %v2460, %v2465
        %v2473 = vmul.f32 %v2461, %v2465
        %v2474 = vadd.f32 %v2446, %v2466
        %v2475 = vadd.f32 %v2447, %v2467
        %v2476 = vadd.f32 %v2448, %v2468
        %v2477 = vadd.f32 %v2449, %v2469
        %v2478 = vadd.f32 %v2450, %v2470
        %v2479 = vadd.f32 %v2451, %v2471
        %v2480 = vadd.f32 %v2452, %v2472
        %v2481 = vadd.f32 %v2453, %v2473
        %v2482 = vld [vmem:[#allocation4] sm:$0xff]
        %v2483 = vld [vmem:[#allocation4 + $0x10] sm:$0xff]
        %v2484 = vld [vmem:[#allocation4 + $0x20] sm:$0xff]
        %v2485 = vld [vmem:[#allocation4 + $0x30] sm:$0xff]
        %v2486 = vld [vmem:[#allocation4 + $0x40] sm:$0xff]
        %v2487 = vld [vmem:[#allocation4 + $0x50] sm:$0xff]
        %v2488 = vld [vmem:[#allocation4 + $0x60] sm:$0xff]
        %v2489 = vld [vmem:[#allocation4 + $0x70] sm:$0xff]
        %v2490 = vlaneseq
        %v2491 = vshrl.u32 %v2490, 7
        %v2492 = vsub.s32 2, %v2491
        %v2493 = vrot.slane %v2430, %v2492
        %v2494 = vmul.f32 %v2482, %v2493
        %v2495 = vmul.f32 %v2483, %v2493
        %v2496 = vmul.f32 %v2484, %v2493
        %v2497 = vmul.f32 %v2485, %v2493
        %v2498 = vmul.f32 %v2486, %v2493
        %v2499 = vmul.f32 %v2487, %v2493
        %v2500 = vmul.f32 %v2488, %v2493
        %v2501 = vmul.f32 %v2489, %v2493
        %v2502 = vadd.f32 %v2474, %v2494
        %v2503 = vadd.f32 %v2475, %v2495
        %v2504 = vadd.f32 %v2476, %v2496
        %v2505 = vadd.f32 %v2477, %v2497
        %v2506 = vadd.f32 %v2478, %v2498
        %v2507 = vadd.f32 %v2479, %v2499
        %v2508 = vadd.f32 %v2480, %v2500
        %v2509 = vadd.f32 %v2481, %v2501
        %v2510 = vld [vmem:[#allocation2 + $0x1] sm:$0xff]
        %v2511 = vld [vmem:[#allocation2 + $0x11] sm:$0xff]
        %v2512 = vld [vmem:[#allocation2 + $0x21] sm:$0xff]
        %v2513 = vld [vmem:[#allocation2 + $0x31] sm:$0xff]
        %v2514 = vld [vmem:[#allocation2 + $0x41] sm:$0xff]
        %v2515 = vld [vmem:[#allocation2 + $0x51] sm:$0xff]
        %v2516 = vld [vmem:[#allocation2 + $0x61] sm:$0xff]
        %v2517 = vld [vmem:[#allocation2 + $0x71] sm:$0xff]
        %v2518 = vlaneseq
        %v2519 = vshrl.u32 %v2518, 7
        %v2520 = vsub.s32 3, %v2519
        %v2521 = vrot.slane %v2430, %v2520
        %v2522 = vmul.f32 %v2510, %v2521
        %v2523 = vmul.f32 %v2511, %v2521
        %v2524 = vmul.f32 %v2512, %v2521
        %v2525 = vmul.f32 %v2513, %v2521
        %v2526 = vmul.f32 %v2514, %v2521
        %v2527 = vmul.f32 %v2515, %v2521
        %v2528 = vmul.f32 %v2516, %v2521
        %v2529 = vmul.f32 %v2517, %v2521
        %v2530 = vadd.f32 %v2502, %v2522
        %v2531 = vadd.f32 %v2503, %v2523
        %v2532 = vadd.f32 %v2504, %v2524
        %v2533 = vadd.f32 %v2505, %v2525
        %v2534 = vadd.f32 %v2506, %v2526
        %v2535 = vadd.f32 %v2507, %v2527
        %v2536 = vadd.f32 %v2508, %v2528
        %v2537 = vadd.f32 %v2509, %v2529
        %v2538 = vld [vmem:[#allocation3 + $0x1] sm:$0xff]
        %v2539 = vld [vmem:[#allocation3 + $0x11] sm:$0xff]
        %v2540 = vld [vmem:[#allocation3 + $0x21] sm:$0xff]
        %v2541 = vld [vmem:[#allocation3 + $0x31] sm:$0xff]
        %v2542 = vld [vmem:[#allocation3 + $0x41] sm:$0xff]
        %v2543 = vld [vmem:[#allocation3 + $0x51] sm:$0xff]
        %v2544 = vld [vmem:[#allocation3 + $0x61] sm:$0xff]
        %v2545 = vld [vmem:[#allocation3 + $0x71] sm:$0xff]
        %v2546 = vlaneseq
        %v2547 = vshrl.u32 %v2546, 7
        %v2548 = vsub.s32 4, %v2547
        %v2549 = vrot.slane %v2430, %v2548
        %v2550 = vmul.f32 %v2538, %v2549
        %v2551 = vmul.f32 %v2539, %v2549
        %v2552 = vmul.f32 %v2540, %v2549
        %v2553 = vmul.f32 %v2541, %v2549
        %v2554 = vmul.f32 %v2542, %v2549
        %v2555 = vmul.f32 %v2543, %v2549
        %v2556 = vmul.f32 %v2544, %v2549
        %v2557 = vmul.f32 %v2545, %v2549
        %v2558 = vadd.f32 %v2530, %v2550
        %v2559 = vadd.f32 %v2531, %v2551
        %v2560 = vadd.f32 %v2532, %v2552
        %v2561 = vadd.f32 %v2533, %v2553
        %v2562 = vadd.f32 %v2534, %v2554
        %v2563 = vadd.f32 %v2535, %v2555
        %v2564 = vadd.f32 %v2536, %v2556
        %v2565 = vadd.f32 %v2537, %v2557
        %v2566 = vld [vmem:[#allocation4 + $0x1] sm:$0xff]
        %v2567 = vld [vmem:[#allocation4 + $0x11] sm:$0xff]
        %v2568 = vld [vmem:[#allocation4 + $0x21] sm:$0xff]
        %v2569 = vld [vmem:[#allocation4 + $0x31] sm:$0xff]
        %v2570 = vld [vmem:[#allocation4 + $0x41] sm:$0xff]
        %v2571 = vld [vmem:[#allocation4 + $0x51] sm:$0xff]
        %v2572 = vld [vmem:[#allocation4 + $0x61] sm:$0xff]
        %v2573 = vld [vmem:[#allocation4 + $0x71] sm:$0xff]
        %v2574 = vlaneseq
        %v2575 = vshrl.u32 %v2574, 7
        %v2576 = vsub.s32 5, %v2575
        %v2577 = vrot.slane %v2430, %v2576
        %v2578 = vmul.f32 %v2566, %v2577
        %v2579 = vmul.f32 %v2567, %v2577
        %v2580 = vmul.f32 %v2568, %v2577
        %v2581 = vmul.f32 %v2569, %v2577
        %v2582 = vmul.f32 %v2570, %v2577
        %v2583 = vmul.f32 %v2571, %v2577
        %v2584 = vmul.f32 %v2572, %v2577
        %v2585 = vmul.f32 %v2573, %v2577
        %v2586 = vadd.f32 %v2558, %v2578
        %v2587 = vadd.f32 %v2559, %v2579
        %v2588 = vadd.f32 %v2560, %v2580
        %v2589 = vadd.f32 %v2561, %v2581
        %v2590 = vadd.f32 %v2562, %v2582
        %v2591 = vadd.f32 %v2563, %v2583
        %v2592 = vadd.f32 %v2564, %v2584
        %v2593 = vadd.f32 %v2565, %v2585
        %v2594 = vld [vmem:[#allocation2 + $0x2] sm:$0xff]
        %v2595 = vld [vmem:[#allocation2 + $0x12] sm:$0xff]
        %v2596 = vld [vmem:[#allocation2 + $0x22] sm:$0xff]
        %v2597 = vld [vmem:[#allocation2 + $0x32] sm:$0xff]
        %v2598 = vld [vmem:[#allocation2 + $0x42] sm:$0xff]
        %v2599 = vld [vmem:[#allocation2 + $0x52] sm:$0xff]
        %v2600 = vld [vmem:[#allocation2 + $0x62] sm:$0xff]
        %v2601 = vld [vmem:[#allocation2 + $0x72] sm:$0xff]
        %v2602 = vlaneseq
        %v2603 = vshrl.u32 %v2602, 7
        %v2604 = vsub.s32 6, %v2603
        %v2605 = vrot.slane %v2430, %v2604
        %v2606 = vmul.f32 %v2594, %v2605
        %v2607 = vmul.f32 %v2595, %v2605
        %v2608 = vmul.f32 %v2596, %v2605
        %v2609 = vmul.f32 %v2597, %v2605
        %v2610 = vmul.f32 %v2598, %v2605
        %v2611 = vmul.f32 %v2599, %v2605
        %v2612 = vmul.f32 %v2600, %v2605
        %v2613 = vmul.f32 %v2601, %v2605
        %v2614 = vadd.f32 %v2586, %v2606
        %v2615 = vadd.f32 %v2587, %v2607
        %v2616 = vadd.f32 %v2588, %v2608
        %v2617 = vadd.f32 %v2589, %v2609
        %v2618 = vadd.f32 %v2590, %v2610
        %v2619 = vadd.f32 %v2591, %v2611
        %v2620 = vadd.f32 %v2592, %v2612
        %v2621 = vadd.f32 %v2593, %v2613
        %v2622 = vld [vmem:[#allocation3 + $0x2] sm:$0xff]
        %v2623 = vld [vmem:[#allocation3 + $0x12] sm:$0xff]
        %v2624 = vld [vmem:[#allocation3 + $0x22] sm:$0xff]
        %v2625 = vld [vmem:[#allocation3 + $0x32] sm:$0xff]
        %v2626 = vld [vmem:[#allocation3 + $0x42] sm:$0xff]
        %v2627 = vld [vmem:[#allocation3 + $0x52] sm:$0xff]
        %v2628 = vld [vmem:[#allocation3 + $0x62] sm:$0xff]
        %v2629 = vld [vmem:[#allocation3 + $0x72] sm:$0xff]
        %v2630 = vlaneseq
        %v2631 = vshrl.u32 %v2630, 7
        %v2632 = vsub.s32 7, %v2631
        %v2633 = vrot.slane %v2430, %v2632
        %v2634 = vmul.f32 %v2622, %v2633
        %v2635 = vmul.f32 %v2623, %v2633
        %v2636 = vmul.f32 %v2624, %v2633
        %v2637 = vmul.f32 %v2625, %v2633
        %v2638 = vmul.f32 %v2626, %v2633
        %v2639 = vmul.f32 %v2627, %v2633
        %v2640 = vmul.f32 %v2628, %v2633
        %v2641 = vmul.f32 %v2629, %v2633
        %v2642 = vadd.f32 %v2614, %v2634
        %v2643 = vadd.f32 %v2615, %v2635
        %v2644 = vadd.f32 %v2616, %v2636
        %v2645 = vadd.f32 %v2617, %v2637
        %v2646 = vadd.f32 %v2618, %v2638
        %v2647 = vadd.f32 %v2619, %v2639
        %v2648 = vadd.f32 %v2620, %v2640
        %v2649 = vadd.f32 %v2621, %v2641
        %v2650 = vld [vmem:[#allocation4 + $0x2] sm:$0xff]
        %v2651 = vld [vmem:[#allocation4 + $0x12] sm:$0xff]
        %v2652 = vld [vmem:[#allocation4 + $0x22] sm:$0xff]
        %v2653 = vld [vmem:[#allocation4 + $0x32] sm:$0xff]
        %v2654 = vld [vmem:[#allocation4 + $0x42] sm:$0xff]
        %v2655 = vld [vmem:[#allocation4 + $0x52] sm:$0xff]
        %v2656 = vld [vmem:[#allocation4 + $0x62] sm:$0xff]
        %v2657 = vld [vmem:[#allocation4 + $0x72] sm:$0xff]
        %v2658 = vlaneseq
        %v2659 = vshrl.u32 %v2658, 7
        %v2660 = vsub.s32 0, %v2659
        %v2661 = vrot.slane %v2431, %v2660
        %v2662 = vmul.f32 %v2650, %v2661
        %v2663 = vmul.f32 %v2651, %v2661
        %v2664 = vmul.f32 %v2652, %v2661
        %v2665 = vmul.f32 %v2653, %v2661
        %v2666 = vmul.f32 %v2654, %v2661
        %v2667 = vmul.f32 %v2655, %v2661
        %v2668 = vmul.f32 %v2656, %v2661
        %v2669 = vmul.f32 %v2657, %v2661
        %v2670 = vadd.f32 %v2642, %v2662
        %v2671 = vadd.f32 %v2643, %v2663
        %v2672 = vadd.f32 %v2644, %v2664
        %v2673 = vadd.f32 %v2645, %v2665
        %v2674 = vadd.f32 %v2646, %v2666
        %v2675 = vadd.f32 %v2647, %v2667
        %v2676 = vadd.f32 %v2648, %v2668
        %v2677 = vadd.f32 %v2649, %v2669
        %v2678 = vld [vmem:[%s2257] sm:$0xff]
        %v2679 = vld [vmem:[%s2257 + $0x10] sm:$0xff]
        %v2680 = vld [vmem:[%s2257 + $0x20] sm:$0xff]
        %v2681 = vld [vmem:[%s2257 + $0x30] sm:$0xff]
        %v2682 = vld [vmem:[%s2257 + $0x40] sm:$0xff]
        %v2683 = vld [vmem:[%s2257 + $0x50] sm:$0xff]
        %v2684 = vld [vmem:[%s2257 + $0x60] sm:$0xff]
        %v2685 = vld [vmem:[%s2257 + $0x70] sm:$0xff]
        %v2686 = vlaneseq
        %v2687 = vshrl.u32 %v2686, 7
        %v2688 = vsub.s32 1, %v2687
        %v2689 = vrot.slane %v2431, %v2688
        %v2690 = vmul.f32 %v2678, %v2689
        %v2691 = vmul.f32 %v2679, %v2689
        %v2692 = vmul.f32 %v2680, %v2689
        %v2693 = vmul.f32 %v2681, %v2689
        %v2694 = vmul.f32 %v2682, %v2689
        %v2695 = vmul.f32 %v2683, %v2689
        %v2696 = vmul.f32 %v2684, %v2689
        %v2697 = vmul.f32 %v2685, %v2689
        %v2698 = vadd.f32 %v2670, %v2690
        %v2699 = vadd.f32 %v2671, %v2691
        %v2700 = vadd.f32 %v2672, %v2692
        %v2701 = vadd.f32 %v2673, %v2693
        %v2702 = vadd.f32 %v2674, %v2694
        %v2703 = vadd.f32 %v2675, %v2695
        %v2704 = vadd.f32 %v2676, %v2696
        %v2705 = vadd.f32 %v2677, %v2697
        %v2706 = vld [vmem:[%s2343] sm:$0xff]
        %v2707 = vld [vmem:[%s2343 + $0x10] sm:$0xff]
        %v2708 = vld [vmem:[%s2343 + $0x20] sm:$0xff]
        %v2709 = vld [vmem:[%s2343 + $0x30] sm:$0xff]
        %v2710 = vld [vmem:[%s2343 + $0x40] sm:$0xff]
        %v2711 = vld [vmem:[%s2343 + $0x50] sm:$0xff]
        %v2712 = vld [vmem:[%s2343 + $0x60] sm:$0xff]
        %v2713 = vld [vmem:[%s2343 + $0x70] sm:$0xff]
        %v2714 = vlaneseq
        %v2715 = vshrl.u32 %v2714, 7
        %v2716 = vsub.s32 2, %v2715
        %v2717 = vrot.slane %v2431, %v2716
        %v2718 = vmul.f32 %v2706, %v2717
        %v2719 = vmul.f32 %v2707, %v2717
        %v2720 = vmul.f32 %v2708, %v2717
        %v2721 = vmul.f32 %v2709, %v2717
        %v2722 = vmul.f32 %v2710, %v2717
        %v2723 = vmul.f32 %v2711, %v2717
        %v2724 = vmul.f32 %v2712, %v2717
        %v2725 = vmul.f32 %v2713, %v2717
        %v2726 = vadd.f32 %v2698, %v2718
        %v2727 = vadd.f32 %v2699, %v2719
        %v2728 = vadd.f32 %v2700, %v2720
        %v2729 = vadd.f32 %v2701, %v2721
        %v2730 = vadd.f32 %v2702, %v2722
        %v2731 = vadd.f32 %v2703, %v2723
        %v2732 = vadd.f32 %v2704, %v2724
        %v2733 = vadd.f32 %v2705, %v2725
        %v2734 = vld [vmem:[%s2413] sm:$0xff]
        %v2735 = vld [vmem:[%s2413 + $0x10] sm:$0xff]
        %v2736 = vld [vmem:[%s2413 + $0x20] sm:$0xff]
        %v2737 = vld [vmem:[%s2413 + $0x30] sm:$0xff]
        %v2738 = vld [vmem:[%s2413 + $0x40] sm:$0xff]
        %v2739 = vld [vmem:[%s2413 + $0x50] sm:$0xff]
        %v2740 = vld [vmem:[%s2413 + $0x60] sm:$0xff]
        %v2741 = vld [vmem:[%s2413 + $0x70] sm:$0xff]
        %v2742 = vlaneseq
        %v2743 = vshrl.u32 %v2742, 7
        %v2744 = vsub.s32 3, %v2743
        %v2745 = vrot.slane %v2431, %v2744
        %v2746 = vmul.f32 %v2734, %v2745
        %v2747 = vmul.f32 %v2735, %v2745
        %v2748 = vmul.f32 %v2736, %v2745
        %v2749 = vmul.f32 %v2737, %v2745
        %v2750 = vmul.f32 %v2738, %v2745
        %v2751 = vmul.f32 %v2739, %v2745
        %v2752 = vmul.f32 %v2740, %v2745
        %v2753 = vmul.f32 %v2741, %v2745
        %v2754 = vadd.f32 %v2726, %v2746
        %v2755 = vadd.f32 %v2727, %v2747
        %v2756 = vadd.f32 %v2728, %v2748
        %v2757 = vadd.f32 %v2729, %v2749
        %v2758 = vadd.f32 %v2730, %v2750
        %v2759 = vadd.f32 %v2731, %v2751
        %v2760 = vadd.f32 %v2732, %v2752
        %v2761 = vadd.f32 %v2733, %v2753
        %v2762 = vld [vmem:[%s2257 + $0x1] sm:$0xff]
        %v2763 = vld [vmem:[%s2257 + $0x11] sm:$0xff]
        %v2764 = vld [vmem:[%s2257 + $0x21] sm:$0xff]
        %v2765 = vld [vmem:[%s2257 + $0x31] sm:$0xff]
        %v2766 = vld [vmem:[%s2257 + $0x41] sm:$0xff]
        %v2767 = vld [vmem:[%s2257 + $0x51] sm:$0xff]
        %v2768 = vld [vmem:[%s2257 + $0x61] sm:$0xff]
        %v2769 = vld [vmem:[%s2257 + $0x71] sm:$0xff]
        %v2770 = vlaneseq
        %v2771 = vshrl.u32 %v2770, 7
        %v2772 = vsub.s32 4, %v2771
        %v2773 = vrot.slane %v2431, %v2772
        %v2774 = vmul.f32 %v2762, %v2773
        %v2775 = vmul.f32 %v2763, %v2773
        %v2776 = vmul.f32 %v2764, %v2773
        %v2777 = vmul.f32 %v2765, %v2773
        %v2778 = vmul.f32 %v2766, %v2773
        %v2779 = vmul.f32 %v2767, %v2773
        %v2780 = vmul.f32 %v2768, %v2773
        %v2781 = vmul.f32 %v2769, %v2773
        %v2782 = vadd.f32 %v2754, %v2774
        %v2783 = vadd.f32 %v2755, %v2775
        %v2784 = vadd.f32 %v2756, %v2776
        %v2785 = vadd.f32 %v2757, %v2777
        %v2786 = vadd.f32 %v2758, %v2778
        %v2787 = vadd.f32 %v2759, %v2779
        %v2788 = vadd.f32 %v2760, %v2780
        %v2789 = vadd.f32 %v2761, %v2781
        %v2790 = vld [vmem:[%s2343 + $0x1] sm:$0xff]
        %v2791 = vld [vmem:[%s2343 + $0x11] sm:$0xff]
        %v2792 = vld [vmem:[%s2343 + $0x21] sm:$0xff]
        %v2793 = vld [vmem:[%s2343 + $0x31] sm:$0xff]
        %v2794 = vld [vmem:[%s2343 + $0x41] sm:$0xff]
        %v2795 = vld [vmem:[%s2343 + $0x51] sm:$0xff]
        %v2796 = vld [vmem:[%s2343 + $0x61] sm:$0xff]
        %v2797 = vld [vmem:[%s2343 + $0x71] sm:$0xff]
        %v2798 = vlaneseq
        %v2799 = vshrl.u32 %v2798, 7
        %v2800 = vsub.s32 5, %v2799
        %v2801 = vrot.slane %v2431, %v2800
        %v2802 = vmul.f32 %v2790, %v2801
        %v2803 = vmul.f32 %v2791, %v2801
        %v2804 = vmul.f32 %v2792, %v2801
        %v2805 = vmul.f32 %v2793, %v2801
        %v2806 = vmul.f32 %v2794, %v2801
        %v2807 = vmul.f32 %v2795, %v2801
        %v2808 = vmul.f32 %v2796, %v2801
        %v2809 = vmul.f32 %v2797, %v2801
        %v2810 = vadd.f32 %v2782, %v2802
        %v2811 = vadd.f32 %v2783, %v2803
        %v2812 = vadd.f32 %v2784, %v2804
        %v2813 = vadd.f32 %v2785, %v2805
        %v2814 = vadd.f32 %v2786, %v2806
        %v2815 = vadd.f32 %v2787, %v2807
        %v2816 = vadd.f32 %v2788, %v2808
        %v2817 = vadd.f32 %v2789, %v2809
        %v2818 = vld [vmem:[%s2413 + $0x1] sm:$0xff]
        %v2819 = vld [vmem:[%s2413 + $0x11] sm:$0xff]
        %v2820 = vld [vmem:[%s2413 + $0x21] sm:$0xff]
        %v2821 = vld [vmem:[%s2413 + $0x31] sm:$0xff]
        %v2822 = vld [vmem:[%s2413 + $0x41] sm:$0xff]
        %v2823 = vld [vmem:[%s2413 + $0x51] sm:$0xff]
        %v2824 = vld [vmem:[%s2413 + $0x61] sm:$0xff]
        %v2825 = vld [vmem:[%s2413 + $0x71] sm:$0xff]
        %v2826 = vlaneseq
        %v2827 = vshrl.u32 %v2826, 7
        %v2828 = vsub.s32 6, %v2827
        %v2829 = vrot.slane %v2431, %v2828
        %v2830 = vmul.f32 %v2818, %v2829
        %v2831 = vmul.f32 %v2819, %v2829
        %v2832 = vmul.f32 %v2820, %v2829
        %v2833 = vmul.f32 %v2821, %v2829
        %v2834 = vmul.f32 %v2822, %v2829
        %v2835 = vmul.f32 %v2823, %v2829
        %v2836 = vmul.f32 %v2824, %v2829
        %v2837 = vmul.f32 %v2825, %v2829
        %v2838 = vadd.f32 %v2810, %v2830
        %v2839 = vadd.f32 %v2811, %v2831
        %v2840 = vadd.f32 %v2812, %v2832
        %v2841 = vadd.f32 %v2813, %v2833
        %v2842 = vadd.f32 %v2814, %v2834
        %v2843 = vadd.f32 %v2815, %v2835
        %v2844 = vadd.f32 %v2816, %v2836
        %v2845 = vadd.f32 %v2817, %v2837
        %v2846 = vld [vmem:[%s2257 + $0x2] sm:$0xff]
        %v2847 = vld [vmem:[%s2257 + $0x12] sm:$0xff]
        %v2848 = vld [vmem:[%s2257 + $0x22] sm:$0xff]
        %v2849 = vld [vmem:[%s2257 + $0x32] sm:$0xff]
        %v2850 = vld [vmem:[%s2257 + $0x42] sm:$0xff]
        %v2851 = vld [vmem:[%s2257 + $0x52] sm:$0xff]
        %v2852 = vld [vmem:[%s2257 + $0x62] sm:$0xff]
        %v2853 = vld [vmem:[%s2257 + $0x72] sm:$0xff]
        %v2854 = vlaneseq
        %v2855 = vshrl.u32 %v2854, 7
        %v2856 = vsub.s32 7, %v2855
        %v2857 = vrot.slane %v2431, %v2856
        %v2858 = vmul.f32 %v2846, %v2857
        %v2859 = vmul.f32 %v2847, %v2857
        %v2860 = vmul.f32 %v2848, %v2857
        %v2861 = vmul.f32 %v2849, %v2857
        %v2862 = vmul.f32 %v2850, %v2857
        %v2863 = vmul.f32 %v2851, %v2857
        %v2864 = vmul.f32 %v2852, %v2857
        %v2865 = vmul.f32 %v2853, %v2857
        %v2866 = vadd.f32 %v2838, %v2858
        %v2867 = vadd.f32 %v2839, %v2859
        %v2868 = vadd.f32 %v2840, %v2860
        %v2869 = vadd.f32 %v2841, %v2861
        %v2870 = vadd.f32 %v2842, %v2862
        %v2871 = vadd.f32 %v2843, %v2863
        %v2872 = vadd.f32 %v2844, %v2864
        %v2873 = vadd.f32 %v2845, %v2865
        %v2874 = vld [vmem:[%s2343 + $0x2] sm:$0xff]
        %v2875 = vld [vmem:[%s2343 + $0x12] sm:$0xff]
        %v2876 = vld [vmem:[%s2343 + $0x22] sm:$0xff]
        %v2877 = vld [vmem:[%s2343 + $0x32] sm:$0xff]
        %v2878 = vld [vmem:[%s2343 + $0x42] sm:$0xff]
        %v2879 = vld [vmem:[%s2343 + $0x52] sm:$0xff]
        %v2880 = vld [vmem:[%s2343 + $0x62] sm:$0xff]
        %v2881 = vld [vmem:[%s2343 + $0x72] sm:$0xff]
        %v2882 = vlaneseq
        %v2883 = vshrl.u32 %v2882, 7
        %v2884 = vsub.s32 0, %v2883
        %v2885 = vrot.slane %v2432, %v2884
        %v2886 = vmul.f32 %v2874, %v2885
        %v2887 = vmul.f32 %v2875, %v2885
        %v2888 = vmul.f32 %v2876, %v2885
        %v2889 = vmul.f32 %v2877, %v2885
        %v2890 = vmul.f32 %v2878, %v2885
        %v2891 = vmul.f32 %v2879, %v2885
        %v2892 = vmul.f32 %v2880, %v2885
        %v2893 = vmul.f32 %v2881, %v2885
        %v2894 = vadd.f32 %v2866, %v2886
        %v2895 = vadd.f32 %v2867, %v2887
        %v2896 = vadd.f32 %v2868, %v2888
        %v2897 = vadd.f32 %v2869, %v2889
        %v2898 = vadd.f32 %v2870, %v2890
        %v2899 = vadd.f32 %v2871, %v2891
        %v2900 = vadd.f32 %v2872, %v2892
        %v2901 = vadd.f32 %v2873, %v2893
        %v2902 = vld [vmem:[%s2413 + $0x2] sm:$0xff]
        %v2903 = vld [vmem:[%s2413 + $0x12] sm:$0xff]
        %v2904 = vld [vmem:[%s2413 + $0x22] sm:$0xff]
        %v2905 = vld [vmem:[%s2413 + $0x32] sm:$0xff]
        %v2906 = vld [vmem:[%s2413 + $0x42] sm:$0xff]
        %v2907 = vld [vmem:[%s2413 + $0x52] sm:$0xff]
        %v2908 = vld [vmem:[%s2413 + $0x62] sm:$0xff]
        %v2909 = vld [vmem:[%s2413 + $0x72] sm:$0xff]
        %v2910 = vlaneseq
        %v2911 = vshrl.u32 %v2910, 7
        %v2912 = vsub.s32 1, %v2911
        %v2913 = vrot.slane %v2432, %v2912
        %v2914 = vmul.f32 %v2902, %v2913
        %v2915 = vmul.f32 %v2903, %v2913
        %v2916 = vmul.f32 %v2904, %v2913
        %v2917 = vmul.f32 %v2905, %v2913
        %v2918 = vmul.f32 %v2906, %v2913
        %v2919 = vmul.f32 %v2907, %v2913
        %v2920 = vmul.f32 %v2908, %v2913
        %v2921 = vmul.f32 %v2909, %v2913
        %v2922 = vadd.f32 %v2894, %v2914
        %v2923 = vadd.f32 %v2895, %v2915
        %v2924 = vadd.f32 %v2896, %v2916
        %v2925 = vadd.f32 %v2897, %v2917
        %v2926 = vadd.f32 %v2898, %v2918
        %v2927 = vadd.f32 %v2899, %v2919
        %v2928 = vadd.f32 %v2900, %v2920
        %v2929 = vadd.f32 %v2901, %v2921
        %s2930 = scalar_lea.vmem [#allocation2], 32
        %v2931 = vld [vmem:[%s2930] sm:$0xff]
        %v2932 = vld [vmem:[%s2930 + $0x10] sm:$0xff]
        %v2933 = vld [vmem:[%s2930 + $0x20] sm:$0xff]
        %v2934 = vld [vmem:[%s2930 + $0x30] sm:$0xff]
        %v2935 = vld [vmem:[%s2930 + $0x40] sm:$0xff]
        %v2936 = vld [vmem:[%s2930 + $0x50] sm:$0xff]
        %v2937 = vld [vmem:[%s2930 + $0x60] sm:$0xff]
        %v2938 = vld [vmem:[%s2930 + $0x70] sm:$0xff]
        %v2939 = vlaneseq
        %v2940 = vshrl.u32 %v2939, 7
        %v2941 = vsub.s32 2, %v2940
        %v2942 = vrot.slane %v2432, %v2941
        %v2943 = vmul.f32 %v2931, %v2942
        %v2944 = vmul.f32 %v2932, %v2942
        %v2945 = vmul.f32 %v2933, %v2942
        %v2946 = vmul.f32 %v2934, %v2942
        %v2947 = vmul.f32 %v2935, %v2942
        %v2948 = vmul.f32 %v2936, %v2942
        %v2949 = vmul.f32 %v2937, %v2942
        %v2950 = vmul.f32 %v2938, %v2942
        %v2951 = vadd.f32 %v2922, %v2943
        %v2952 = vadd.f32 %v2923, %v2944
        %v2953 = vadd.f32 %v2924, %v2945
        %v2954 = vadd.f32 %v2925, %v2946
        %v2955 = vadd.f32 %v2926, %v2947
        %v2956 = vadd.f32 %v2927, %v2948
        %v2957 = vadd.f32 %v2928, %v2949
        %v2958 = vadd.f32 %v2929, %v2950
        %s2959 = scalar_lea.vmem [#allocation3], 32
        %v2960 = vld [vmem:[%s2959] sm:$0xff]
        %v2961 = vld [vmem:[%s2959 + $0x10] sm:$0xff]
        %v2962 = vld [vmem:[%s2959 + $0x20] sm:$0xff]
        %v2963 = vld [vmem:[%s2959 + $0x30] sm:$0xff]
        %v2964 = vld [vmem:[%s2959 + $0x40] sm:$0xff]
        %v2965 = vld [vmem:[%s2959 + $0x50] sm:$0xff]
        %v2966 = vld [vmem:[%s2959 + $0x60] sm:$0xff]
        %v2967 = vld [vmem:[%s2959 + $0x70] sm:$0xff]
        %v2968 = vlaneseq
        %v2969 = vshrl.u32 %v2968, 7
        %v2970 = vsub.s32 3, %v2969
        %v2971 = vrot.slane %v2432, %v2970
        %v2972 = vmul.f32 %v2960, %v2971
        %v2973 = vmul.f32 %v2961, %v2971
        %v2974 = vmul.f32 %v2962, %v2971
        %v2975 = vmul.f32 %v2963, %v2971
        %v2976 = vmul.f32 %v2964, %v2971
        %v2977 = vmul.f32 %v2965, %v2971
        %v2978 = vmul.f32 %v2966, %v2971
        %v2979 = vmul.f32 %v2967, %v2971
        %v2980 = vadd.f32 %v2951, %v2972
        %v2981 = vadd.f32 %v2952, %v2973
        %v2982 = vadd.f32 %v2953, %v2974
        %v2983 = vadd.f32 %v2954, %v2975
        %v2984 = vadd.f32 %v2955, %v2976
        %v2985 = vadd.f32 %v2956, %v2977
        %v2986 = vadd.f32 %v2957, %v2978
        %v2987 = vadd.f32 %v2958, %v2979
        %s2988 = scalar_lea.vmem [#allocation4], 32
        %v2989 = vld [vmem:[%s2988] sm:$0xff]
        %v2990 = vld [vmem:[%s2988 + $0x10] sm:$0xff]
        %v2991 = vld [vmem:[%s2988 + $0x20] sm:$0xff]
        %v2992 = vld [vmem:[%s2988 + $0x30] sm:$0xff]
        %v2993 = vld [vmem:[%s2988 + $0x40] sm:$0xff]
        %v2994 = vld [vmem:[%s2988 + $0x50] sm:$0xff]
        %v2995 = vld [vmem:[%s2988 + $0x60] sm:$0xff]
        %v2996 = vld [vmem:[%s2988 + $0x70] sm:$0xff]
        %v2997 = vlaneseq
        %v2998 = vshrl.u32 %v2997, 7
        %v2999 = vsub.s32 4, %v2998
        %v3000 = vrot.slane %v2432, %v2999
        %v3001 = vmul.f32 %v2989, %v3000
        %v3002 = vmul.f32 %v2990, %v3000
        %v3003 = vmul.f32 %v2991, %v3000
        %v3004 = vmul.f32 %v2992, %v3000
        %v3005 = vmul.f32 %v2993, %v3000
        %v3006 = vmul.f32 %v2994, %v3000
        %v3007 = vmul.f32 %v2995, %v3000
        %v3008 = vmul.f32 %v2996, %v3000
        %v3009 = vadd.f32 %v2980, %v3001
        %v3010 = vadd.f32 %v2981, %v3002
        %v3011 = vadd.f32 %v2982, %v3003
        %v3012 = vadd.f32 %v2983, %v3004
        %v3013 = vadd.f32 %v2984, %v3005
        %v3014 = vadd.f32 %v2985, %v3006
        %v3015 = vadd.f32 %v2986, %v3007
        %v3016 = vadd.f32 %v2987, %v3008
        %v3017 = vld [vmem:[%s2930 + $0x1] sm:$0xff]
        %v3018 = vld [vmem:[%s2930 + $0x11] sm:$0xff]
        %v3019 = vld [vmem:[%s2930 + $0x21] sm:$0xff]
        %v3020 = vld [vmem:[%s2930 + $0x31] sm:$0xff]
        %v3021 = vld [vmem:[%s2930 + $0x41] sm:$0xff]
        %v3022 = vld [vmem:[%s2930 + $0x51] sm:$0xff]
        %v3023 = vld [vmem:[%s2930 + $0x61] sm:$0xff]
        %v3024 = vld [vmem:[%s2930 + $0x71] sm:$0xff]
        %v3025 = vlaneseq
        %v3026 = vshrl.u32 %v3025, 7
        %v3027 = vsub.s32 5, %v3026
        %v3028 = vrot.slane %v2432, %v3027
        %v3029 = vmul.f32 %v3017, %v3028
        %v3030 = vmul.f32 %v3018, %v3028
        %v3031 = vmul.f32 %v3019, %v3028
        %v3032 = vmul.f32 %v3020, %v3028
        %v3033 = vmul.f32 %v3021, %v3028
        %v3034 = vmul.f32 %v3022, %v3028
        %v3035 = vmul.f32 %v3023, %v3028
        %v3036 = vmul.f32 %v3024, %v3028
        %v3037 = vadd.f32 %v3009, %v3029
        %v3038 = vadd.f32 %v3010, %v3030
        %v3039 = vadd.f32 %v3011, %v3031
        %v3040 = vadd.f32 %v3012, %v3032
        %v3041 = vadd.f32 %v3013, %v3033
        %v3042 = vadd.f32 %v3014, %v3034
        %v3043 = vadd.f32 %v3015, %v3035
        %v3044 = vadd.f32 %v3016, %v3036
        %v3045 = vld [vmem:[%s2959 + $0x1] sm:$0xff]
        %v3046 = vld [vmem:[%s2959 + $0x11] sm:$0xff]
        %v3047 = vld [vmem:[%s2959 + $0x21] sm:$0xff]
        %v3048 = vld [vmem:[%s2959 + $0x31] sm:$0xff]
        %v3049 = vld [vmem:[%s2959 + $0x41] sm:$0xff]
        %v3050 = vld [vmem:[%s2959 + $0x51] sm:$0xff]
        %v3051 = vld [vmem:[%s2959 + $0x61] sm:$0xff]
        %v3052 = vld [vmem:[%s2959 + $0x71] sm:$0xff]
        %v3053 = vlaneseq
        %v3054 = vshrl.u32 %v3053, 7
        %v3055 = vsub.s32 6, %v3054
        %v3056 = vrot.slane %v2432, %v3055
        %v3057 = vmul.f32 %v3045, %v3056
        %v3058 = vmul.f32 %v3046, %v3056
        %v3059 = vmul.f32 %v3047, %v3056
        %v3060 = vmul.f32 %v3048, %v3056
        %v3061 = vmul.f32 %v3049, %v3056
        %v3062 = vmul.f32 %v3050, %v3056
        %v3063 = vmul.f32 %v3051, %v3056
        %v3064 = vmul.f32 %v3052, %v3056
        %v3065 = vadd.f32 %v3037, %v3057
        %v3066 = vadd.f32 %v3038, %v3058
        %v3067 = vadd.f32 %v3039, %v3059
        %v3068 = vadd.f32 %v3040, %v3060
        %v3069 = vadd.f32 %v3041, %v3061
        %v3070 = vadd.f32 %v3042, %v3062
        %v3071 = vadd.f32 %v3043, %v3063
        %v3072 = vadd.f32 %v3044, %v3064
        %v3073 = vld [vmem:[%s2988 + $0x1] sm:$0xff]
        %v3074 = vld [vmem:[%s2988 + $0x11] sm:$0xff]
        %v3075 = vld [vmem:[%s2988 + $0x21] sm:$0xff]
        %v3076 = vld [vmem:[%s2988 + $0x31] sm:$0xff]
        %v3077 = vld [vmem:[%s2988 + $0x41] sm:$0xff]
        %v3078 = vld [vmem:[%s2988 + $0x51] sm:$0xff]
        %v3079 = vld [vmem:[%s2988 + $0x61] sm:$0xff]
        %v3080 = vld [vmem:[%s2988 + $0x71] sm:$0xff]
        %v3081 = vlaneseq
        %v3082 = vshrl.u32 %v3081, 7
        %v3083 = vsub.s32 7, %v3082
        %v3084 = vrot.slane %v2432, %v3083
        %v3085 = vmul.f32 %v3073, %v3084
        %v3086 = vmul.f32 %v3074, %v3084
        %v3087 = vmul.f32 %v3075, %v3084
        %v3088 = vmul.f32 %v3076, %v3084
        %v3089 = vmul.f32 %v3077, %v3084
        %v3090 = vmul.f32 %v3078, %v3084
        %v3091 = vmul.f32 %v3079, %v3084
        %v3092 = vmul.f32 %v3080, %v3084
        %v3093 = vadd.f32 %v3065, %v3085
        %v3094 = vadd.f32 %v3066, %v3086
        %v3095 = vadd.f32 %v3067, %v3087
        %v3096 = vadd.f32 %v3068, %v3088
        %v3097 = vadd.f32 %v3069, %v3089
        %v3098 = vadd.f32 %v3070, %v3090
        %v3099 = vadd.f32 %v3071, %v3091
        %v3100 = vadd.f32 %v3072, %v3092
        %v3101 = vld [vmem:[%s2930 + $0x2] sm:$0xff]
        %v3102 = vld [vmem:[%s2930 + $0x12] sm:$0xff]
        %v3103 = vld [vmem:[%s2930 + $0x22] sm:$0xff]
        %v3104 = vld [vmem:[%s2930 + $0x32] sm:$0xff]
        %v3105 = vld [vmem:[%s2930 + $0x42] sm:$0xff]
        %v3106 = vld [vmem:[%s2930 + $0x52] sm:$0xff]
        %v3107 = vld [vmem:[%s2930 + $0x62] sm:$0xff]
        %v3108 = vld [vmem:[%s2930 + $0x72] sm:$0xff]
        %v3109 = vlaneseq
        %v3110 = vshrl.u32 %v3109, 7
        %v3111 = vsub.s32 0, %v3110
        %v3112 = vrot.slane %v2433, %v3111
        %v3113 = vmul.f32 %v3101, %v3112
        %v3114 = vmul.f32 %v3102, %v3112
        %v3115 = vmul.f32 %v3103, %v3112
        %v3116 = vmul.f32 %v3104, %v3112
        %v3117 = vmul.f32 %v3105, %v3112
        %v3118 = vmul.f32 %v3106, %v3112
        %v3119 = vmul.f32 %v3107, %v3112
        %v3120 = vmul.f32 %v3108, %v3112
        %v3121 = vadd.f32 %v3093, %v3113
        %v3122 = vadd.f32 %v3094, %v3114
        %v3123 = vadd.f32 %v3095, %v3115
        %v3124 = vadd.f32 %v3096, %v3116
        %v3125 = vadd.f32 %v3097, %v3117
        %v3126 = vadd.f32 %v3098, %v3118
        %v3127 = vadd.f32 %v3099, %v3119
        %v3128 = vadd.f32 %v3100, %v3120
        %v3129 = vld [vmem:[%s2959 + $0x2] sm:$0xff]
        %v3130 = vld [vmem:[%s2959 + $0x12] sm:$0xff]
        %v3131 = vld [vmem:[%s2959 + $0x22] sm:$0xff]
        %v3132 = vld [vmem:[%s2959 + $0x32] sm:$0xff]
        %v3133 = vld [vmem:[%s2959 + $0x42] sm:$0xff]
        %v3134 = vld [vmem:[%s2959 + $0x52] sm:$0xff]
        %v3135 = vld [vmem:[%s2959 + $0x62] sm:$0xff]
        %v3136 = vld [vmem:[%s2959 + $0x72] sm:$0xff]
        %v3137 = vlaneseq
        %v3138 = vshrl.u32 %v3137, 7
        %v3139 = vsub.s32 1, %v3138
        %v3140 = vrot.slane %v2433, %v3139
        %v3141 = vmul.f32 %v3129, %v3140
        %v3142 = vmul.f32 %v3130, %v3140
        %v3143 = vmul.f32 %v3131, %v3140
        %v3144 = vmul.f32 %v3132, %v3140
        %v3145 = vmul.f32 %v3133, %v3140
        %v3146 = vmul.f32 %v3134, %v3140
        %v3147 = vmul.f32 %v3135, %v3140
        %v3148 = vmul.f32 %v3136, %v3140
        %v3149 = vadd.f32 %v3121, %v3141
        %v3150 = vadd.f32 %v3122, %v3142
        %v3151 = vadd.f32 %v3123, %v3143
        %v3152 = vadd.f32 %v3124, %v3144
        %v3153 = vadd.f32 %v3125, %v3145
        %v3154 = vadd.f32 %v3126, %v3146
        %v3155 = vadd.f32 %v3127, %v3147
        %v3156 = vadd.f32 %v3128, %v3148
        %v3157 = vld [vmem:[%s2988 + $0x2] sm:$0xff]
        %v3158 = vld [vmem:[%s2988 + $0x12] sm:$0xff]
        %v3159 = vld [vmem:[%s2988 + $0x22] sm:$0xff]
        %v3160 = vld [vmem:[%s2988 + $0x32] sm:$0xff]
        %v3161 = vld [vmem:[%s2988 + $0x42] sm:$0xff]
        %v3162 = vld [vmem:[%s2988 + $0x52] sm:$0xff]
        %v3163 = vld [vmem:[%s2988 + $0x62] sm:$0xff]
        %v3164 = vld [vmem:[%s2988 + $0x72] sm:$0xff]
        %v3165 = vlaneseq
        %v3166 = vshrl.u32 %v3165, 7
        %v3167 = vsub.s32 2, %v3166
        %v3168 = vrot.slane %v2433, %v3167
        %v3169 = vmul.f32 %v3157, %v3168
        %v3170 = vmul.f32 %v3158, %v3168
        %v3171 = vmul.f32 %v3159, %v3168
        %v3172 = vmul.f32 %v3160, %v3168
        %v3173 = vmul.f32 %v3161, %v3168
        %v3174 = vmul.f32 %v3162, %v3168
        %v3175 = vmul.f32 %v3163, %v3168
        %v3176 = vmul.f32 %v3164, %v3168
        %v3177 = vadd.f32 %v3149, %v3169
        %v3178 = vadd.f32 %v3150, %v3170
        %v3179 = vadd.f32 %v3151, %v3171
        %v3180 = vadd.f32 %v3152, %v3172
        %v3181 = vadd.f32 %v3153, %v3173
        %v3182 = vadd.f32 %v3154, %v3174
        %v3183 = vadd.f32 %v3155, %v3175
        %v3184 = vadd.f32 %v3156, %v3176
        %v3185 = vld [vmem:[%s6] sm:$0x3]
        %v3186 = vlaneseq
        %v3187 = vshrl.u32 %v3186, 7
        %v3188 = vsub.s32 0, %v3187
        %v3189 = vrot.slane %v3185, %v3188
        %v3190 = vmul.f32 %v3177, %v3189
        %v3191 = vmul.f32 %v3178, %v3189
        %v3192 = vmul.f32 %v3179, %v3189
        %v3193 = vmul.f32 %v3180, %v3189
        %v3194 = vmul.f32 %v3181, %v3189
        %v3195 = vmul.f32 %v3182, %v3189
        %v3196 = vmul.f32 %v3183, %v3189
        %v3197 = vmul.f32 %v3184, %v3189
        %v3198 = vlaneseq
        %v3199 = vshrl.u32 %v3198, 7
        %v3200 = vsub.s32 1, %v3199
        %v3201 = vrot.slane %v3185, %v3200
        %v3202 = vadd.f32 %v3190, %v3201
        %v3203 = vadd.f32 %v3191, %v3201
        %v3204 = vadd.f32 %v3192, %v3201
        %v3205 = vadd.f32 %v3193, %v3201
        %v3206 = vadd.f32 %v3194, %v3201
        %v3207 = vadd.f32 %v3195, %v3201
        %v3208 = vadd.f32 %v3196, %v3201
        %v3209 = vadd.f32 %v3197, %v3201
        %v3210 = vxor.u32 %v3202, 2147483648
        %v3211 = vxor.u32 %v3203, 2147483648
        %v3212 = vxor.u32 %v3204, 2147483648
        %v3213 = vxor.u32 %v3205, 2147483648
        %v3214 = vxor.u32 %v3206, 2147483648
        %v3215 = vxor.u32 %v3207, 2147483648
        %v3216 = vxor.u32 %v3208, 2147483648
        %v3217 = vxor.u32 %v3209, 2147483648
        %v3218 = vmul.f32 %v3210, 1.442695
        %v3219 = vpow.pop %v3218
        %v3220 = vmul.f32 %v3211, 1.442695
        %v3221 = vpow.pop %v3220
        %v3222 = vmul.f32 %v3212, 1.442695
        %v3223 = vpow.pop %v3222
        %v3224 = vmul.f32 %v3213, 1.442695
        %v3225 = vpow.pop %v3224
        %v3226 = vmul.f32 %v3214, 1.442695
        %v3227 = vpow.pop %v3226
        %v3228 = vmul.f32 %v3215, 1.442695
        %v3229 = vpow.pop %v3228
        %v3230 = vmul.f32 %v3216, 1.442695
        %v3231 = vpow.pop %v3230
        %v3232 = vmul.f32 %v3217, 1.442695
        %v3233 = vpow.pop %v3232
        %v3234 = vadd.f32 %v3219, 1.0
        %v3235 = vadd.f32 %v3221, 1.0
        %v3236 = vadd.f32 %v3223, 1.0
        %v3237 = vadd.f32 %v3225, 1.0
        %v3238 = vadd.f32 %v3227, 1.0
        %v3239 = vadd.f32 %v3229, 1.0
        %v3240 = vadd.f32 %v3231, 1.0
        %v3241 = vadd.f32 %v3233, 1.0
        %v3242 = vrcp.pop %v3234
        %v3243 = vmul.f32 1.0, %v3242
        %v3244 = vrcp.pop %v3235
        %v3245 = vmul.f32 1.0, %v3244
        %v3246 = vrcp.pop %v3236
        %v3247 = vmul.f32 1.0, %v3246
        %v3248 = vrcp.pop %v3237
        %v3249 = vmul.f32 1.0, %v3248
        %v3250 = vrcp.pop %v3238
        %v3251 = vmul.f32 1.0, %v3250
        %v3252 = vrcp.pop %v3239
        %v3253 = vmul.f32 1.0, %v3252
        %v3254 = vrcp.pop %v3240
        %v3255 = vmul.f32 1.0, %v3254
        %v3256 = vrcp.pop %v3241
        %v3257 = vmul.f32 1.0, %v3256
        %v3258 = vmul.f32 %v3202, %v3243
        %v3259 = vmul.f32 %v3203, %v3245
        %v3260 = vmul.f32 %v3204, %v3247
        %v3261 = vmul.f32 %v3205, %v3249
        %v3262 = vmul.f32 %v3206, %v3251
        %v3263 = vmul.f32 %v3207, %v3253
        %v3264 = vmul.f32 %v3208, %v3255
        %v3265 = vmul.f32 %v3209, %v3257
        %v3266 = vsel %vm2250, %v3258, 0.0
        %v3267 = vsel %vm2250, %v3259, 0.0
        %v3268 = vadd.f32 %v3266, %v3267
        %v3269 = vsel %vm2250, %v3260, 0.0
        %v3270 = vadd.f32 %v3268, %v3269
        %v3271 = vsel %vm2250, %v3261, 0.0
        %v3272 = vadd.f32 %v3270, %v3271
        %v3273 = vsel %vm2250, %v3262, 0.0
        %v3274 = vadd.f32 %v3272, %v3273
        %v3275 = vsel %vm2250, %v3263, 0.0
        %v3276 = vadd.f32 %v3274, %v3275
        %v3277 = vsel %vm2250, %v3264, 0.0
        %v3278 = vadd.f32 %v3276, %v3277
        %v3279 = vsel %vm2250, %v3265, 0.0
        %v3280 = vadd.f32 %v3278, %v3279
        %v3281 = vsel %vm2250, %v3280, 0.0
        %v3282 = vrot.slane %v3281, 4
        %v3283 = vadd.f32 %v3281, %v3282
        %v3284 = vrot.slane %v3283, 2
        %v3285 = vadd.f32 %v3283, %v3284
        %v3286 = vrot.slane %v3285, 1
        %v3287 = vadd.f32 %v3285, %v3286
        %v3289 = vsel %vm2250, %v3287, 0
        %3291 = vmatprep.subr.mxu0 0.0
        %3292 = vmatpush1.msra.mxu0 0.0
        %3293 = vmatprep.subr.mxu0 0.0
        %3294 = vmatpush1.msra.mxu0 0.0
        %3295 = vmatprep.subr.mxu0 0.0
        %3296 = vmatpush1.msra.mxu0 0.0
        %3297 = vmatprep.subr.mxu0 0.0
        %3298 = vmatpush1.msra.mxu0 0.0
        %3299 = vmatprep.subr.mxu0 0.0
        %3300 = vmatpush1.msra.mxu0 %v2131
        %3301 = vmatprep.subr.mxu0 0.0
        %3302 = vmatpush1.msra.mxu0 %v2130
        %3303 = vmatprep.subr.mxu0 0.0
        %3304 = vmatpush1.msra.mxu0 %v2129
        %3305 = vmatprep.subr.mxu0 0.0
        %3306 = vmatpush1.msra.mxu0 %v2128
        %3307 = vmatprep.subr.mxu0 0.0
        %3308 = vmatpush1.msra.mxu0 %v2127
        %3309 = vmatprep.subr.mxu0 0.0
        %3310 = vmatpush1.msra.mxu0 %v2126
        %3311 = vmatprep.subr.mxu0 0.0
        %3312 = vmatpush1.msra.mxu0 %v2125
        %3313 = vmatprep.subr.mxu0 0.0
        %3314 = vmatpush1.msra.mxu0 %v2124
        %3315 = vmatprep.subr.mxu0 0.0
        %3316 = vmatpush1.msra.mxu0 %v2123
        %3317 = vmatprep.subr.mxu0 0.0
        %3318 = vmatpush1.msra.mxu0 %v2122
        %3319 = vmatprep.subr.mxu0 0.0
        %3320 = vmatpush1.msra.mxu0 %v2121
        %3321 = vmatprep.subr.mxu0 0.0
        %3322 = vmatpush1.msra.mxu0 %v2120
        %3323 = vmatprep.subr.mxu0 0.0
        %3324 = vmatpush2.msra.mxu0 0.0
        %3325 = vmatprep.subr.mxu0 0.0
        %3326 = vmatpush2.msra.mxu0 0.0
        %3327 = vmatprep.subr.mxu0 0.0
        %3328 = vmatpush2.msra.mxu0 0.0
        %3329 = vmatprep.subr.mxu0 0.0
        %3330 = vmatpush2.msra.mxu0 0.0
        %3331 = vmatprep.subr.mxu0 0.0
        %3332 = vmatpush2.msra.mxu0 0.0
        %3333 = vmatprep.subr.mxu0 0.0
        %3334 = vmatpush2.msra.mxu0 0.0
        %3335 = vmatprep.subr.mxu0 0.0
        %3336 = vmatpush2.msra.mxu0 0.0
        %3337 = vmatprep.subr.mxu0 0.0
        %3338 = vmatpush2.msra.mxu0 0.0
        %3339 = vmatprep.subr.mxu0 0.0
        %3340 = vmatpush2.msra.mxu0 0.0
        %3341 = vmatprep.subr.mxu0 0.0
        %3342 = vmatpush2.msra.mxu0 0.0
        %3343 = vmatprep.subr.mxu0 0.0
        %3344 = vmatpush2.msra.mxu0 0.0
        %3345 = vmatprep.subr.mxu0 0.0
        %3346 = vmatpush2.msra.mxu0 0.0
        %3347 = vmatprep.subr.mxu0 0.0
        %3348 = vmatpush2.msra.mxu0 0.0
        %3349 = vmatprep.subr.mxu0 0.0
        %3350 = vmatpush2.msra.mxu0 0.0
        %3351 = vmatprep.subr.mxu0 0.0
        %3352 = vmatpush2.msra.mxu0 0.0
        %3353 = vmatprep.subr.mxu0 0.0
        %3354 = vmatpush2.msra.mxu0 0.0
        %3355 = vmatprep.mubr.f32.mxu0 0.0
        %3356 = vmatmul.mubr.f32.gmra.mxu0 %v3289
        %v3357 = vpop.f32.mrf.mxu0
        %v3358 = vadd.f32 0.0, %v3357
        %v3359 = vpop.f32.mrf.mxu0
        %3360 = vdwg.mxu0
        %v3361 = vmul.f32 %v3358, 0.001953125
        %v3362 = vld [vmem:[%s14] sm:$0xff]
        %v3363 = vld [vmem:[%s8] sm:$0xff]
        %v3364 = vld [vmem:[%s8 + $0x8] sm:$0xf]
        %vm3365 = vcmask 97280
        %v3367 = vsel %vm3365, %v3361, 0
        %vm3369 = vcmask 1043456
        %v3371 = vsel %vm3369, %v3364, 0
        %3373 = vmatprep.subr.mxu0 0.0
        %3374 = vmatpush1.msra.mxu0 0.0
        %3375 = vmatprep.subr.mxu0 0.0
        %3376 = vmatpush1.msra.mxu0 0.0
        %3377 = vmatprep.subr.mxu0 0.0
        %3378 = vmatpush1.msra.mxu0 0.0
        %3379 = vmatprep.subr.mxu0 0.0
        %3380 = vmatpush1.msra.mxu0 0.0
        %3381 = vmatprep.subr.mxu0 0.0
        %3382 = vmatpush1.msra.mxu0 0.0
        %3383 = vmatprep.subr.mxu0 0.0
        %3384 = vmatpush1.msra.mxu0 0.0
        %3385 = vmatprep.subr.mxu0 0.0
        %3386 = vmatpush1.msra.mxu0 0.0
        %3387 = vmatprep.subr.mxu0 0.0
        %3388 = vmatpush1.msra.mxu0 0.0
        %3389 = vmatprep.subr.mxu0 0.0
        %3390 = vmatpush1.msra.mxu0 0.0
        %3391 = vmatprep.subr.mxu0 0.0
        %3392 = vmatpush1.msra.mxu0 0.0
        %3393 = vmatprep.subr.mxu0 0.0
        %3394 = vmatpush1.msra.mxu0 0.0
        %3395 = vmatprep.subr.mxu0 0.0
        %3396 = vmatpush1.msra.mxu0 0.0
        %3397 = vmatprep.subr.mxu0 0.0
        %3398 = vmatpush1.msra.mxu0 0.0
        %3399 = vmatprep.subr.mxu0 0.0
        %3400 = vmatpush1.msra.mxu0 0.0
        %3401 = vmatprep.subr.mxu0 0.0
        %3402 = vmatpush1.msra.mxu0 %v3371
        %3403 = vmatprep.subr.mxu0 0.0
        %3404 = vmatpush1.msra.mxu0 %v3363
        %3405 = vmatprep.subr.mxu0 0.0
        %3406 = vmatpush2.msra.mxu0 0.0
        %3407 = vmatprep.subr.mxu0 0.0
        %3408 = vmatpush2.msra.mxu0 0.0
        %3409 = vmatprep.subr.mxu0 0.0
        %3410 = vmatpush2.msra.mxu0 0.0
        %3411 = vmatprep.subr.mxu0 0.0
        %3412 = vmatpush2.msra.mxu0 0.0
        %3413 = vmatprep.subr.mxu0 0.0
        %3414 = vmatpush2.msra.mxu0 0.0
        %3415 = vmatprep.subr.mxu0 0.0
        %3416 = vmatpush2.msra.mxu0 0.0
        %3417 = vmatprep.subr.mxu0 0.0
        %3418 = vmatpush2.msra.mxu0 0.0
        %3419 = vmatprep.subr.mxu0 0.0
        %3420 = vmatpush2.msra.mxu0 0.0
        %3421 = vmatprep.subr.mxu0 0.0
        %3422 = vmatpush2.msra.mxu0 0.0
        %3423 = vmatprep.subr.mxu0 0.0
        %3424 = vmatpush2.msra.mxu0 0.0
        %3425 = vmatprep.subr.mxu0 0.0
        %3426 = vmatpush2.msra.mxu0 0.0
        %3427 = vmatprep.subr.mxu0 0.0
        %3428 = vmatpush2.msra.mxu0 0.0
        %3429 = vmatprep.subr.mxu0 0.0
        %3430 = vmatpush2.msra.mxu0 0.0
        %3431 = vmatprep.subr.mxu0 0.0
        %3432 = vmatpush2.msra.mxu0 0.0
        %3433 = vmatprep.subr.mxu0 0.0
        %3434 = vmatpush2.msra.mxu0 0.0
        %3435 = vmatprep.subr.mxu0 0.0
        %3436 = vmatpush2.msra.mxu0 0.0
        %3437 = vmatprep.mubr.f32.mxu0 0.0
        %3438 = vmatmul.mubr.f32.gmra.mxu0 %v3367
        %v3439 = vpop.f32.mrf.mxu0
        %v3440 = vadd.f32 %v3362, %v3439
        %v3441 = vpop.f32.mrf.mxu0
        %3442 = vdwg.mxu0
        %v3443 = vxor.u32 %v3440, 2147483648
        %v3444 = vmul.f32 %v3443, 1.442695
        %v3445 = vpow.pop %v3444
        %v3446 = vadd.f32 %v3445, 1.0
        %v3447 = vrcp.pop %v3446
        %v3448 = vmul.f32 1.0, %v3447
        %v3449 = vmul.f32 %v3440, %v3448
        %v3450 = vld [vmem:[%s9] sm:$0x7]
        %v3452 = vrot.slane %v3362, 1
        %vm3454 = vcmask 23552
        %v3456 = vsel %vm3454, %v3449, 0
        %vm3458 = vcmask 1042432
        %v3460 = vsel %vm3458, %v3450, 0
        %3462 = vmatprep.subr.mxu0 0.0
        %3463 = vmatpush1.msra.mxu0 0.0
        %3464 = vmatprep.subr.mxu0 0.0
        %3465 = vmatpush1.msra.mxu0 0.0
        %3466 = vmatprep.subr.mxu0 0.0
        %3467 = vmatpush1.msra.mxu0 0.0
        %3468 = vmatprep.subr.mxu0 0.0
        %3469 = vmatpush1.msra.mxu0 0.0
        %3470 = vmatprep.subr.mxu0 0.0
        %3471 = vmatpush1.msra.mxu0 0.0
        %3472 = vmatprep.subr.mxu0 0.0
        %3473 = vmatpush1.msra.mxu0 0.0
        %3474 = vmatprep.subr.mxu0 0.0
        %3475 = vmatpush1.msra.mxu0 0.0
        %3476 = vmatprep.subr.mxu0 0.0
        %3477 = vmatpush1.msra.mxu0 0.0
        %3478 = vmatprep.subr.mxu0 0.0
        %3479 = vmatpush1.msra.mxu0 0.0
        %3480 = vmatprep.subr.mxu0 0.0
        %3481 = vmatpush1.msra.mxu0 0.0
        %3482 = vmatprep.subr.mxu0 0.0
        %3483 = vmatpush1.msra.mxu0 0.0
        %3484 = vmatprep.subr.mxu0 0.0
        %3485 = vmatpush1.msra.mxu0 0.0
        %3486 = vmatprep.subr.mxu0 0.0
        %3487 = vmatpush1.msra.mxu0 0.0
        %3488 = vmatprep.subr.mxu0 0.0
        %3489 = vmatpush1.msra.mxu0 0.0
        %3490 = vmatprep.subr.mxu0 0.0
        %3491 = vmatpush1.msra.mxu0 0.0
        %3492 = vmatprep.subr.mxu0 0.0
        %3493 = vmatpush1.msra.mxu0 %v3460
        %3494 = vmatprep.subr.mxu0 0.0
        %3495 = vmatpush2.msra.mxu0 0.0
        %3496 = vmatprep.subr.mxu0 0.0
        %3497 = vmatpush2.msra.mxu0 0.0
        %3498 = vmatprep.subr.mxu0 0.0
        %3499 = vmatpush2.msra.mxu0 0.0
        %3500 = vmatprep.subr.mxu0 0.0
        %3501 = vmatpush2.msra.mxu0 0.0
        %3502 = vmatprep.subr.mxu0 0.0
        %3503 = vmatpush2.msra.mxu0 0.0
        %3504 = vmatprep.subr.mxu0 0.0
        %3505 = vmatpush2.msra.mxu0 0.0
        %3506 = vmatprep.subr.mxu0 0.0
        %3507 = vmatpush2.msra.mxu0 0.0
        %3508 = vmatprep.subr.mxu0 0.0
        %3509 = vmatpush2.msra.mxu0 0.0
        %3510 = vmatprep.subr.mxu0 0.0
        %3511 = vmatpush2.msra.mxu0 0.0
        %3512 = vmatprep.subr.mxu0 0.0
        %3513 = vmatpush2.msra.mxu0 0.0
        %3514 = vmatprep.subr.mxu0 0.0
        %3515 = vmatpush2.msra.mxu0 0.0
        %3516 = vmatprep.subr.mxu0 0.0
        %3517 = vmatpush2.msra.mxu0 0.0
        %3518 = vmatprep.subr.mxu0 0.0
        %3519 = vmatpush2.msra.mxu0 0.0
        %3520 = vmatprep.subr.mxu0 0.0
        %3521 = vmatpush2.msra.mxu0 0.0
        %3522 = vmatprep.subr.mxu0 0.0
        %3523 = vmatpush2.msra.mxu0 0.0
        %3524 = vmatprep.subr.mxu0 0.0
        %3525 = vmatpush2.msra.mxu0 0.0
        %3526 = vmatprep.mubr.f32.mxu0 0.0
        %3527 = vmatmul.mubr.f32.gmra.mxu0 %v3456
        %v3528 = vpop.f32.mrf.mxu0
        %v3529 = vadd.f32 %v3452, %v3528
        %v3530 = vpop.f32.mrf.mxu0
        %3531 = vdwg.mxu0
        %v3532 = vxor.u32 %v3529, 2147483648
        %v3533 = vmul.f32 %v3532, 1.442695
        %v3534 = vpow.pop %v3533
        %v3535 = vadd.f32 %v3534, 1.0
        %v3536 = vrcp.pop %v3535
        %v3537 = vmul.f32 1.0, %v3536
        %v3538 = vmul.f32 %v3361, %v3537
        %v3539 = vld [vmem:[%s10] sm:$0xff]
        %v3540 = vld [vmem:[%s10 + $0x8] sm:$0xf]
        %v3542 = vsel %vm3365, %v3538, 0
        %v3545 = vsel %vm3369, %v3540, 0
        %3547 = vmatprep.subr.mxu0 0.0
        %3548 = vmatpush1.msra.mxu0 0.0
        %3549 = vmatprep.subr.mxu0 0.0
        %3550 = vmatpush1.msra.mxu0 0.0
        %3551 = vmatprep.subr.mxu0 0.0
        %3552 = vmatpush1.msra.mxu0 0.0
        %3553 = vmatprep.subr.mxu0 0.0
        %3554 = vmatpush1.msra.mxu0 0.0
        %3555 = vmatprep.subr.mxu0 0.0
        %3556 = vmatpush1.msra.mxu0 0.0
        %3557 = vmatprep.subr.mxu0 0.0
        %3558 = vmatpush1.msra.mxu0 0.0
        %3559 = vmatprep.subr.mxu0 0.0
        %3560 = vmatpush1.msra.mxu0 0.0
        %3561 = vmatprep.subr.mxu0 0.0
        %3562 = vmatpush1.msra.mxu0 0.0
        %3563 = vmatprep.subr.mxu0 0.0
        %3564 = vmatpush1.msra.mxu0 0.0
        %3565 = vmatprep.subr.mxu0 0.0
        %3566 = vmatpush1.msra.mxu0 0.0
        %3567 = vmatprep.subr.mxu0 0.0
        %3568 = vmatpush1.msra.mxu0 0.0
        %3569 = vmatprep.subr.mxu0 0.0
        %3570 = vmatpush1.msra.mxu0 0.0
        %3571 = vmatprep.subr.mxu0 0.0
        %3572 = vmatpush1.msra.mxu0 0.0
        %3573 = vmatprep.subr.mxu0 0.0
        %3574 = vmatpush1.msra.mxu0 0.0
        %3575 = vmatprep.subr.mxu0 0.0
        %3576 = vmatpush1.msra.mxu0 %v3545
        %3577 = vmatprep.subr.mxu0 0.0
        %3578 = vmatpush1.msra.mxu0 %v3539
        %3579 = vmatprep.subr.mxu0 0.0
        %3580 = vmatpush2.msra.mxu0 0.0
        %3581 = vmatprep.subr.mxu0 0.0
        %3582 = vmatpush2.msra.mxu0 0.0
        %3583 = vmatprep.subr.mxu0 0.0
        %3584 = vmatpush2.msra.mxu0 0.0
        %3585 = vmatprep.subr.mxu0 0.0
        %3586 = vmatpush2.msra.mxu0 0.0
        %3587 = vmatprep.subr.mxu0 0.0
        %3588 = vmatpush2.msra.mxu0 0.0
        %3589 = vmatprep.subr.mxu0 0.0
        %3590 = vmatpush2.msra.mxu0 0.0
        %3591 = vmatprep.subr.mxu0 0.0
        %3592 = vmatpush2.msra.mxu0 0.0
        %3593 = vmatprep.subr.mxu0 0.0
        %3594 = vmatpush2.msra.mxu0 0.0
        %3595 = vmatprep.subr.mxu0 0.0
        %3596 = vmatpush2.msra.mxu0 0.0
        %3597 = vmatprep.subr.mxu0 0.0
        %3598 = vmatpush2.msra.mxu0 0.0
        %3599 = vmatprep.subr.mxu0 0.0
        %3600 = vmatpush2.msra.mxu0 0.0
        %3601 = vmatprep.subr.mxu0 0.0
        %3602 = vmatpush2.msra.mxu0 0.0
        %3603 = vmatprep.subr.mxu0 0.0
        %3604 = vmatpush2.msra.mxu0 0.0
        %3605 = vmatprep.subr.mxu0 0.0
        %3606 = vmatpush2.msra.mxu0 0.0
        %3607 = vmatprep.subr.mxu0 0.0
        %3608 = vmatpush2.msra.mxu0 0.0
        %3609 = vmatprep.subr.mxu0 0.0
        %3610 = vmatpush2.msra.mxu0 0.0
        %3611 = vmatprep.mubr.f32.mxu0 0.0
        %3612 = vmatmul.mubr.f32.gmra.mxu0 %v3542
        %v3613 = vpop.f32.mrf.mxu0
        %v3614 = vadd.f32 0.0, %v3613
        %v3615 = vpop.f32.mrf.mxu0
        %3616 = vdwg.mxu0
        %v3617 = vrot.slane %v3362, 2
        %v3619 = vmul.f32 %v3614, %v3617
        %v3620 = vrot.slane %v3362, 3
        %v3622 = vadd.f32 %v3619, %v3620
        %v3623 = vadd.f32 %v3622, %v2249
        %v3624 = vld [vmem:[%s11] sm:$0xff]
        %v3625 = vld [vmem:[%s11 + $0x8] sm:$0xf]
        %v3626 = vrot.slane %v3362, 4
        %v3629 = vsel %vm3365, %v3623, 0
        %v3632 = vsel %vm3369, %v3625, 0
        %3634 = vmatprep.subr.mxu0 0.0
        %3635 = vmatpush1.msra.mxu0 0.0
        %3636 = vmatprep.subr.mxu0 0.0
        %3637 = vmatpush1.msra.mxu0 0.0
        %3638 = vmatprep.subr.mxu0 0.0
        %3639 = vmatpush1.msra.mxu0 0.0
        %3640 = vmatprep.subr.mxu0 0.0
        %3641 = vmatpush1.msra.mxu0 0.0
        %3642 = vmatprep.subr.mxu0 0.0
        %3643 = vmatpush1.msra.mxu0 0.0
        %3644 = vmatprep.subr.mxu0 0.0
        %3645 = vmatpush1.msra.mxu0 0.0
        %3646 = vmatprep.subr.mxu0 0.0
        %3647 = vmatpush1.msra.mxu0 0.0
        %3648 = vmatprep.subr.mxu0 0.0
        %3649 = vmatpush1.msra.mxu0 0.0
        %3650 = vmatprep.subr.mxu0 0.0
        %3651 = vmatpush1.msra.mxu0 0.0
        %3652 = vmatprep.subr.mxu0 0.0
        %3653 = vmatpush1.msra.mxu0 0.0
        %3654 = vmatprep.subr.mxu0 0.0
        %3655 = vmatpush1.msra.mxu0 0.0
        %3656 = vmatprep.subr.mxu0 0.0
        %3657 = vmatpush1.msra.mxu0 0.0
        %3658 = vmatprep.subr.mxu0 0.0
        %3659 = vmatpush1.msra.mxu0 0.0
        %3660 = vmatprep.subr.mxu0 0.0
        %3661 = vmatpush1.msra.mxu0 0.0
        %3662 = vmatprep.subr.mxu0 0.0
        %3663 = vmatpush1.msra.mxu0 %v3632
        %3664 = vmatprep.subr.mxu0 0.0
        %3665 = vmatpush1.msra.mxu0 %v3624
        %3666 = vmatprep.subr.mxu0 0.0
        %3667 = vmatpush2.msra.mxu0 0.0
        %3668 = vmatprep.subr.mxu0 0.0
        %3669 = vmatpush2.msra.mxu0 0.0
        %3670 = vmatprep.subr.mxu0 0.0
        %3671 = vmatpush2.msra.mxu0 0.0
        %3672 = vmatprep.subr.mxu0 0.0
        %3673 = vmatpush2.msra.mxu0 0.0
        %3674 = vmatprep.subr.mxu0 0.0
        %3675 = vmatpush2.msra.mxu0 0.0
        %3676 = vmatprep.subr.mxu0 0.0
        %3677 = vmatpush2.msra.mxu0 0.0
        %3678 = vmatprep.subr.mxu0 0.0
        %3679 = vmatpush2.msra.mxu0 0.0
        %3680 = vmatprep.subr.mxu0 0.0
        %3681 = vmatpush2.msra.mxu0 0.0
        %3682 = vmatprep.subr.mxu0 0.0
        %3683 = vmatpush2.msra.mxu0 0.0
        %3684 = vmatprep.subr.mxu0 0.0
        %3685 = vmatpush2.msra.mxu0 0.0
        %3686 = vmatprep.subr.mxu0 0.0
        %3687 = vmatpush2.msra.mxu0 0.0
        %3688 = vmatprep.subr.mxu0 0.0
        %3689 = vmatpush2.msra.mxu0 0.0
        %3690 = vmatprep.subr.mxu0 0.0
        %3691 = vmatpush2.msra.mxu0 0.0
        %3692 = vmatprep.subr.mxu0 0.0
        %3693 = vmatpush2.msra.mxu0 0.0
        %3694 = vmatprep.subr.mxu0 0.0
        %3695 = vmatpush2.msra.mxu0 0.0
        %3696 = vmatprep.subr.mxu0 0.0
        %3697 = vmatpush2.msra.mxu0 0.0
        %3698 = vmatprep.mubr.f32.mxu0 0.0
        %3699 = vmatmul.mubr.f32.gmra.mxu0 %v3629
        %v3700 = vpop.f32.mrf.mxu0
        %v3701 = vadd.f32 %v3626, %v3700
        %v3702 = vpop.f32.mrf.mxu0
        %3703 = vdwg.mxu0
        %v3704 = vld [vmem:[%s12] sm:$0xff]
        %v3705 = vld [vmem:[%s12 + $0x8] sm:$0xff]
        %v3706 = vld [vmem:[%s12 + $0x10] sm:$0xff]
        %v3707 = vld [vmem:[%s12 + $0x18] sm:$0xff]
        %v3708 = vrot.slane %v3362, 5
        %vm3710 = vcmask 261120
        %v3712 = vsel %vm3710, %v3701, 0
        %3714 = vmatprep.subr.mxu0 0.0
        %3715 = vmatpush1.msra.mxu0 0.0
        %3716 = vmatprep.subr.mxu0 0.0
        %3717 = vmatpush1.msra.mxu0 0.0
        %3718 = vmatprep.subr.mxu0 0.0
        %3719 = vmatpush1.msra.mxu0 0.0
        %3720 = vmatprep.subr.mxu0 0.0
        %3721 = vmatpush1.msra.mxu0 0.0
        %3722 = vmatprep.subr.mxu0 0.0
        %3723 = vmatpush1.msra.mxu0 0.0
        %3724 = vmatprep.subr.mxu0 0.0
        %3725 = vmatpush1.msra.mxu0 0.0
        %3726 = vmatprep.subr.mxu0 0.0
        %3727 = vmatpush1.msra.mxu0 0.0
        %3728 = vmatprep.subr.mxu0 0.0
        %3729 = vmatpush1.msra.mxu0 0.0
        %3730 = vmatprep.subr.mxu0 0.0
        %3731 = vmatpush1.msra.mxu0 0.0
        %3732 = vmatprep.subr.mxu0 0.0
        %3733 = vmatpush1.msra.mxu0 0.0
        %3734 = vmatprep.subr.mxu0 0.0
        %3735 = vmatpush1.msra.mxu0 0.0
        %3736 = vmatprep.subr.mxu0 0.0
        %3737 = vmatpush1.msra.mxu0 0.0
        %3738 = vmatprep.subr.mxu0 0.0
        %3739 = vmatpush1.msra.mxu0 %v3707
        %3740 = vmatprep.subr.mxu0 0.0
        %3741 = vmatpush1.msra.mxu0 %v3706
        %3742 = vmatprep.subr.mxu0 0.0
        %3743 = vmatpush1.msra.mxu0 %v3705
        %3744 = vmatprep.subr.mxu0 0.0
        %3745 = vmatpush1.msra.mxu0 %v3704
        %3746 = vmatprep.subr.mxu0 0.0
        %3747 = vmatpush2.msra.mxu0 0.0
        %3748 = vmatprep.subr.mxu0 0.0
        %3749 = vmatpush2.msra.mxu0 0.0
        %3750 = vmatprep.subr.mxu0 0.0
        %3751 = vmatpush2.msra.mxu0 0.0
        %3752 = vmatprep.subr.mxu0 0.0
        %3753 = vmatpush2.msra.mxu0 0.0
        %3754 = vmatprep.subr.mxu0 0.0
        %3755 = vmatpush2.msra.mxu0 0.0
        %3756 = vmatprep.subr.mxu0 0.0
        %3757 = vmatpush2.msra.mxu0 0.0
        %3758 = vmatprep.subr.mxu0 0.0
        %3759 = vmatpush2.msra.mxu0 0.0
        %3760 = vmatprep.subr.mxu0 0.0
        %3761 = vmatpush2.msra.mxu0 0.0
        %3762 = vmatprep.subr.mxu0 0.0
        %3763 = vmatpush2.msra.mxu0 0.0
        %3764 = vmatprep.subr.mxu0 0.0
        %3765 = vmatpush2.msra.mxu0 0.0
        %3766 = vmatprep.subr.mxu0 0.0
        %3767 = vmatpush2.msra.mxu0 0.0
        %3768 = vmatprep.subr.mxu0 0.0
        %3769 = vmatpush2.msra.mxu0 0.0
        %3770 = vmatprep.subr.mxu0 0.0
        %3771 = vmatpush2.msra.mxu0 0.0
        %3772 = vmatprep.subr.mxu0 0.0
        %3773 = vmatpush2.msra.mxu0 0.0
        %3774 = vmatprep.subr.mxu0 0.0
        %3775 = vmatpush2.msra.mxu0 0.0
        %3776 = vmatprep.subr.mxu0 0.0
        %3777 = vmatpush2.msra.mxu0 0.0
        %3778 = vmatprep.mubr.f32.mxu0 0.0
        %3779 = vmatmul.mubr.f32.gmra.mxu0 %v3712
        %v3780 = vpop.f32.mrf.mxu0
        %v3781 = vadd.f32 %v3708, %v3780
        %v3782 = vpop.f32.mrf.mxu0
        %3783 = vdwg.mxu0
        %v3784 = vmax.f32 %v3781, 0.0
        %v3785 = vld [vmem:[%s13] sm:$0xff]
        %v3786 = vld [vmem:[%s13 + $0x8] sm:$0xff]
        %v3787 = vld [vmem:[%s13 + $0x10] sm:$0xff]
        %v3788 = vld [vmem:[%s13 + $0x18] sm:$0xff]
        %v3789 = vld [vmem:[%s13 + $0x20] sm:$0xff]
        %v3790 = vld [vmem:[%s13 + $0x28] sm:$0xff]
        %v3791 = vld [vmem:[%s13 + $0x30] sm:$0xff]
        %v3792 = vld [vmem:[%s13 + $0x38] sm:$0xff]
        %v3793 = vld [vmem:[%s13 + $0x40] sm:$0xff]
        %v3794 = vld [vmem:[%s13 + $0x48] sm:$0xff]
        %v3795 = vld [vmem:[%s13 + $0x50] sm:$0xff]
        %v3796 = vld [vmem:[%s13 + $0x58] sm:$0xff]
        %v3797 = vld [vmem:[%s13 + $0x60] sm:$0xff]
        %v3798 = vld [vmem:[%s13 + $0x68] sm:$0xff]
        %v3799 = vld [vmem:[%s13 + $0x70] sm:$0xff]
        %v3800 = vld [vmem:[%s13 + $0x78] sm:$0xff]
        %v3801 = vrot.slane %v3362, 6
        %3803 = vmatprep.subr.mxu0 0.0
        %3804 = vmatpush1.msra.mxu0 %v3800
        %3805 = vmatprep.subr.mxu0 0.0
        %3806 = vmatpush1.msra.mxu0 %v3799
        %3807 = vmatprep.subr.mxu0 0.0
        %3808 = vmatpush1.msra.mxu0 %v3798
        %3809 = vmatprep.subr.mxu0 0.0
        %3810 = vmatpush1.msra.mxu0 %v3797
        %3811 = vmatprep.subr.mxu0 0.0
        %3812 = vmatpush1.msra.mxu0 %v3796
        %3813 = vmatprep.subr.mxu0 0.0
        %3814 = vmatpush1.msra.mxu0 %v3795
        %3815 = vmatprep.subr.mxu0 0.0
        %3816 = vmatpush1.msra.mxu0 %v3794
        %3817 = vmatprep.subr.mxu0 0.0
        %3818 = vmatpush1.msra.mxu0 %v3793
        %3819 = vmatprep.subr.mxu0 0.0
        %3820 = vmatpush1.msra.mxu0 %v3792
        %3821 = vmatprep.subr.mxu0 0.0
        %3822 = vmatpush1.msra.mxu0 %v3791
        %3823 = vmatprep.subr.mxu0 0.0
        %3824 = vmatpush1.msra.mxu0 %v3790
        %3825 = vmatprep.subr.mxu0 0.0
        %3826 = vmatpush1.msra.mxu0 %v3789
        %3827 = vmatprep.subr.mxu0 0.0
        %3828 = vmatpush1.msra.mxu0 %v3788
        %3829 = vmatprep.subr.mxu0 0.0
        %3830 = vmatpush1.msra.mxu0 %v3787
        %3831 = vmatprep.subr.mxu0 0.0
        %3832 = vmatpush1.msra.mxu0 %v3786
        %3833 = vmatprep.subr.mxu0 0.0
        %3834 = vmatpush1.msra.mxu0 %v3785
        %3835 = vmatprep.subr.mxu0 0.0
        %3836 = vmatpush2.msra.mxu0 0.0
        %3837 = vmatprep.subr.mxu0 0.0
        %3838 = vmatpush2.msra.mxu0 0.0
        %3839 = vmatprep.subr.mxu0 0.0
        %3840 = vmatpush2.msra.mxu0 0.0
        %3841 = vmatprep.subr.mxu0 0.0
        %3842 = vmatpush2.msra.mxu0 0.0
        %3843 = vmatprep.subr.mxu0 0.0
        %3844 = vmatpush2.msra.mxu0 0.0
        %3845 = vmatprep.subr.mxu0 0.0
        %3846 = vmatpush2.msra.mxu0 0.0
        %3847 = vmatprep.subr.mxu0 0.0
        %3848 = vmatpush2.msra.mxu0 0.0
        %3849 = vmatprep.subr.mxu0 0.0
        %3850 = vmatpush2.msra.mxu0 0.0
        %3851 = vmatprep.subr.mxu0 0.0
        %3852 = vmatpush2.msra.mxu0 0.0
        %3853 = vmatprep.subr.mxu0 0.0
        %3854 = vmatpush2.msra.mxu0 0.0
        %3855 = vmatprep.subr.mxu0 0.0
        %3856 = vmatpush2.msra.mxu0 0.0
        %3857 = vmatprep.subr.mxu0 0.0
        %3858 = vmatpush2.msra.mxu0 0.0
        %3859 = vmatprep.subr.mxu0 0.0
        %3860 = vmatpush2.msra.mxu0 0.0
        %3861 = vmatprep.subr.mxu0 0.0
        %3862 = vmatpush2.msra.mxu0 0.0
        %3863 = vmatprep.subr.mxu0 0.0
        %3864 = vmatpush2.msra.mxu0 0.0
        %3865 = vmatprep.subr.mxu0 0.0
        %3866 = vmatpush2.msra.mxu0 0.0
        %3867 = vmatprep.mubr.f32.mxu0 0.0
        %3868 = vmatmul.mubr.f32.gmra.mxu0 %v3784
        %v3869 = vpop.f32.mrf.mxu0
        %v3870 = vadd.f32 %v3801, %v3869
        %v3871 = vpop.f32.mrf.mxu0
        %3872 = vdwg.mxu0
        %vm3873 = vcmask 73728
        %3874 = vst.msk [vmem:[%s516] sm:$0x1] %vm3873, %v3870
        %s3875 = sand.u32 %s367, 1
        %s3876 = scalar_lea.sflag [#allocation6], %s3875
        %s3877 = sand.u32 %s367, 1
        %s3878 = scalar_lea.vmem [#allocation5], %s3877
        // Predicated region
        $region81: #{pomen_forward.1} parent=79 // pred_check
          %p3879 = pneg %p377
        $region82: #{pomen_forward.1} parent=79 // pred_check_branch
          %3881 = sbr.rel (%p3879) target = $region84
        $region83: #{pomen_forward.1} parent=79 // pred_region
          %s3883 = ssub.s32 16, 16
          %3884 = vsyncadd %s3876, %s3883
          %s3885 = smul.addr %s29, 16
          %s3886 = scalar_lea.hbm %s15, %s3885
          %s3888 = sshll.u32 %s3878, 4
          %s3889 = int_to_ptr.vmem [resolvable:$true] %s3888
          %3891 = dma.vmem_to_hbm [thread:$0]  %s3889, 16, %s3886, %s3876
        $region84: #{pomen_forward.1} parent=79 // pred_fallthru
          _
      $region80: #{pomen_forward.1} parent=5 // pred_fallthru
        _
      %p3892 = scmp.le.s32.totalorder 2, %s24
      // Predicated region
      $region85: #{pomen_forward.1} parent=5 // pred_check
        %p3893 = pneg %p3892
      $region86: #{pomen_forward.1} parent=5 // pred_check_branch
        %3895 = sbr.rel (%p3893) target = $region88
      $region87: #{pomen_forward.1} parent=5 // pred_region
        %s3896 = ssub.s32 %s24, 2
        // Predicated region
        $region89: #{pomen_forward.1} parent=87 // pred_check
          %p3897 = pneg %p383
        $region90: #{pomen_forward.1} parent=87 // pred_check_branch
          %3899 = sbr.rel (%p3897) target = $region92
        $region91: #{pomen_forward.1} parent=87 // pred_region
          %s3900 = sand.u32 %s368, 1
          %s3901 = scalar_lea.sflag [#allocation6], %s3900
          %s3902 = sand.u32 %s368, 1
          %s3903 = scalar_lea.vmem [#allocation5], %s3902
          %3904 = dma.done %s3901, 16
        $region92: #{pomen_forward.1} parent=87 // pred_fallthru
          _
      $region88: #{pomen_forward.1} parent=5 // pred_fallthru
        _
    $region6: #{pomen_forward.1} parent=1 // loop_footer
      %s28 = sadd.s32 1, %s24
    $region7: #{pomen_forward.1} parent=1 // loop_footer_branch
      %23 = sbr.rel target = $region3
    $region8: #{pomen_forward.1} parent=1 // loop_exit
      _
    %3905 = vsyncpa [#allocation6], 1
    %s3906 = scalar_lea.sflag [#allocation6], 1
    %3907 = vsyncpa %s3906, 1

</llo_original>
